<compile_context>
chip_gen: v7x
topology: tpu7x:2x2x1
jax: 0.10.0
libtpu: 0.0.40
codegen_flags: <defaults>
</compile_context>

<pallas_src>
import math
import jax
import jax.numpy as jnp
from jax import lax
from jax.experimental import pallas as pl
from jax.experimental.pallas import tpu as pltpu

TN_MAX = 1024   # max points per grid step (measured sweet spot; fits every VMEM)
IN_W = 36       # 32 hash-feature lanes + 3 direction lanes + 1 pad lane
OUT_W = 4       # sigma lane + 3 rgb lanes (merged output)


# ----------------------------------------------------------------------------
# Fused Pallas kernel: geo MLP + TruncExp + dir-normalize + SH(4) + rgb MLP
# ----------------------------------------------------------------------------
def _fused_mngp_kernel(xd_ref, gw1_ref, gw2_ref, rw1s_ref, rw1f_ref, rw2_ref,
                       rw3_ref, out_ref):
    xd = xd_ref[...]                                   # (TN, 36) f32
    xf = xd[:, 0:32]                                   # hash features
    dv = xd[:, 32:35]                                  # raw directions

    # ---- geo_net: FullyFusedMLP 32 -> 64 (ReLU) -> 32 (padded from 17) --------
    h1 = jnp.maximum(
        jnp.dot(xf.astype(jnp.bfloat16), gw1_ref[...],
                preferred_element_type=jnp.float32), 0.0)            # (TN, 64)
    h = jnp.dot(h1.astype(jnp.bfloat16), gw2_ref[...],
                preferred_element_type=jnp.float32)                   # (TN, 32)

    # sigmas = TruncExp(h[:, 0])  (TruncExp forward == plain exp, as in torch-ngp)
    sigma = jnp.exp(h[:, 0:1])                                        # (TN, 1)
    feat = h[:, 1:17]                                                 # (TN, 16)

    # ---- direction: d * rsqrt(||d||^2), then tcnn SphericalHarmonics deg 4 ----
    inv = lax.rsqrt(jnp.sum(dv * dv, axis=1, keepdims=True))
    dv = dv * inv
    # tcnn SH takes (d+1)/2 and internally remaps back to [-1,1] -> use dv directly
    x = dv[:, 0:1]
    y = dv[:, 1:2]
    z = dv[:, 2:3]
    xy, xz, yz = x * y, x * z, y * z
    x2, y2, z2 = x * x, y * y, z * z
    sh = jnp.concatenate([
        jnp.full_like(x, 0.28209479177387814),
        -0.48860251190291987 * y,
        0.48860251190291987 * z,
        -0.48860251190291987 * x,
        1.0925484305920792 * xy,
        -1.0925484305920792 * yz,
        0.94617469575755997 * z2 - 0.31539156525251999,
        -1.0925484305920792 * xz,
        0.54627421529603959 * (x2 - y2),
        0.59004358992664352 * y * (-3.0 * x2 + y2),
        2.8906114426405538 * xy * z,
        0.45704579946446572 * y * (1.0 - 5.0 * z2),
        0.3731763325901154 * z * (5.0 * z2 - 3.0),
        0.45704579946446572 * x * (1.0 - 5.0 * z2),
        1.4453057213202769 * z * (x2 - y2),
        0.59004358992664352 * x * (-x2 + 3.0 * y2),
    ], axis=1)                                                        # (TN, 16)

    # ---- rgb_net: (16 SH + 16 feat) -> 64 -> 64 (ReLU) -> 3 (Sigmoid) ---------
    # rw1 pre-split wrapper-side -> no 32-lane concat of [sh, feat] needed.
    r1 = jnp.maximum(
        jnp.dot(sh.astype(jnp.bfloat16), rw1s_ref[...],
                preferred_element_type=jnp.float32)
        + jnp.dot(feat.astype(jnp.bfloat16), rw1f_ref[...],
                  preferred_element_type=jnp.float32), 0.0)           # (TN, 64)
    r2 = jnp.maximum(
        jnp.dot(r1.astype(jnp.bfloat16), rw2_ref[...],
                preferred_element_type=jnp.float32), 0.0)             # (TN, 64)
    logits = jnp.dot(r2.astype(jnp.bfloat16), rw3_ref[...],
                     preferred_element_type=jnp.float32)              # (TN, 3)

    # merged output: lane 0 = sigma, lanes 1:4 = rgb
    out_ref[...] = jnp.concatenate([sigma, jax.nn.sigmoid(logits)], axis=1)


def fused_mngp_mlp(xyz_feat, d, weights):
    """xyz_feat: (N,32) hash features, d: (N,3) raw directions
       weights: pre-prepared bf16 tuple (gw1, gw2_pad32, rw1_sh, rw1_feat, rw2, rw3)
       -> (sigmas (N,), rgbs (N,3))"""
    gw1, gw2, rw1s, rw1f, rw2, rw3 = weights
    N = xyz_feat.shape[0]

    # adaptive row tile: multiple of 128, capped at TN_MAX
    tn = min(TN_MAX, ((N + 127) // 128) * 128)
    Np = ((N + tn - 1) // tn) * tn

    # fuse features + directions into one lane-contiguous slab (single DMA/step)
    xd = jnp.concatenate(
        [xyz_feat.astype(jnp.float32), d.astype(jnp.float32),
         jnp.zeros((N, IN_W - 35), jnp.float32)], axis=1)             # (N, 36)
    if Np != N:
        # pad directions with (1,0,0) so in-kernel normalize never divides by 0
        pad = jnp.zeros((Np - N, IN_W), jnp.float32).at[:, 32].set(1.0)
        xd = jnp.concatenate([xd, pad], axis=0)

    out = pl.pallas_call(
        _fused_mngp_kernel,
        out_shape=jax.ShapeDtypeStruct((Np, OUT_W), jnp.float32),
        grid_spec=pltpu.PrefetchScalarGridSpec(
            num_scalar_prefetch=0,
            grid=(Np // tn,),
            in_specs=[
                pl.BlockSpec((tn, IN_W), lambda i: (i, 0)),   # [feat | dir | pad]
                pl.BlockSpec((32, 64), lambda i: (0, 0)),     # geo layer 1
                pl.BlockSpec((64, 32), lambda i: (0, 0)),     # geo layer 2 (padded)
                pl.BlockSpec((16, 64), lambda i: (0, 0)),     # rgb layer 1 (SH half)
                pl.BlockSpec((16, 64), lambda i: (0, 0)),     # rgb layer 1 (feat half)
                pl.BlockSpec((64, 64), lambda i: (0, 0)),     # rgb layer 2
                pl.BlockSpec((64, 3), lambda i: (0, 0)),      # rgb layer 3
            ],
            out_specs=pl.BlockSpec((tn, OUT_W), lambda i: (i, 0)),
        ),
        compiler_params=pltpu.CompilerParams(dimension_semantics=("parallel",)),
    )(xd, gw1, gw2, rw1s, rw1f, rw2, rw3)

    return out[:N, 0], out[:N, 1:4]


# ----------------------------------------------------------------------------
# Model wrapper (parameters built deterministically in-script)
# ----------------------------------------------------------------------------
class MNGPPallas:
    def __init__(self, scale, rgb_act="Sigmoid", size=2, t=19, key=None):
        assert rgb_act == "Sigmoid"
        self.scale = float(scale)
        self.size = size
        self.L, self.F, self.N_min = 16, 2, 16
        self.T = 2 ** t
        self.b = math.exp(math.log(2048 * scale / self.N_min) / (self.L - 1))
        # tcnn grid_scale: exp2(level * log2 b) * N_min - 1
        self.level_scales = [self.N_min * (self.b ** l) - 1.0 for l in range(self.L)]

        # buffers (same semantics as the torch registered buffers)
        self.center = jnp.zeros((1, 3), jnp.float32)
        self.xyz_min = -jnp.ones((1, 3), jnp.float32) * scale
        self.xyz_max = jnp.ones((1, 3), jnp.float32) * scale
        self.half_size = (self.xyz_max - self.xyz_min) / 2

        keys = jax.random.split(key, 1 + 5 * size)
        # hash grid tables, tcnn init: U(-1e-4, 1e-4)
        self.hash_tables = jax.random.uniform(
            keys[0], (self.L, self.T, self.F), jnp.float32, -1e-4, 1e-4)

        # MLP weights (f32 master copies + bf16 kernel-ready copies)
        self.net_params = []      # raw f32 tuples
        self.kernel_weights = []  # prepared for the fused kernel
        k = 1
        for _ in range(size):
            gw1 = jax.random.normal(keys[k], (32, 64), jnp.float32) * (2.0 / 32) ** 0.5; k += 1
            gw2 = jax.random.normal(keys[k], (64, 17), jnp.float32) * (2.0 / 64) ** 0.5; k += 1
            rw1 = jax.random.normal(keys[k], (32, 64), jnp.float32) * (2.0 / 32) ** 0.5; k += 1
            rw2 = jax.random.normal(keys[k], (64, 64), jnp.float32) * (2.0 / 64) ** 0.5; k += 1
            rw3 = jax.random.normal(keys[k], (64, 3), jnp.float32) * (2.0 / 64) ** 0.5; k += 1
            self.net_params.append((gw1, gw2, rw1, rw2, rw3))

            # wrapper-side prep (once): pad gw2 -> (64,32), split rw1, cast MXU
            # operands to bf16 (accumulation stays f32 via preferred_element_type)
            gw2p = jnp.zeros((64, 32), jnp.float32).at[:, :17].set(gw2)
            self.kernel_weights.append((
                gw1.astype(jnp.bfloat16),
                gw2p.astype(jnp.bfloat16),
                rw1[:16].astype(jnp.bfloat16),   # SH half
                rw1[16:].astype(jnp.bfloat16),   # feature half
                rw2.astype(jnp.bfloat16),
                rw3.astype(jnp.bfloat16),
            ))

    # multi-resolution hash grid encoding (plain JAX: data-dependent gather)
    # TODO(synk): tcnn uses dense (un-hashed) indexing for coarse levels whose full
    # grid fits in T; here every level is hashed with the standard tcnn primes.
    def _hash_encode(self, x01):
        corners = jnp.asarray(
            [[0, 0, 0], [0, 0, 1], [0, 1, 0], [0, 1, 1],
             [1, 0, 0], [1, 0, 1], [1, 1, 0], [1, 1, 1]], dtype=jnp.uint32)
        primes = jnp.asarray([1, 2654435761, 805459861], dtype=jnp.uint32)
        outs = []
        for l in range(self.L):
            s = jnp.float32(self.level_scales[l])
            pos = x01 * s + 0.5
            pos0 = jnp.floor(pos)
            w = pos - pos0                                           # (N, 3)
            pos0 = pos0.astype(jnp.uint32)
            cidx = pos0[:, None, :] + corners[None, :, :]            # (N, 8, 3)
            hashed = cidx * primes[None, None, :]
            h = (hashed[..., 0] ^ hashed[..., 1] ^ hashed[..., 2]) & jnp.uint32(self.T - 1)
            feats = jnp.take(self.hash_tables[l], h.astype(jnp.int32), axis=0)  # (N,8,F)
            cw = jnp.where(corners[None, :, :] == 1, w[:, None, :], 1.0 - w[:, None, :])
            wts = jnp.prod(cw, axis=-1)                              # (N, 8)
            outs.append(jnp.sum(feats * wts[..., None], axis=1))     # (N, F)
        return jnp.concatenate(outs, axis=1)                         # (N, 32)

    def __call__(self, x, d, ind):
        # density() preprocessing
        xn = (x - self.xyz_min) / (self.xyz_max - self.xyz_min)
        xn = jnp.clip(xn, 0.0, 1.0)
        xyz_feature = self._hash_encode(xn)
        # geo MLP, TruncExp, dir normalize, SH(4), rgb MLP + Sigmoid: fused kernel
        sigmas, rgbs = fused_mngp_mlp(xyz_feature, d, self.kernel_weights[ind])
        return sigmas, rgbs


# ----------------------------------------------------------------------------
if __name__ == "__main__":
    key = jax.random.PRNGKey(0)
    kx, kd, kp = jax.random.split(key, 3)

    scale = 0.5
    N = 256
    model = MNGPPallas(scale=scale, size=2, t=14, key=kp)  # small hash table for demo

    x = jax.random.uniform(kx, (N, 3), jnp.float32, minval=-scale, maxval=scale)
    d = jax.random.normal(kd, (N, 3), jnp.float32)

    sigmas, rgbs = model(x, d, ind=1)
    jax.block_until_ready((sigmas, rgbs))

    assert sigmas.shape == (N,) and sigmas.dtype == jnp.float32
    assert rgbs.shape == (N, 3) and rgbs.dtype == jnp.float32
    assert bool(jnp.all(jnp.isfinite(sigmas))) and bool(jnp.all(jnp.isfinite(rgbs)))
    assert bool(jnp.all(sigmas > 0.0))                    # TruncExp output
    assert bool(jnp.all((rgbs >= 0.0) & (rgbs <= 1.0)))   # Sigmoid output

    print("KERNEL_OK")
</pallas_src>

<mosaic_0001>
module attributes {stable_mosaic.version = 11 : i64} {
  func.func @_fused_mngp_kernel(%arg0: i32, %arg1: memref<256x36xf32, #tpu.memory_space<vmem>>, %arg2: memref<32x64xbf16, #tpu.memory_space<vmem>>, %arg3: memref<64x32xbf16, #tpu.memory_space<vmem>>, %arg4: memref<16x64xbf16, #tpu.memory_space<vmem>>, %arg5: memref<16x64xbf16, #tpu.memory_space<vmem>>, %arg6: memref<64x64xbf16, #tpu.memory_space<vmem>>, %arg7: memref<64x3xbf16, #tpu.memory_space<vmem>>, %arg8: memref<256x4xf32, #tpu.memory_space<vmem>>) attributes {dimension_semantics = [#tpu.dimension_semantics<parallel>], iteration_bounds = array<i64: 1>, scalar_prefetch = 0 : i64, scratch_operands = 0 : i64, tpu.core_type = #tpu.core_type<tc>, window_params = [{transform_indices = @transform_0, window_bounds = array<i64: 256, 36>}, {pipeline_mode = #tpu.pipeline_mode<synchronous>, transform_indices = @transform_1, window_bounds = array<i64: 32, 64>}, {pipeline_mode = #tpu.pipeline_mode<synchronous>, transform_indices = @transform_2, window_bounds = array<i64: 64, 32>}, {pipeline_mode = #tpu.pipeline_mode<synchronous>, transform_indices = @transform_3, window_bounds = array<i64: 16, 64>}, {pipeline_mode = #tpu.pipeline_mode<synchronous>, transform_indices = @transform_4, window_bounds = array<i64: 16, 64>}, {pipeline_mode = #tpu.pipeline_mode<synchronous>, transform_indices = @transform_5, window_bounds = array<i64: 64, 64>}, {pipeline_mode = #tpu.pipeline_mode<synchronous>, transform_indices = @transform_6, window_bounds = array<i64: 64, 3>}, {transform_indices = @transform_7, window_bounds = array<i64: 256, 4>}]} {
    %c0 = arith.constant 0 : index
    %c0_0 = arith.constant 0 : index
    %0 = vector.load %arg1[%c0, %c0_0] : memref<256x36xf32, #tpu.memory_space<vmem>>, vector<256x36xf32>
    %1 = vector.extract_strided_slice %0 {offsets = [0, 0], sizes = [256, 32], strides = [1, 1]} : vector<256x36xf32> to vector<256x32xf32>
    %2 = vector.extract_strided_slice %0 {offsets = [0, 32], sizes = [256, 3], strides = [1, 1]} : vector<256x36xf32> to vector<256x3xf32>
    %3 = arith.truncf %1 : vector<256x32xf32> to vector<256x32xbf16>
    %c0_1 = arith.constant 0 : index
    %c0_2 = arith.constant 0 : index
    %4 = vector.load %arg2[%c0_1, %c0_2] : memref<32x64xbf16, #tpu.memory_space<vmem>>, vector<32x64xbf16>
    %cst = arith.constant dense<0.000000e+00> : vector<256x64xf32>
    %5 = tpu.matmul %3, %4, %cst {dimension_numbers = #tpu.dot_dimension_numbers<[1], [0], [0], [1], [0, 0, 1, 1], [], []>} : vector<256x32xbf16>, vector<32x64xbf16>, vector<256x64xf32> -> vector<256x64xf32>
    %cst_3 = arith.constant 0.000000e+00 : f32
    %6 = vector.broadcast %cst_3 : f32 to vector<256x64xf32>
    %7 = arith.maximumf %5, %6 : vector<256x64xf32>
    %8 = arith.truncf %7 : vector<256x64xf32> to vector<256x64xbf16>
    %c0_4 = arith.constant 0 : index
    %c0_5 = arith.constant 0 : index
    %9 = vector.load %arg3[%c0_4, %c0_5] : memref<64x32xbf16, #tpu.memory_space<vmem>>, vector<64x32xbf16>
    %cst_6 = arith.constant dense<0.000000e+00> : vector<256x32xf32>
    %10 = tpu.matmul %8, %9, %cst_6 {dimension_numbers = #tpu.dot_dimension_numbers<[1], [0], [0], [1], [0, 0, 1, 1], [], []>} : vector<256x64xbf16>, vector<64x32xbf16>, vector<256x32xf32> -> vector<256x32xf32>
    %11 = vector.extract_strided_slice %10 {offsets = [0, 0], sizes = [256, 1], strides = [1, 1]} : vector<256x32xf32> to vector<256x1xf32>
    %12 = math.exp %11 : vector<256x1xf32>
    %13 = vector.extract_strided_slice %10 {offsets = [0, 1], sizes = [256, 16], strides = [1, 1]} : vector<256x32xf32> to vector<256x16xf32>
    %14 = arith.mulf %2, %2 : vector<256x3xf32>
    %cst_7 = arith.constant dense<0.000000e+00> : vector<256xf32>
    %15 = vector.multi_reduction <add>, %14, %cst_7 [1] : vector<256x3xf32> to vector<256xf32>
    %16 = vector.shape_cast %15 : vector<256xf32> to vector<256x1xf32>
    %17 = math.rsqrt %16 : vector<256x1xf32>
    %18 = vector.broadcast %17 : vector<256x1xf32> to vector<256x3xf32>
    %19 = arith.mulf %2, %18 : vector<256x3xf32>
    %20 = vector.extract_strided_slice %19 {offsets = [0, 0], sizes = [256, 1], strides = [1, 1]} : vector<256x3xf32> to vector<256x1xf32>
    %21 = vector.extract_strided_slice %19 {offsets = [0, 1], sizes = [256, 1], strides = [1, 1]} : vector<256x3xf32> to vector<256x1xf32>
    %22 = vector.extract_strided_slice %19 {offsets = [0, 2], sizes = [256, 1], strides = [1, 1]} : vector<256x3xf32> to vector<256x1xf32>
    %23 = arith.mulf %20, %21 : vector<256x1xf32>
    %24 = arith.mulf %20, %22 : vector<256x1xf32>
    %25 = arith.mulf %21, %22 : vector<256x1xf32>
    %26 = arith.mulf %20, %20 : vector<256x1xf32>
    %27 = arith.mulf %21, %21 : vector<256x1xf32>
    %28 = arith.mulf %22, %22 : vector<256x1xf32>
    %cst_8 = arith.constant 0.282094806 : f32
    %29 = vector.broadcast %cst_8 : f32 to vector<256x1xf32>
    %cst_9 = arith.constant -0.488602519 : f32
    %30 = vector.broadcast %cst_9 : f32 to vector<256x1xf32>
    %31 = arith.mulf %30, %21 : vector<256x1xf32>
    %cst_10 = arith.constant 0.488602519 : f32
    %32 = vector.broadcast %cst_10 : f32 to vector<256x1xf32>
    %33 = arith.mulf %32, %22 : vector<256x1xf32>
    %cst_11 = arith.constant -0.488602519 : f32
    %34 = vector.broadcast %cst_11 : f32 to vector<256x1xf32>
    %35 = arith.mulf %34, %20 : vector<256x1xf32>
    %cst_12 = arith.constant 1.09254849 : f32
    %36 = vector.broadcast %cst_12 : f32 to vector<256x1xf32>
    %37 = arith.mulf %36, %23 : vector<256x1xf32>
    %cst_13 = arith.constant -1.09254849 : f32
    %38 = vector.broadcast %cst_13 : f32 to vector<256x1xf32>
    %39 = arith.mulf %38, %25 : vector<256x1xf32>
    %cst_14 = arith.constant 0.946174681 : f32
    %40 = vector.broadcast %cst_14 : f32 to vector<256x1xf32>
    %41 = arith.mulf %40, %28 : vector<256x1xf32>
    %cst_15 = arith.constant 0.31539157 : f32
    %42 = vector.broadcast %cst_15 : f32 to vector<256x1xf32>
    %43 = arith.subf %41, %42 : vector<256x1xf32>
    %cst_16 = arith.constant -1.09254849 : f32
    %44 = vector.broadcast %cst_16 : f32 to vector<256x1xf32>
    %45 = arith.mulf %44, %24 : vector<256x1xf32>
    %46 = arith.subf %26, %27 : vector<256x1xf32>
    %cst_17 = arith.constant 0.546274245 : f32
    %47 = vector.broadcast %cst_17 : f32 to vector<256x1xf32>
    %48 = arith.mulf %47, %46 : vector<256x1xf32>
    %cst_18 = arith.constant 0.590043604 : f32
    %49 = vector.broadcast %cst_18 : f32 to vector<256x1xf32>
    %50 = arith.mulf %49, %21 : vector<256x1xf32>
    %cst_19 = arith.constant -3.000000e+00 : f32
    %51 = vector.broadcast %cst_19 : f32 to vector<256x1xf32>
    %52 = arith.mulf %51, %26 : vector<256x1xf32>
    %53 = arith.addf %52, %27 : vector<256x1xf32>
    %54 = arith.mulf %50, %53 : vector<256x1xf32>
    %cst_20 = arith.constant 2.89061141 : f32
    %55 = vector.broadcast %cst_20 : f32 to vector<256x1xf32>
    %56 = arith.mulf %55, %23 : vector<256x1xf32>
    %57 = arith.mulf %56, %22 : vector<256x1xf32>
    %cst_21 = arith.constant 0.457045794 : f32
    %58 = vector.broadcast %cst_21 : f32 to vector<256x1xf32>
    %59 = arith.mulf %58, %21 : vector<256x1xf32>
    %cst_22 = arith.constant 5.000000e+00 : f32
    %60 = vector.broadcast %cst_22 : f32 to vector<256x1xf32>
    %61 = arith.mulf %60, %28 : vector<256x1xf32>
    %cst_23 = arith.constant 1.000000e+00 : f32
    %62 = vector.broadcast %cst_23 : f32 to vector<256x1xf32>
    %63 = arith.subf %62, %61 : vector<256x1xf32>
    %64 = arith.mulf %59, %63 : vector<256x1xf32>
    %cst_24 = arith.constant 0.373176336 : f32
    %65 = vector.broadcast %cst_24 : f32 to vector<256x1xf32>
    %66 = arith.mulf %65, %22 : vector<256x1xf32>
    %cst_25 = arith.constant 5.000000e+00 : f32
    %67 = vector.broadcast %cst_25 : f32 to vector<256x1xf32>
    %68 = arith.mulf %67, %28 : vector<256x1xf32>
    %cst_26 = arith.constant 3.000000e+00 : f32
    %69 = vector.broadcast %cst_26 : f32 to vector<256x1xf32>
    %70 = arith.subf %68, %69 : vector<256x1xf32>
    %71 = arith.mulf %66, %70 : vector<256x1xf32>
    %cst_27 = arith.constant 0.457045794 : f32
    %72 = vector.broadcast %cst_27 : f32 to vector<256x1xf32>
    %73 = arith.mulf %72, %20 : vector<256x1xf32>
    %cst_28 = arith.constant 5.000000e+00 : f32
    %74 = vector.broadcast %cst_28 : f32 to vector<256x1xf32>
    %75 = arith.mulf %74, %28 : vector<256x1xf32>
    %cst_29 = arith.constant 1.000000e+00 : f32
    %76 = vector.broadcast %cst_29 : f32 to vector<256x1xf32>
    %77 = arith.subf %76, %75 : vector<256x1xf32>
    %78 = arith.mulf %73, %77 : vector<256x1xf32>
    %cst_30 = arith.constant 1.44530571 : f32
    %79 = vector.broadcast %cst_30 : f32 to vector<256x1xf32>
    %80 = arith.mulf %79, %22 : vector<256x1xf32>
    %81 = arith.subf %26, %27 : vector<256x1xf32>
    %82 = arith.mulf %80, %81 : vector<256x1xf32>
    %cst_31 = arith.constant 0.590043604 : f32
    %83 = vector.broadcast %cst_31 : f32 to vector<256x1xf32>
    %84 = arith.mulf %83, %20 : vector<256x1xf32>
    %cst_32 = arith.constant 0.000000e+00 : f32
    %85 = vector.broadcast %cst_32 : f32 to vector<256x1xf32>
    %86 = arith.subf %85, %26 : vector<256x1xf32>
    %cst_33 = arith.constant 3.000000e+00 : f32
    %87 = vector.broadcast %cst_33 : f32 to vector<256x1xf32>
    %88 = arith.mulf %87, %27 : vector<256x1xf32>
    %89 = arith.addf %86, %88 : vector<256x1xf32>
    %90 = arith.mulf %84, %89 : vector<256x1xf32>
    %91 = tpu.concatenate %29, %31, %33, %35, %37, %39, %43, %45, %48, %54, %57, %64, %71, %78, %82, %90 in 1 : vector<256x1xf32>, vector<256x1xf32>, vector<256x1xf32>, vector<256x1xf32>, vector<256x1xf32>, vector<256x1xf32>, vector<256x1xf32>, vector<256x1xf32>, vector<256x1xf32>, vector<256x1xf32>, vector<256x1xf32>, vector<256x1xf32>, vector<256x1xf32>, vector<256x1xf32>, vector<256x1xf32>, vector<256x1xf32> -> vector<256x16xf32>
    %92 = arith.truncf %91 : vector<256x16xf32> to vector<256x16xbf16>
    %c0_34 = arith.constant 0 : index
    %c0_35 = arith.constant 0 : index
    %93 = vector.load %arg4[%c0_34, %c0_35] : memref<16x64xbf16, #tpu.memory_space<vmem>>, vector<16x64xbf16>
    %cst_36 = arith.constant dense<0.000000e+00> : vector<256x64xf32>
    %94 = tpu.matmul %92, %93, %cst_36 {dimension_numbers = #tpu.dot_dimension_numbers<[1], [0], [0], [1], [0, 0, 1, 1], [], []>} : vector<256x16xbf16>, vector<16x64xbf16>, vector<256x64xf32> -> vector<256x64xf32>
    %95 = arith.truncf %13 : vector<256x16xf32> to vector<256x16xbf16>
    %c0_37 = arith.constant 0 : index
    %c0_38 = arith.constant 0 : index
    %96 = vector.load %arg5[%c0_37, %c0_38] : memref<16x64xbf16, #tpu.memory_space<vmem>>, vector<16x64xbf16>
    %cst_39 = arith.constant dense<0.000000e+00> : vector<256x64xf32>
    %97 = tpu.matmul %95, %96, %cst_39 {dimension_numbers = #tpu.dot_dimension_numbers<[1], [0], [0], [1], [0, 0, 1, 1], [], []>} : vector<256x16xbf16>, vector<16x64xbf16>, vector<256x64xf32> -> vector<256x64xf32>
    %98 = arith.addf %94, %97 : vector<256x64xf32>
    %cst_40 = arith.constant 0.000000e+00 : f32
    %99 = vector.broadcast %cst_40 : f32 to vector<256x64xf32>
    %100 = arith.maximumf %98, %99 : vector<256x64xf32>
    %101 = arith.truncf %100 : vector<256x64xf32> to vector<256x64xbf16>
    %c0_41 = arith.constant 0 : index
    %c0_42 = arith.constant 0 : index
    %102 = vector.load %arg6[%c0_41, %c0_42] : memref<64x64xbf16, #tpu.memory_space<vmem>>, vector<64x64xbf16>
    %cst_43 = arith.constant dense<0.000000e+00> : vector<256x64xf32>
    %103 = tpu.matmul %101, %102, %cst_43 {dimension_numbers = #tpu.dot_dimension_numbers<[1], [0], [0], [1], [0, 0, 1, 1], [], []>} : vector<256x64xbf16>, vector<64x64xbf16>, vector<256x64xf32> -> vector<256x64xf32>
    %cst_44 = arith.constant 0.000000e+00 : f32
    %104 = vector.broadcast %cst_44 : f32 to vector<256x64xf32>
    %105 = arith.maximumf %103, %104 : vector<256x64xf32>
    %106 = arith.truncf %105 : vector<256x64xf32> to vector<256x64xbf16>
    %c0_45 = arith.constant 0 : index
    %c0_46 = arith.constant 0 : index
    %107 = vector.load %arg7[%c0_45, %c0_46] : memref<64x3xbf16, #tpu.memory_space<vmem>>, vector<64x3xbf16>
    %cst_47 = arith.constant dense<0.000000e+00> : vector<256x3xf32>
    %108 = tpu.matmul %106, %107, %cst_47 {dimension_numbers = #tpu.dot_dimension_numbers<[1], [0], [0], [1], [0, 0, 1, 1], [], []>} : vector<256x64xbf16>, vector<64x3xbf16>, vector<256x3xf32> -> vector<256x3xf32>
    %109 = arith.negf %108 : vector<256x3xf32>
    %110 = math.exp %109 : vector<256x3xf32>
    %cst_48 = arith.constant 1.000000e+00 : f32
    %111 = vector.broadcast %cst_48 : f32 to vector<256x3xf32>
    %112 = arith.addf %111, %110 : vector<256x3xf32>
    %113 = arith.divf %111, %112 : vector<256x3xf32>
    %114 = tpu.concatenate %12, %113 in 1 : vector<256x1xf32>, vector<256x3xf32> -> vector<256x4xf32>
    %c0_49 = arith.constant 0 : index
    %c0_50 = arith.constant 0 : index
    %115 = vector.load %arg8[%c0_49, %c0_50] : memref<256x4xf32, #tpu.memory_space<vmem>>, vector<256x4xf32>
    tpu.vector_store %arg8[%c0_49, %c0_50], %114 {strides = array<i32>} : memref<256x4xf32, #tpu.memory_space<vmem>>, vector<256x4xf32>,
    return
  }
  func.func @transform_0(%arg0: i32) -> (i32, i32) {
    %c0_i32 = arith.constant 0 : i32
    %c0_i32_0 = arith.constant 0 : i32
    return %arg0, %c0_i32 : i32, i32
  }
  func.func @transform_1(%arg0: i32) -> (i32, i32) {
    %c0_i32 = arith.constant 0 : i32
    %c0_i32_0 = arith.constant 0 : i32
    %c0_i32_1 = arith.constant 0 : i32
    return %c0_i32, %c0_i32_0 : i32, i32
  }
  func.func @transform_2(%arg0: i32) -> (i32, i32) {
    %c0_i32 = arith.constant 0 : i32
    %c0_i32_0 = arith.constant 0 : i32
    %c0_i32_1 = arith.constant 0 : i32
    return %c0_i32, %c0_i32_0 : i32, i32
  }
  func.func @transform_3(%arg0: i32) -> (i32, i32) {
    %c0_i32 = arith.constant 0 : i32
    %c0_i32_0 = arith.constant 0 : i32
    %c0_i32_1 = arith.constant 0 : i32
    return %c0_i32, %c0_i32_0 : i32, i32
  }
  func.func @transform_4(%arg0: i32) -> (i32, i32) {
    %c0_i32 = arith.constant 0 : i32
    %c0_i32_0 = arith.constant 0 : i32
    %c0_i32_1 = arith.constant 0 : i32
    return %c0_i32, %c0_i32_0 : i32, i32
  }
  func.func @transform_5(%arg0: i32) -> (i32, i32) {
    %c0_i32 = arith.constant 0 : i32
    %c0_i32_0 = arith.constant 0 : i32
    %c0_i32_1 = arith.constant 0 : i32
    return %c0_i32, %c0_i32_0 : i32, i32
  }
  func.func @transform_6(%arg0: i32) -> (i32, i32) {
    %c0_i32 = arith.constant 0 : i32
    %c0_i32_0 = arith.constant 0 : i32
    %c0_i32_1 = arith.constant 0 : i32
    return %c0_i32, %c0_i32_0 : i32, i32
  }
  func.func @transform_7(%arg0: i32) -> (i32, i32) {
    %c0_i32 = arith.constant 0 : i32
    %c0_i32_0 = arith.constant 0 : i32
    return %arg0, %c0_i32 : i32, i32
  }
}

</mosaic_0001>

<llo_original>
// kernel: tpu_custom_call.1
$region0: #{tpu_custom_call.1}
  #allocation0 [shape = 'u32[]', space=smem, size = 0x4, offset = 0x4, fixed_abs, tag = 'smem constant byte address 0x4 - core index']
  #allocation1 [shape = 'u32[144,128]{1,0:T(1,128)}', space=vmem, size = 0x12000, scoped, tag = 'internal scratch']
  %s0 = inlined_call_operand.vmem [shape: f32[256,36], index: 0, kind: input, shape index: {}]
  %s1 = inlined_call_operand.vmem [shape: bf16[32,64], index: 1, kind: input, shape index: {}]
  %s2 = inlined_call_operand.vmem [shape: bf16[64,32], index: 2, kind: input, shape index: {}]
  %s3 = inlined_call_operand.vmem [shape: bf16[16,64], index: 3, kind: input, shape index: {}]
  %s4 = inlined_call_operand.vmem [shape: bf16[16,64], index: 4, kind: input, shape index: {}]
  %s5 = inlined_call_operand.vmem [shape: bf16[64,64], index: 5, kind: input, shape index: {}]
  %s6 = inlined_call_operand.vmem [shape: bf16[64,3], index: 6, kind: input, shape index: {}]
  %s7 = inlined_call_operand.vmem [shape: f32[256,4], index: 7, kind: output, shape index: {}]
  %s8 = sld [smem:[#allocation0]]
  $region38: #{tpu_custom_call.1} parent=0
    _
  %s10 = ssub.s32 1, %s8
  %s11 = scalar_select 0, %s10, %s8
  // Predicated region
  $region2: #{tpu_custom_call.1} parent=0 // pred_check
    _
  $region3: #{tpu_custom_call.1} parent=0 // pred_check_branch
    %13 = sbr.rel (0) target = $region5
  $region4: #{tpu_custom_call.1} parent=0 // pred_region
    _
  $region5: #{tpu_custom_call.1} parent=0 // pred_fallthru
    _
  // Predicated region
  $region6: #{tpu_custom_call.1} parent=0 // pred_check
    _
  $region7: #{tpu_custom_call.1} parent=0 // pred_check_branch
    %15 = sbr.rel (0) target = $region9
  $region8: #{tpu_custom_call.1} parent=0 // pred_region
    _
  $region9: #{tpu_custom_call.1} parent=0 // pred_fallthru
    _
  // Predicated region
  $region10: #{tpu_custom_call.1} parent=0 // pred_check
    _
  $region11: #{tpu_custom_call.1} parent=0 // pred_check_branch
    %17 = sbr.rel (0) target = $region13
  $region12: #{tpu_custom_call.1} parent=0 // pred_region
    _
  $region13: #{tpu_custom_call.1} parent=0 // pred_fallthru
    _
  // Predicated region
  $region14: #{tpu_custom_call.1} parent=0 // pred_check
    _
  $region15: #{tpu_custom_call.1} parent=0 // pred_check_branch
    %19 = sbr.rel (0) target = $region17
  $region16: #{tpu_custom_call.1} parent=0 // pred_region
    _
  $region17: #{tpu_custom_call.1} parent=0 // pred_fallthru
    _
  // Predicated region
  $region18: #{tpu_custom_call.1} parent=0 // pred_check
    _
  $region19: #{tpu_custom_call.1} parent=0 // pred_check_branch
    %21 = sbr.rel (0) target = $region21
  $region20: #{tpu_custom_call.1} parent=0 // pred_region
    _
  $region21: #{tpu_custom_call.1} parent=0 // pred_fallthru
    _
  // Predicated region
  $region22: #{tpu_custom_call.1} parent=0 // pred_check
    _
  $region23: #{tpu_custom_call.1} parent=0 // pred_check_branch
    %23 = sbr.rel (0) target = $region25
  $region24: #{tpu_custom_call.1} parent=0 // pred_region
    _
  $region25: #{tpu_custom_call.1} parent=0 // pred_fallthru
    _
  // Predicated region
  $region26: #{tpu_custom_call.1} parent=0 // pred_check
    _
  $region27: #{tpu_custom_call.1} parent=0 // pred_check_branch
    %25 = sbr.rel (0) target = $region29
  $region28: #{tpu_custom_call.1} parent=0 // pred_region
    _
  $region29: #{tpu_custom_call.1} parent=0 // pred_fallthru
    _
  %v27 = vld [vmem:[%s0] sm:$0xff]
  %v28 = vld [vmem:[%s0 + $0x8] sm:$0xff]
  %v29 = vld [vmem:[%s0 + $0x10] sm:$0xff]
  %v30 = vld [vmem:[%s0 + $0x18] sm:$0xff]
  %v31 = vld [vmem:[%s0 + $0x20] sm:$0xff]
  %v32 = vld [vmem:[%s0 + $0x28] sm:$0xff]
  %v33 = vld [vmem:[%s0 + $0x30] sm:$0xff]
  %v34 = vld [vmem:[%s0 + $0x38] sm:$0xff]
  %v35 = vld [vmem:[%s0 + $0x40] sm:$0xff]
  %v36 = vld [vmem:[%s0 + $0x48] sm:$0xff]
  %v37 = vld [vmem:[%s0 + $0x50] sm:$0xff]
  %v38 = vld [vmem:[%s0 + $0x58] sm:$0xff]
  %v39 = vld [vmem:[%s0 + $0x60] sm:$0xff]
  %v40 = vld [vmem:[%s0 + $0x68] sm:$0xff]
  %v41 = vld [vmem:[%s0 + $0x70] sm:$0xff]
  %v42 = vld [vmem:[%s0 + $0x78] sm:$0xff]
  %v43 = vld [vmem:[%s0 + $0x80] sm:$0xff]
  %v44 = vld [vmem:[%s0 + $0x88] sm:$0xff]
  %v45 = vld [vmem:[%s0 + $0x90] sm:$0xff]
  %v46 = vld [vmem:[%s0 + $0x98] sm:$0xff]
  %v47 = vld [vmem:[%s0 + $0xa0] sm:$0xff]
  %v48 = vld [vmem:[%s0 + $0xa8] sm:$0xff]
  %v49 = vld [vmem:[%s0 + $0xb0] sm:$0xff]
  %v50 = vld [vmem:[%s0 + $0xb8] sm:$0xff]
  %v51 = vld [vmem:[%s0 + $0xc0] sm:$0xff]
  %v52 = vld [vmem:[%s0 + $0xc8] sm:$0xff]
  %v53 = vld [vmem:[%s0 + $0xd0] sm:$0xff]
  %v54 = vld [vmem:[%s0 + $0xd8] sm:$0xff]
  %v55 = vld [vmem:[%s0 + $0xe0] sm:$0xff]
  %v56 = vld [vmem:[%s0 + $0xe8] sm:$0xff]
  %v57 = vld [vmem:[%s0 + $0xf0] sm:$0xff]
  %v58 = vld [vmem:[%s0 + $0xf8] sm:$0xff]
  %v59 = vpack.c.bf16 %v28, %v27
  %v60 = vpack.c.bf16 %v30, %v29
  %v61 = vpack.c.bf16 %v32, %v31
  %v62 = vpack.c.bf16 %v34, %v33
  %v63 = vpack.c.bf16 %v36, %v35
  %v64 = vpack.c.bf16 %v38, %v37
  %v65 = vpack.c.bf16 %v40, %v39
  %v66 = vpack.c.bf16 %v42, %v41
  %v67 = vpack.c.bf16 %v44, %v43
  %v68 = vpack.c.bf16 %v46, %v45
  %v69 = vpack.c.bf16 %v48, %v47
  %v70 = vpack.c.bf16 %v50, %v49
  %v71 = vpack.c.bf16 %v52, %v51
  %v72 = vpack.c.bf16 %v54, %v53
  %v73 = vpack.c.bf16 %v56, %v55
  %v74 = vpack.c.bf16 %v58, %v57
  %v75 = vld [vmem:[%s1] sm:$0xf]
  %v76 = vld [vmem:[%s1 + $0x4] sm:$0xf]
  %v77 = vld [vmem:[%s1 + $0x8] sm:$0xf]
  %v78 = vld [vmem:[%s1 + $0xc] sm:$0xf]
  %v83 = vunpack.c.l.b16 %v75
  %v84 = vunpack.c.l.b16 %v76
  %v85 = vunpack.c.l.b16 %v77
  %v86 = vunpack.c.l.b16 %v78
  %v87 = vpack.c.b16 %v84, %v83
  %v88 = vpack.c.b16 %v86, %v85
  %vm91 = vcmask 261120
  %v93 = vsel %vm91, %v59, 0
  %v96 = vsel %vm91, %v60, 0
  %v99 = vsel %vm91, %v61, 0
  %v102 = vsel %vm91, %v62, 0
  %v105 = vsel %vm91, %v63, 0
  %v108 = vsel %vm91, %v64, 0
  %v111 = vsel %vm91, %v65, 0
  %v114 = vsel %vm91, %v66, 0
  %v117 = vsel %vm91, %v67, 0
  %v120 = vsel %vm91, %v68, 0
  %v123 = vsel %vm91, %v69, 0
  %v126 = vsel %vm91, %v70, 0
  %v129 = vsel %vm91, %v71, 0
  %v132 = vsel %vm91, %v72, 0
  %v135 = vsel %vm91, %v73, 0
  %v138 = vsel %vm91, %v74, 0
  %140 = vmatprep.subr.bf16.mxu0 0
  %141 = vmatpush1.bf16.msra.mxu0 %v87
  %142 = vmatprep.subr.bf16.mxu0 0
  %143 = vmatpush1.bf16.msra.mxu0 %v88
  %144 = vmatprep.subr.bf16.mxu0 0
  %145 = vmatpush1.bf16.msra.mxu0 0
  %146 = vmatprep.subr.bf16.mxu0 0
  %147 = vmatpush1.bf16.msra.mxu0 0
  %148 = vmatprep.subr.bf16.mxu0 0
  %149 = vmatpush1.bf16.msra.mxu0 0
  %150 = vmatprep.subr.bf16.mxu0 0
  %151 = vmatpush1.bf16.msra.mxu0 0
  %152 = vmatprep.subr.bf16.mxu0 0
  %153 = vmatpush1.bf16.msra.mxu0 0
  %154 = vmatprep.subr.bf16.mxu0 0
  %155 = vmatpush1.bf16.msra.mxu0 0
  %156 = vmatprep.subr.bf16.mxu0 0
  %157 = vmatpush1.bf16.msra.mxu0 0
  %158 = vmatprep.subr.bf16.mxu0 0
  %159 = vmatpush1.bf16.msra.mxu0 0
  %160 = vmatprep.subr.bf16.mxu0 0
  %161 = vmatpush1.bf16.msra.mxu0 0
  %162 = vmatprep.subr.bf16.mxu0 0
  %163 = vmatpush1.bf16.msra.mxu0 0
  %164 = vmatprep.subr.bf16.mxu0 0
  %165 = vmatpush1.bf16.msra.mxu0 0
  %166 = vmatprep.subr.bf16.mxu0 0
  %167 = vmatpush1.bf16.msra.mxu0 0
  %168 = vmatprep.subr.bf16.mxu0 0
  %169 = vmatpush1.bf16.msra.mxu0 0
  %170 = vmatprep.subr.bf16.mxu0 0
  %171 = vmatpush1.bf16.msra.mxu0 0
  %172 = vmatprep.mubr.bf16.mxu0 0
  %173 = vmatmul.mubr.bf16.gmra.mrb[0].mxu0 %v93
  %v174 = vpop.f32.mrb[0].mxu0
  %v175 = vadd.f32 0.0, %v174
  %v176 = vpop.f32.mrb[0].mxu0
  %v177 = vpop.f32.mrb[0].mxu0
  %v178 = vadd.f32 0.0, %v177
  %v179 = vpop.f32.mrb[0].mxu0
  %180 = vmatprep.mubr.bf16.mxu0 0
  %181 = vmatmul.mubr.bf16.gmra.mrb[0].mxu0 %v96
  %v182 = vpop.f32.mrb[0].mxu0
  %v183 = vadd.f32 0.0, %v182
  %v184 = vpop.f32.mrb[0].mxu0
  %v185 = vpop.f32.mrb[0].mxu0
  %v186 = vadd.f32 0.0, %v185
  %v187 = vpop.f32.mrb[0].mxu0
  %188 = vmatprep.mubr.bf16.mxu0 0
  %189 = vmatmul.mubr.bf16.gmra.mrb[0].mxu0 %v99
  %v190 = vpop.f32.mrb[0].mxu0
  %v191 = vadd.f32 0.0, %v190
  %v192 = vpop.f32.mrb[0].mxu0
  %v193 = vpop.f32.mrb[0].mxu0
  %v194 = vadd.f32 0.0, %v193
  %v195 = vpop.f32.mrb[0].mxu0
  %196 = vmatprep.mubr.bf16.mxu0 0
  %197 = vmatmul.mubr.bf16.gmra.mrb[0].mxu0 %v102
  %v198 = vpop.f32.mrb[0].mxu0
  %v199 = vadd.f32 0.0, %v198
  %v200 = vpop.f32.mrb[0].mxu0
  %v201 = vpop.f32.mrb[0].mxu0
  %v202 = vadd.f32 0.0, %v201
  %v203 = vpop.f32.mrb[0].mxu0
  %204 = vmatprep.mubr.bf16.mxu0 0
  %205 = vmatmul.mubr.bf16.gmra.mrb[0].mxu0 %v105
  %v206 = vpop.f32.mrb[0].mxu0
  %v207 = vadd.f32 0.0, %v206
  %v208 = vpop.f32.mrb[0].mxu0
  %v209 = vpop.f32.mrb[0].mxu0
  %v210 = vadd.f32 0.0, %v209
  %v211 = vpop.f32.mrb[0].mxu0
  %212 = vmatprep.mubr.bf16.mxu0 0
  %213 = vmatmul.mubr.bf16.gmra.mrb[0].mxu0 %v108
  %v214 = vpop.f32.mrb[0].mxu0
  %v215 = vadd.f32 0.0, %v214
  %v216 = vpop.f32.mrb[0].mxu0
  %v217 = vpop.f32.mrb[0].mxu0
  %v218 = vadd.f32 0.0, %v217
  %v219 = vpop.f32.mrb[0].mxu0
  %220 = vmatprep.mubr.bf16.mxu0 0
  %221 = vmatmul.mubr.bf16.gmra.mrb[0].mxu0 %v111
  %v222 = vpop.f32.mrb[0].mxu0
  %v223 = vadd.f32 0.0, %v222
  %v224 = vpop.f32.mrb[0].mxu0
  %v225 = vpop.f32.mrb[0].mxu0
  %v226 = vadd.f32 0.0, %v225
  %v227 = vpop.f32.mrb[0].mxu0
  %228 = vmatprep.mubr.bf16.mxu0 0
  %229 = vmatmul.mubr.bf16.gmra.mrb[0].mxu0 %v114
  %v230 = vpop.f32.mrb[0].mxu0
  %v231 = vadd.f32 0.0, %v230
  %v232 = vpop.f32.mrb[0].mxu0
  %v233 = vpop.f32.mrb[0].mxu0
  %v234 = vadd.f32 0.0, %v233
  %v235 = vpop.f32.mrb[0].mxu0
  %236 = vmatprep.mubr.bf16.mxu0 0
  %237 = vmatmul.mubr.bf16.gmra.mrb[0].mxu0 %v117
  %v238 = vpop.f32.mrb[0].mxu0
  %v239 = vadd.f32 0.0, %v238
  %v240 = vpop.f32.mrb[0].mxu0
  %v241 = vpop.f32.mrb[0].mxu0
  %v242 = vadd.f32 0.0, %v241
  %v243 = vpop.f32.mrb[0].mxu0
  %244 = vmatprep.mubr.bf16.mxu0 0
  %245 = vmatmul.mubr.bf16.gmra.mrb[0].mxu0 %v120
  %v246 = vpop.f32.mrb[0].mxu0
  %v247 = vadd.f32 0.0, %v246
  %v248 = vpop.f32.mrb[0].mxu0
  %v249 = vpop.f32.mrb[0].mxu0
  %v250 = vadd.f32 0.0, %v249
  %v251 = vpop.f32.mrb[0].mxu0
  %252 = vmatprep.mubr.bf16.mxu0 0
  %253 = vmatmul.mubr.bf16.gmra.mrb[0].mxu0 %v123
  %v254 = vpop.f32.mrb[0].mxu0
  %v255 = vadd.f32 0.0, %v254
  %v256 = vpop.f32.mrb[0].mxu0
  %v257 = vpop.f32.mrb[0].mxu0
  %v258 = vadd.f32 0.0, %v257
  %v259 = vpop.f32.mrb[0].mxu0
  %260 = vmatprep.mubr.bf16.mxu0 0
  %261 = vmatmul.mubr.bf16.gmra.mrb[0].mxu0 %v126
  %v262 = vpop.f32.mrb[0].mxu0
  %v263 = vadd.f32 0.0, %v262
  %v264 = vpop.f32.mrb[0].mxu0
  %v265 = vpop.f32.mrb[0].mxu0
  %v266 = vadd.f32 0.0, %v265
  %v267 = vpop.f32.mrb[0].mxu0
  %268 = vmatprep.mubr.bf16.mxu0 0
  %269 = vmatmul.mubr.bf16.gmra.mrb[0].mxu0 %v129
  %v270 = vpop.f32.mrb[0].mxu0
  %v271 = vadd.f32 0.0, %v270
  %v272 = vpop.f32.mrb[0].mxu0
  %v273 = vpop.f32.mrb[0].mxu0
  %v274 = vadd.f32 0.0, %v273
  %v275 = vpop.f32.mrb[0].mxu0
  %276 = vmatprep.mubr.bf16.mxu0 0
  %277 = vmatmul.mubr.bf16.gmra.mrb[0].mxu0 %v132
  %v278 = vpop.f32.mrb[0].mxu0
  %v279 = vadd.f32 0.0, %v278
  %v280 = vpop.f32.mrb[0].mxu0
  %v281 = vpop.f32.mrb[0].mxu0
  %v282 = vadd.f32 0.0, %v281
  %v283 = vpop.f32.mrb[0].mxu0
  %284 = vmatprep.mubr.bf16.mxu0 0
  %285 = vmatmul.mubr.bf16.gmra.mrb[0].mxu0 %v135
  %v286 = vpop.f32.mrb[0].mxu0
  %v287 = vadd.f32 0.0, %v286
  %v288 = vpop.f32.mrb[0].mxu0
  %v289 = vpop.f32.mrb[0].mxu0
  %v290 = vadd.f32 0.0, %v289
  %v291 = vpop.f32.mrb[0].mxu0
  %292 = vmatprep.mubr.bf16.mxu0 0
  %293 = vmatmul.mubr.bf16.gmra.mrb[0].mxu0 %v138
  %v294 = vpop.f32.mrb[0].mxu0
  %v295 = vadd.f32 0.0, %v294
  %v296 = vpop.f32.mrb[0].mxu0
  %v297 = vpop.f32.mrb[0].mxu0
  %v298 = vadd.f32 0.0, %v297
  %v299 = vpop.f32.mrb[0].mxu0
  %300 = vdwg.mxu0
  %v301 = vmax.f32 %v175, 0.0
  %v302 = vmax.f32 %v178, 0.0
  %v303 = vmax.f32 %v183, 0.0
  %v304 = vmax.f32 %v186, 0.0
  %v305 = vmax.f32 %v191, 0.0
  %v306 = vmax.f32 %v194, 0.0
  %v307 = vmax.f32 %v199, 0.0
  %v308 = vmax.f32 %v202, 0.0
  %v309 = vmax.f32 %v207, 0.0
  %v310 = vmax.f32 %v210, 0.0
  %v311 = vmax.f32 %v215, 0.0
  %v312 = vmax.f32 %v218, 0.0
  %v313 = vmax.f32 %v223, 0.0
  %v314 = vmax.f32 %v226, 0.0
  %v315 = vmax.f32 %v231, 0.0
  %v316 = vmax.f32 %v234, 0.0
  %v317 = vmax.f32 %v239, 0.0
  %v318 = vmax.f32 %v242, 0.0
  %v319 = vmax.f32 %v247, 0.0
  %v320 = vmax.f32 %v250, 0.0
  %v321 = vmax.f32 %v255, 0.0
  %v322 = vmax.f32 %v258, 0.0
  %v323 = vmax.f32 %v263, 0.0
  %v324 = vmax.f32 %v266, 0.0
  %v325 = vmax.f32 %v271, 0.0
  %v326 = vmax.f32 %v274, 0.0
  %v327 = vmax.f32 %v279, 0.0
  %v328 = vmax.f32 %v282, 0.0
  %v329 = vmax.f32 %v287, 0.0
  %v330 = vmax.f32 %v290, 0.0
  %v331 = vmax.f32 %v295, 0.0
  %v332 = vmax.f32 %v298, 0.0
  %v333 = vpack.c.bf16 %v302, %v301
  %v334 = vpack.c.bf16 %v304, %v303
  %v335 = vpack.c.bf16 %v306, %v305
  %v336 = vpack.c.bf16 %v308, %v307
  %v337 = vpack.c.bf16 %v310, %v309
  %v338 = vpack.c.bf16 %v312, %v311
  %v339 = vpack.c.bf16 %v314, %v313
  %v340 = vpack.c.bf16 %v316, %v315
  %v341 = vpack.c.bf16 %v318, %v317
  %v342 = vpack.c.bf16 %v320, %v319
  %v343 = vpack.c.bf16 %v322, %v321
  %v344 = vpack.c.bf16 %v324, %v323
  %v345 = vpack.c.bf16 %v326, %v325
  %v346 = vpack.c.bf16 %v328, %v327
  %v347 = vpack.c.bf16 %v330, %v329
  %v348 = vpack.c.bf16 %v332, %v331
  %v349 = vld [vmem:[%s2] sm:$0xf]
  %v350 = vld [vmem:[%s2 + $0x4] sm:$0xf]
  %v351 = vld [vmem:[%s2 + $0x8] sm:$0xf]
  %v352 = vld [vmem:[%s2 + $0xc] sm:$0xf]
  %v353 = vld [vmem:[%s2 + $0x10] sm:$0xf]
  %v354 = vld [vmem:[%s2 + $0x14] sm:$0xf]
  %v355 = vld [vmem:[%s2 + $0x18] sm:$0xf]
  %v356 = vld [vmem:[%s2 + $0x1c] sm:$0xf]
  %v365 = vunpack.c.l.b16 %v349
  %v366 = vunpack.c.l.b16 %v350
  %v367 = vunpack.c.l.b16 %v351
  %v368 = vunpack.c.l.b16 %v352
  %v369 = vunpack.c.l.b16 %v353
  %v370 = vunpack.c.l.b16 %v354
  %v371 = vunpack.c.l.b16 %v355
  %v372 = vunpack.c.l.b16 %v356
  %v373 = vpack.c.b16 %v366, %v365
  %v374 = vpack.c.b16 %v368, %v367
  %v375 = vpack.c.b16 %v370, %v369
  %v376 = vpack.c.b16 %v372, %v371
  %vm381 = vcmask 523264
  %v383 = vsel %vm381, %v333, 0
  %v386 = vsel %vm381, %v334, 0
  %v389 = vsel %vm381, %v335, 0
  %v392 = vsel %vm381, %v336, 0
  %v395 = vsel %vm381, %v337, 0
  %v398 = vsel %vm381, %v338, 0
  %v401 = vsel %vm381, %v339, 0
  %v404 = vsel %vm381, %v340, 0
  %v407 = vsel %vm381, %v341, 0
  %v410 = vsel %vm381, %v342, 0
  %v413 = vsel %vm381, %v343, 0
  %v416 = vsel %vm381, %v344, 0
  %v419 = vsel %vm381, %v345, 0
  %v422 = vsel %vm381, %v346, 0
  %v425 = vsel %vm381, %v347, 0
  %v428 = vsel %vm381, %v348, 0
  %430 = vmatprep.subr.bf16.mxu0 0
  %431 = vmatpush1.bf16.msra.mxu0 %v373
  %432 = vmatprep.subr.bf16.mxu0 0
  %433 = vmatpush1.bf16.msra.mxu0 %v374
  %434 = vmatprep.subr.bf16.mxu0 0
  %435 = vmatpush1.bf16.msra.mxu0 %v375
  %436 = vmatprep.subr.bf16.mxu0 0
  %437 = vmatpush1.bf16.msra.mxu0 %v376
  %438 = vmatprep.subr.bf16.mxu0 0
  %439 = vmatpush1.bf16.msra.mxu0 0
  %440 = vmatprep.subr.bf16.mxu0 0
  %441 = vmatpush1.bf16.msra.mxu0 0
  %442 = vmatprep.subr.bf16.mxu0 0
  %443 = vmatpush1.bf16.msra.mxu0 0
  %444 = vmatprep.subr.bf16.mxu0 0
  %445 = vmatpush1.bf16.msra.mxu0 0
  %446 = vmatprep.subr.bf16.mxu0 0
  %447 = vmatpush1.bf16.msra.mxu0 0
  %448 = vmatprep.subr.bf16.mxu0 0
  %449 = vmatpush1.bf16.msra.mxu0 0
  %450 = vmatprep.subr.bf16.mxu0 0
  %451 = vmatpush1.bf16.msra.mxu0 0
  %452 = vmatprep.subr.bf16.mxu0 0
  %453 = vmatpush1.bf16.msra.mxu0 0
  %454 = vmatprep.subr.bf16.mxu0 0
  %455 = vmatpush1.bf16.msra.mxu0 0
  %456 = vmatprep.subr.bf16.mxu0 0
  %457 = vmatpush1.bf16.msra.mxu0 0
  %458 = vmatprep.subr.bf16.mxu0 0
  %459 = vmatpush1.bf16.msra.mxu0 0
  %460 = vmatprep.subr.bf16.mxu0 0
  %461 = vmatpush1.bf16.msra.mxu0 0
  %462 = vmatprep.mubr.bf16.mxu0 0
  %463 = vmatmul.mubr.bf16.gmra.mrb[0].mxu0 %v383
  %v464 = vpop.f32.mrb[0].mxu0
  %v465 = vadd.f32 0.0, %v464
  %v466 = vpop.f32.mrb[0].mxu0
  %v467 = vpop.f32.mrb[0].mxu0
  %v468 = vadd.f32 0.0, %v467
  %v469 = vpop.f32.mrb[0].mxu0
  %470 = vmatprep.mubr.bf16.mxu0 0
  %471 = vmatmul.mubr.bf16.gmra.mrb[0].mxu0 %v386
  %v472 = vpop.f32.mrb[0].mxu0
  %v473 = vadd.f32 0.0, %v472
  %v474 = vpop.f32.mrb[0].mxu0
  %v475 = vpop.f32.mrb[0].mxu0
  %v476 = vadd.f32 0.0, %v475
  %v477 = vpop.f32.mrb[0].mxu0
  %478 = vmatprep.mubr.bf16.mxu0 0
  %479 = vmatmul.mubr.bf16.gmra.mrb[0].mxu0 %v389
  %v480 = vpop.f32.mrb[0].mxu0
  %v481 = vadd.f32 0.0, %v480
  %v482 = vpop.f32.mrb[0].mxu0
  %v483 = vpop.f32.mrb[0].mxu0
  %v484 = vadd.f32 0.0, %v483
  %v485 = vpop.f32.mrb[0].mxu0
  %486 = vmatprep.mubr.bf16.mxu0 0
  %487 = vmatmul.mubr.bf16.gmra.mrb[0].mxu0 %v392
  %v488 = vpop.f32.mrb[0].mxu0
  %v489 = vadd.f32 0.0, %v488
  %v490 = vpop.f32.mrb[0].mxu0
  %v491 = vpop.f32.mrb[0].mxu0
  %v492 = vadd.f32 0.0, %v491
  %v493 = vpop.f32.mrb[0].mxu0
  %494 = vmatprep.mubr.bf16.mxu0 0
  %495 = vmatmul.mubr.bf16.gmra.mrb[0].mxu0 %v395
  %v496 = vpop.f32.mrb[0].mxu0
  %v497 = vadd.f32 0.0, %v496
  %v498 = vpop.f32.mrb[0].mxu0
  %v499 = vpop.f32.mrb[0].mxu0
  %v500 = vadd.f32 0.0, %v499
  %v501 = vpop.f32.mrb[0].mxu0
  %502 = vmatprep.mubr.bf16.mxu0 0
  %503 = vmatmul.mubr.bf16.gmra.mrb[0].mxu0 %v398
  %v504 = vpop.f32.mrb[0].mxu0
  %v505 = vadd.f32 0.0, %v504
  %v506 = vpop.f32.mrb[0].mxu0
  %v507 = vpop.f32.mrb[0].mxu0
  %v508 = vadd.f32 0.0, %v507
  %v509 = vpop.f32.mrb[0].mxu0
  %510 = vmatprep.mubr.bf16.mxu0 0
  %511 = vmatmul.mubr.bf16.gmra.mrb[0].mxu0 %v401
  %v512 = vpop.f32.mrb[0].mxu0
  %v513 = vadd.f32 0.0, %v512
  %v514 = vpop.f32.mrb[0].mxu0
  %v515 = vpop.f32.mrb[0].mxu0
  %v516 = vadd.f32 0.0, %v515
  %v517 = vpop.f32.mrb[0].mxu0
  %518 = vmatprep.mubr.bf16.mxu0 0
  %519 = vmatmul.mubr.bf16.gmra.mrb[0].mxu0 %v404
  %v520 = vpop.f32.mrb[0].mxu0
  %v521 = vadd.f32 0.0, %v520
  %v522 = vpop.f32.mrb[0].mxu0
  %v523 = vpop.f32.mrb[0].mxu0
  %v524 = vadd.f32 0.0, %v523
  %v525 = vpop.f32.mrb[0].mxu0
  %526 = vmatprep.mubr.bf16.mxu0 0
  %527 = vmatmul.mubr.bf16.gmra.mrb[0].mxu0 %v407
  %v528 = vpop.f32.mrb[0].mxu0
  %v529 = vadd.f32 0.0, %v528
  %v530 = vpop.f32.mrb[0].mxu0
  %v531 = vpop.f32.mrb[0].mxu0
  %v532 = vadd.f32 0.0, %v531
  %v533 = vpop.f32.mrb[0].mxu0
  %534 = vmatprep.mubr.bf16.mxu0 0
  %535 = vmatmul.mubr.bf16.gmra.mrb[0].mxu0 %v410
  %v536 = vpop.f32.mrb[0].mxu0
  %v537 = vadd.f32 0.0, %v536
  %v538 = vpop.f32.mrb[0].mxu0
  %v539 = vpop.f32.mrb[0].mxu0
  %v540 = vadd.f32 0.0, %v539
  %v541 = vpop.f32.mrb[0].mxu0
  %542 = vmatprep.mubr.bf16.mxu0 0
  %543 = vmatmul.mubr.bf16.gmra.mrb[0].mxu0 %v413
  %v544 = vpop.f32.mrb[0].mxu0
  %v545 = vadd.f32 0.0, %v544
  %v546 = vpop.f32.mrb[0].mxu0
  %v547 = vpop.f32.mrb[0].mxu0
  %v548 = vadd.f32 0.0, %v547
  %v549 = vpop.f32.mrb[0].mxu0
  %550 = vmatprep.mubr.bf16.mxu0 0
  %551 = vmatmul.mubr.bf16.gmra.mrb[0].mxu0 %v416
  %v552 = vpop.f32.mrb[0].mxu0
  %v553 = vadd.f32 0.0, %v552
  %v554 = vpop.f32.mrb[0].mxu0
  %v555 = vpop.f32.mrb[0].mxu0
  %v556 = vadd.f32 0.0, %v555
  %v557 = vpop.f32.mrb[0].mxu0
  %558 = vmatprep.mubr.bf16.mxu0 0
  %559 = vmatmul.mubr.bf16.gmra.mrb[0].mxu0 %v419
  %v560 = vpop.f32.mrb[0].mxu0
  %v561 = vadd.f32 0.0, %v560
  %v562 = vpop.f32.mrb[0].mxu0
  %v563 = vpop.f32.mrb[0].mxu0
  %v564 = vadd.f32 0.0, %v563
  %v565 = vpop.f32.mrb[0].mxu0
  %566 = vmatprep.mubr.bf16.mxu0 0
  %567 = vmatmul.mubr.bf16.gmra.mrb[0].mxu0 %v422
  %v568 = vpop.f32.mrb[0].mxu0
  %v569 = vadd.f32 0.0, %v568
  %v570 = vpop.f32.mrb[0].mxu0
  %v571 = vpop.f32.mrb[0].mxu0
  %v572 = vadd.f32 0.0, %v571
  %v573 = vpop.f32.mrb[0].mxu0
  %574 = vmatprep.mubr.bf16.mxu0 0
  %575 = vmatmul.mubr.bf16.gmra.mrb[0].mxu0 %v425
  %v576 = vpop.f32.mrb[0].mxu0
  %v577 = vadd.f32 0.0, %v576
  %v578 = vpop.f32.mrb[0].mxu0
  %v579 = vpop.f32.mrb[0].mxu0
  %v580 = vadd.f32 0.0, %v579
  %v581 = vpop.f32.mrb[0].mxu0
  %582 = vmatprep.mubr.bf16.mxu0 0
  %583 = vmatmul.mubr.bf16.gmra.mrb[0].mxu0 %v428
  %v584 = vpop.f32.mrb[0].mxu0
  %v585 = vadd.f32 0.0, %v584
  %v586 = vpop.f32.mrb[0].mxu0
  %v587 = vpop.f32.mrb[0].mxu0
  %v588 = vadd.f32 0.0, %v587
  %v589 = vpop.f32.mrb[0].mxu0
  %590 = vdwg.mxu0
  %v591 = vmul.f32 %v465, 1.442695
  %v592 = vpow.pop %v591
  %v593 = vmul.f32 %v468, 1.442695
  %v594 = vpow.pop %v593
  %v595 = vmul.f32 %v473, 1.442695
  %v596 = vpow.pop %v595
  %v597 = vmul.f32 %v476, 1.442695
  %v598 = vpow.pop %v597
  %v599 = vmul.f32 %v481, 1.442695
  %v600 = vpow.pop %v599
  %v601 = vmul.f32 %v484, 1.442695
  %v602 = vpow.pop %v601
  %v603 = vmul.f32 %v489, 1.442695
  %v604 = vpow.pop %v603
  %v605 = vmul.f32 %v492, 1.442695
  %v606 = vpow.pop %v605
  %v607 = vmul.f32 %v497, 1.442695
  %v608 = vpow.pop %v607
  %v609 = vmul.f32 %v500, 1.442695
  %v610 = vpow.pop %v609
  %v611 = vmul.f32 %v505, 1.442695
  %v612 = vpow.pop %v611
  %v613 = vmul.f32 %v508, 1.442695
  %v614 = vpow.pop %v613
  %v615 = vmul.f32 %v513, 1.442695
  %v616 = vpow.pop %v615
  %v617 = vmul.f32 %v516, 1.442695
  %v618 = vpow.pop %v617
  %v619 = vmul.f32 %v521, 1.442695
  %v620 = vpow.pop %v619
  %v621 = vmul.f32 %v524, 1.442695
  %v622 = vpow.pop %v621
  %v623 = vmul.f32 %v529, 1.442695
  %v624 = vpow.pop %v623
  %v625 = vmul.f32 %v532, 1.442695
  %v626 = vpow.pop %v625
  %v627 = vmul.f32 %v537, 1.442695
  %v628 = vpow.pop %v627
  %v629 = vmul.f32 %v540, 1.442695
  %v630 = vpow.pop %v629
  %v631 = vmul.f32 %v545, 1.442695
  %v632 = vpow.pop %v631
  %v633 = vmul.f32 %v548, 1.442695
  %v634 = vpow.pop %v633
  %v635 = vmul.f32 %v553, 1.442695
  %v636 = vpow.pop %v635
  %v637 = vmul.f32 %v556, 1.442695
  %v638 = vpow.pop %v637
  %v639 = vmul.f32 %v561, 1.442695
  %v640 = vpow.pop %v639
  %v641 = vmul.f32 %v564, 1.442695
  %v642 = vpow.pop %v641
  %v643 = vmul.f32 %v569, 1.442695
  %v644 = vpow.pop %v643
  %v645 = vmul.f32 %v572, 1.442695
  %v646 = vpow.pop %v645
  %v647 = vmul.f32 %v577, 1.442695
  %v648 = vpow.pop %v647
  %v649 = vmul.f32 %v580, 1.442695
  %v650 = vpow.pop %v649
  %v651 = vmul.f32 %v585, 1.442695
  %v652 = vpow.pop %v651
  %v653 = vmul.f32 %v588, 1.442695
  %v654 = vpow.pop %v653
  %v655 = vmul.f32 %v27, %v27
  %v656 = vmul.f32 %v28, %v28
  %v657 = vmul.f32 %v29, %v29
  %v658 = vmul.f32 %v30, %v30
  %v659 = vmul.f32 %v31, %v31
  %v660 = vmul.f32 %v32, %v32
  %v661 = vmul.f32 %v33, %v33
  %v662 = vmul.f32 %v34, %v34
  %v663 = vmul.f32 %v35, %v35
  %v664 = vmul.f32 %v36, %v36
  %v665 = vmul.f32 %v37, %v37
  %v666 = vmul.f32 %v38, %v38
  %v667 = vmul.f32 %v39, %v39
  %v668 = vmul.f32 %v40, %v40
  %v669 = vmul.f32 %v41, %v41
  %v670 = vmul.f32 %v42, %v42
  %v671 = vmul.f32 %v43, %v43
  %v672 = vmul.f32 %v44, %v44
  %v673 = vmul.f32 %v45, %v45
  %v674 = vmul.f32 %v46, %v46
  %v675 = vmul.f32 %v47, %v47
  %v676 = vmul.f32 %v48, %v48
  %v677 = vmul.f32 %v49, %v49
  %v678 = vmul.f32 %v50, %v50
  %v679 = vmul.f32 %v51, %v51
  %v680 = vmul.f32 %v52, %v52
  %v681 = vmul.f32 %v53, %v53
  %v682 = vmul.f32 %v54, %v54
  %v683 = vmul.f32 %v55, %v55
  %v684 = vmul.f32 %v56, %v56
  %v685 = vmul.f32 %v57, %v57
  %v686 = vmul.f32 %v58, %v58
  %719 = vrot.lane.b32.xlu0 %v655, 96
  %v720 = vpop.permute.xlu0 %719
  %721 = vrot.lane.b32.xlu0 %v656, 96
  %v722 = vpop.permute.xlu0 %721
  %723 = vrot.lane.b32.xlu0 %v657, 96
  %v724 = vpop.permute.xlu0 %723
  %725 = vrot.lane.b32.xlu0 %v658, 96
  %v726 = vpop.permute.xlu0 %725
  %727 = vrot.lane.b32.xlu0 %v659, 96
  %v728 = vpop.permute.xlu0 %727
  %729 = vrot.lane.b32.xlu0 %v660, 96
  %v730 = vpop.permute.xlu0 %729
  %731 = vrot.lane.b32.xlu0 %v661, 96
  %v732 = vpop.permute.xlu0 %731
  %733 = vrot.lane.b32.xlu0 %v662, 96
  %v734 = vpop.permute.xlu0 %733
  %735 = vrot.lane.b32.xlu0 %v663, 96
  %v736 = vpop.permute.xlu0 %735
  %737 = vrot.lane.b32.xlu0 %v664, 96
  %v738 = vpop.permute.xlu0 %737
  %739 = vrot.lane.b32.xlu0 %v665, 96
  %v740 = vpop.permute.xlu0 %739
  %741 = vrot.lane.b32.xlu0 %v666, 96
  %v742 = vpop.permute.xlu0 %741
  %743 = vrot.lane.b32.xlu0 %v667, 96
  %v744 = vpop.permute.xlu0 %743
  %745 = vrot.lane.b32.xlu0 %v668, 96
  %v746 = vpop.permute.xlu0 %745
  %747 = vrot.lane.b32.xlu0 %v669, 96
  %v748 = vpop.permute.xlu0 %747
  %749 = vrot.lane.b32.xlu0 %v670, 96
  %v750 = vpop.permute.xlu0 %749
  %751 = vrot.lane.b32.xlu0 %v671, 96
  %v752 = vpop.permute.xlu0 %751
  %753 = vrot.lane.b32.xlu0 %v672, 96
  %v754 = vpop.permute.xlu0 %753
  %755 = vrot.lane.b32.xlu0 %v673, 96
  %v756 = vpop.permute.xlu0 %755
  %757 = vrot.lane.b32.xlu0 %v674, 96
  %v758 = vpop.permute.xlu0 %757
  %759 = vrot.lane.b32.xlu0 %v675, 96
  %v760 = vpop.permute.xlu0 %759
  %761 = vrot.lane.b32.xlu0 %v676, 96
  %v762 = vpop.permute.xlu0 %761
  %763 = vrot.lane.b32.xlu0 %v677, 96
  %v764 = vpop.permute.xlu0 %763
  %765 = vrot.lane.b32.xlu0 %v678, 96
  %v766 = vpop.permute.xlu0 %765
  %767 = vrot.lane.b32.xlu0 %v679, 96
  %v768 = vpop.permute.xlu0 %767
  %769 = vrot.lane.b32.xlu0 %v680, 96
  %v770 = vpop.permute.xlu0 %769
  %771 = vrot.lane.b32.xlu0 %v681, 96
  %v772 = vpop.permute.xlu0 %771
  %773 = vrot.lane.b32.xlu0 %v682, 96
  %v774 = vpop.permute.xlu0 %773
  %775 = vrot.lane.b32.xlu0 %v683, 96
  %v776 = vpop.permute.xlu0 %775
  %777 = vrot.lane.b32.xlu0 %v684, 96
  %v778 = vpop.permute.xlu0 %777
  %779 = vrot.lane.b32.xlu0 %v685, 96
  %v780 = vpop.permute.xlu0 %779
  %781 = vrot.lane.b32.xlu0 %v686, 96
  %v782 = vpop.permute.xlu0 %781
  %vm815 = vcmask 23552
  %v816 = vsel %vm815, %v720, 0.0
  %817 = vadd.xlane.f32.xlu0 %v816
  %v818 = vpop.xlane.xlu0 %817
  %v819 = vsel %vm815, %v722, 0.0
  %820 = vadd.xlane.f32.xlu0 %v819
  %v821 = vpop.xlane.xlu0 %820
  %v822 = vsel %vm815, %v724, 0.0
  %823 = vadd.xlane.f32.xlu0 %v822
  %v824 = vpop.xlane.xlu0 %823
  %v825 = vsel %vm815, %v726, 0.0
  %826 = vadd.xlane.f32.xlu0 %v825
  %v827 = vpop.xlane.xlu0 %826
  %v828 = vsel %vm815, %v728, 0.0
  %829 = vadd.xlane.f32.xlu0 %v828
  %v830 = vpop.xlane.xlu0 %829
  %v831 = vsel %vm815, %v730, 0.0
  %832 = vadd.xlane.f32.xlu0 %v831
  %v833 = vpop.xlane.xlu0 %832
  %v834 = vsel %vm815, %v732, 0.0
  %835 = vadd.xlane.f32.xlu0 %v834
  %v836 = vpop.xlane.xlu0 %835
  %v837 = vsel %vm815, %v734, 0.0
  %838 = vadd.xlane.f32.xlu0 %v837
  %v839 = vpop.xlane.xlu0 %838
  %v840 = vsel %vm815, %v736, 0.0
  %841 = vadd.xlane.f32.xlu0 %v840
  %v842 = vpop.xlane.xlu0 %841
  %v843 = vsel %vm815, %v738, 0.0
  %844 = vadd.xlane.f32.xlu0 %v843
  %v845 = vpop.xlane.xlu0 %844
  %v846 = vsel %vm815, %v740, 0.0
  %847 = vadd.xlane.f32.xlu0 %v846
  %v848 = vpop.xlane.xlu0 %847
  %v849 = vsel %vm815, %v742, 0.0
  %850 = vadd.xlane.f32.xlu0 %v849
  %v851 = vpop.xlane.xlu0 %850
  %v852 = vsel %vm815, %v744, 0.0
  %853 = vadd.xlane.f32.xlu0 %v852
  %v854 = vpop.xlane.xlu0 %853
  %v855 = vsel %vm815, %v746, 0.0
  %856 = vadd.xlane.f32.xlu0 %v855
  %v857 = vpop.xlane.xlu0 %856
  %v858 = vsel %vm815, %v748, 0.0
  %859 = vadd.xlane.f32.xlu0 %v858
  %v860 = vpop.xlane.xlu0 %859
  %v861 = vsel %vm815, %v750, 0.0
  %862 = vadd.xlane.f32.xlu0 %v861
  %v863 = vpop.xlane.xlu0 %862
  %v864 = vsel %vm815, %v752, 0.0
  %865 = vadd.xlane.f32.xlu0 %v864
  %v866 = vpop.xlane.xlu0 %865
  %v867 = vsel %vm815, %v754, 0.0
  %868 = vadd.xlane.f32.xlu0 %v867
  %v869 = vpop.xlane.xlu0 %868
  %v870 = vsel %vm815, %v756, 0.0
  %871 = vadd.xlane.f32.xlu0 %v870
  %v872 = vpop.xlane.xlu0 %871
  %v873 = vsel %vm815, %v758, 0.0
  %874 = vadd.xlane.f32.xlu0 %v873
  %v875 = vpop.xlane.xlu0 %874
  %v876 = vsel %vm815, %v760, 0.0
  %877 = vadd.xlane.f32.xlu0 %v876
  %v878 = vpop.xlane.xlu0 %877
  %v879 = vsel %vm815, %v762, 0.0
  %880 = vadd.xlane.f32.xlu0 %v879
  %v881 = vpop.xlane.xlu0 %880
  %v882 = vsel %vm815, %v764, 0.0
  %883 = vadd.xlane.f32.xlu0 %v882
  %v884 = vpop.xlane.xlu0 %883
  %v885 = vsel %vm815, %v766, 0.0
  %886 = vadd.xlane.f32.xlu0 %v885
  %v887 = vpop.xlane.xlu0 %886
  %v888 = vsel %vm815, %v768, 0.0
  %889 = vadd.xlane.f32.xlu0 %v888
  %v890 = vpop.xlane.xlu0 %889
  %v891 = vsel %vm815, %v770, 0.0
  %892 = vadd.xlane.f32.xlu0 %v891
  %v893 = vpop.xlane.xlu0 %892
  %v894 = vsel %vm815, %v772, 0.0
  %895 = vadd.xlane.f32.xlu0 %v894
  %v896 = vpop.xlane.xlu0 %895
  %v897 = vsel %vm815, %v774, 0.0
  %898 = vadd.xlane.f32.xlu0 %v897
  %v899 = vpop.xlane.xlu0 %898
  %v900 = vsel %vm815, %v776, 0.0
  %901 = vadd.xlane.f32.xlu0 %v900
  %v902 = vpop.xlane.xlu0 %901
  %v903 = vsel %vm815, %v778, 0.0
  %904 = vadd.xlane.f32.xlu0 %v903
  %v905 = vpop.xlane.xlu0 %904
  %v906 = vsel %vm815, %v780, 0.0
  %907 = vadd.xlane.f32.xlu0 %v906
  %v908 = vpop.xlane.xlu0 %907
  %v909 = vsel %vm815, %v782, 0.0
  %910 = vadd.xlane.f32.xlu0 %v909
  %v911 = vpop.xlane.xlu0 %910
  %v912 = vrsqrt.pop %v818
  %v913 = vrsqrt.pop %v821
  %v914 = vrsqrt.pop %v824
  %v915 = vrsqrt.pop %v827
  %v916 = vrsqrt.pop %v830
  %v917 = vrsqrt.pop %v833
  %v918 = vrsqrt.pop %v836
  %v919 = vrsqrt.pop %v839
  %v920 = vrsqrt.pop %v842
  %v921 = vrsqrt.pop %v845
  %v922 = vrsqrt.pop %v848
  %v923 = vrsqrt.pop %v851
  %v924 = vrsqrt.pop %v854
  %v925 = vrsqrt.pop %v857
  %v926 = vrsqrt.pop %v860
  %v927 = vrsqrt.pop %v863
  %v928 = vrsqrt.pop %v866
  %v929 = vrsqrt.pop %v869
  %v930 = vrsqrt.pop %v872
  %v931 = vrsqrt.pop %v875
  %v932 = vrsqrt.pop %v878
  %v933 = vrsqrt.pop %v881
  %v934 = vrsqrt.pop %v884
  %v935 = vrsqrt.pop %v887
  %v936 = vrsqrt.pop %v890
  %v937 = vrsqrt.pop %v893
  %v938 = vrsqrt.pop %v896
  %v939 = vrsqrt.pop %v899
  %v940 = vrsqrt.pop %v902
  %v941 = vrsqrt.pop %v905
  %v942 = vrsqrt.pop %v908
  %v943 = vrsqrt.pop %v911
  %v944 = vmul.f32 %v27, %v912
  %v945 = vmul.f32 %v28, %v913
  %v946 = vmul.f32 %v29, %v914
  %v947 = vmul.f32 %v30, %v915
  %v948 = vmul.f32 %v31, %v916
  %v949 = vmul.f32 %v32, %v917
  %v950 = vmul.f32 %v33, %v918
  %v951 = vmul.f32 %v34, %v919
  %v952 = vmul.f32 %v35, %v920
  %v953 = vmul.f32 %v36, %v921
  %v954 = vmul.f32 %v37, %v922
  %v955 = vmul.f32 %v38, %v923
  %v956 = vmul.f32 %v39, %v924
  %v957 = vmul.f32 %v40, %v925
  %v958 = vmul.f32 %v41, %v926
  %v959 = vmul.f32 %v42, %v927
  %v960 = vmul.f32 %v43, %v928
  %v961 = vmul.f32 %v44, %v929
  %v962 = vmul.f32 %v45, %v930
  %v963 = vmul.f32 %v46, %v931
  %v964 = vmul.f32 %v47, %v932
  %v965 = vmul.f32 %v48, %v933
  %v966 = vmul.f32 %v49, %v934
  %v967 = vmul.f32 %v50, %v935
  %v968 = vmul.f32 %v51, %v936
  %v969 = vmul.f32 %v52, %v937
  %v970 = vmul.f32 %v53, %v938
  %v971 = vmul.f32 %v54, %v939
  %v972 = vmul.f32 %v55, %v940
  %v973 = vmul.f32 %v56, %v941
  %v974 = vmul.f32 %v57, %v942
  %v975 = vmul.f32 %v58, %v943
  %1008 = vrot.lane.b32.xlu0 %v944, 127
  %v1009 = vpop.permute.xlu0 %1008
  %1010 = vrot.lane.b32.xlu0 %v945, 127
  %v1011 = vpop.permute.xlu0 %1010
  %1012 = vrot.lane.b32.xlu0 %v946, 127
  %v1013 = vpop.permute.xlu0 %1012
  %1014 = vrot.lane.b32.xlu0 %v947, 127
  %v1015 = vpop.permute.xlu0 %1014
  %1016 = vrot.lane.b32.xlu0 %v948, 127
  %v1017 = vpop.permute.xlu0 %1016
  %1018 = vrot.lane.b32.xlu0 %v949, 127
  %v1019 = vpop.permute.xlu0 %1018
  %1020 = vrot.lane.b32.xlu0 %v950, 127
  %v1021 = vpop.permute.xlu0 %1020
  %1022 = vrot.lane.b32.xlu0 %v951, 127
  %v1023 = vpop.permute.xlu0 %1022
  %1024 = vrot.lane.b32.xlu0 %v952, 127
  %v1025 = vpop.permute.xlu0 %1024
  %1026 = vrot.lane.b32.xlu0 %v953, 127
  %v1027 = vpop.permute.xlu0 %1026
  %1028 = vrot.lane.b32.xlu0 %v954, 127
  %v1029 = vpop.permute.xlu0 %1028
  %1030 = vrot.lane.b32.xlu0 %v955, 127
  %v1031 = vpop.permute.xlu0 %1030
  %1032 = vrot.lane.b32.xlu0 %v956, 127
  %v1033 = vpop.permute.xlu0 %1032
  %1034 = vrot.lane.b32.xlu0 %v957, 127
  %v1035 = vpop.permute.xlu0 %1034
  %1036 = vrot.lane.b32.xlu0 %v958, 127
  %v1037 = vpop.permute.xlu0 %1036
  %1038 = vrot.lane.b32.xlu0 %v959, 127
  %v1039 = vpop.permute.xlu0 %1038
  %1040 = vrot.lane.b32.xlu0 %v960, 127
  %v1041 = vpop.permute.xlu0 %1040
  %1042 = vrot.lane.b32.xlu0 %v961, 127
  %v1043 = vpop.permute.xlu0 %1042
  %1044 = vrot.lane.b32.xlu0 %v962, 127
  %v1045 = vpop.permute.xlu0 %1044
  %1046 = vrot.lane.b32.xlu0 %v963, 127
  %v1047 = vpop.permute.xlu0 %1046
  %1048 = vrot.lane.b32.xlu0 %v964, 127
  %v1049 = vpop.permute.xlu0 %1048
  %1050 = vrot.lane.b32.xlu0 %v965, 127
  %v1051 = vpop.permute.xlu0 %1050
  %1052 = vrot.lane.b32.xlu0 %v966, 127
  %v1053 = vpop.permute.xlu0 %1052
  %1054 = vrot.lane.b32.xlu0 %v967, 127
  %v1055 = vpop.permute.xlu0 %1054
  %1056 = vrot.lane.b32.xlu0 %v968, 127
  %v1057 = vpop.permute.xlu0 %1056
  %1058 = vrot.lane.b32.xlu0 %v969, 127
  %v1059 = vpop.permute.xlu0 %1058
  %1060 = vrot.lane.b32.xlu0 %v970, 127
  %v1061 = vpop.permute.xlu0 %1060
  %1062 = vrot.lane.b32.xlu0 %v971, 127
  %v1063 = vpop.permute.xlu0 %1062
  %1064 = vrot.lane.b32.xlu0 %v972, 127
  %v1065 = vpop.permute.xlu0 %1064
  %1066 = vrot.lane.b32.xlu0 %v973, 127
  %v1067 = vpop.permute.xlu0 %1066
  %1068 = vrot.lane.b32.xlu0 %v974, 127
  %v1069 = vpop.permute.xlu0 %1068
  %1070 = vrot.lane.b32.xlu0 %v975, 127
  %v1071 = vpop.permute.xlu0 %1070
  %v1104 = vmul.f32 %v944, %v1009
  %v1105 = vmul.f32 %v945, %v1011
  %v1106 = vmul.f32 %v946, %v1013
  %v1107 = vmul.f32 %v947, %v1015
  %v1108 = vmul.f32 %v948, %v1017
  %v1109 = vmul.f32 %v949, %v1019
  %v1110 = vmul.f32 %v950, %v1021
  %v1111 = vmul.f32 %v951, %v1023
  %v1112 = vmul.f32 %v952, %v1025
  %v1113 = vmul.f32 %v953, %v1027
  %v1114 = vmul.f32 %v954, %v1029
  %v1115 = vmul.f32 %v955, %v1031
  %v1116 = vmul.f32 %v956, %v1033
  %v1117 = vmul.f32 %v957, %v1035
  %v1118 = vmul.f32 %v958, %v1037
  %v1119 = vmul.f32 %v959, %v1039
  %v1120 = vmul.f32 %v960, %v1041
  %v1121 = vmul.f32 %v961, %v1043
  %v1122 = vmul.f32 %v962, %v1045
  %v1123 = vmul.f32 %v963, %v1047
  %v1124 = vmul.f32 %v964, %v1049
  %v1125 = vmul.f32 %v965, %v1051
  %v1126 = vmul.f32 %v966, %v1053
  %v1127 = vmul.f32 %v967, %v1055
  %v1128 = vmul.f32 %v968, %v1057
  %v1129 = vmul.f32 %v969, %v1059
  %v1130 = vmul.f32 %v970, %v1061
  %v1131 = vmul.f32 %v971, %v1063
  %v1132 = vmul.f32 %v972, %v1065
  %v1133 = vmul.f32 %v973, %v1067
  %v1134 = vmul.f32 %v974, %v1069
  %v1135 = vmul.f32 %v975, %v1071
  %1136 = vrot.lane.b32.xlu0 %v944, 126
  %v1137 = vpop.permute.xlu0 %1136
  %1138 = vrot.lane.b32.xlu0 %v945, 126
  %v1139 = vpop.permute.xlu0 %1138
  %1140 = vrot.lane.b32.xlu0 %v946, 126
  %v1141 = vpop.permute.xlu0 %1140
  %1142 = vrot.lane.b32.xlu0 %v947, 126
  %v1143 = vpop.permute.xlu0 %1142
  %1144 = vrot.lane.b32.xlu0 %v948, 126
  %v1145 = vpop.permute.xlu0 %1144
  %1146 = vrot.lane.b32.xlu0 %v949, 126
  %v1147 = vpop.permute.xlu0 %1146
  %1148 = vrot.lane.b32.xlu0 %v950, 126
  %v1149 = vpop.permute.xlu0 %1148
  %1150 = vrot.lane.b32.xlu0 %v951, 126
  %v1151 = vpop.permute.xlu0 %1150
  %1152 = vrot.lane.b32.xlu0 %v952, 126
  %v1153 = vpop.permute.xlu0 %1152
  %1154 = vrot.lane.b32.xlu0 %v953, 126
  %v1155 = vpop.permute.xlu0 %1154
  %1156 = vrot.lane.b32.xlu0 %v954, 126
  %v1157 = vpop.permute.xlu0 %1156
  %1158 = vrot.lane.b32.xlu0 %v955, 126
  %v1159 = vpop.permute.xlu0 %1158
  %1160 = vrot.lane.b32.xlu0 %v956, 126
  %v1161 = vpop.permute.xlu0 %1160
  %1162 = vrot.lane.b32.xlu0 %v957, 126
  %v1163 = vpop.permute.xlu0 %1162
  %1164 = vrot.lane.b32.xlu0 %v958, 126
  %v1165 = vpop.permute.xlu0 %1164
  %1166 = vrot.lane.b32.xlu0 %v959, 126
  %v1167 = vpop.permute.xlu0 %1166
  %1168 = vrot.lane.b32.xlu0 %v960, 126
  %v1169 = vpop.permute.xlu0 %1168
  %1170 = vrot.lane.b32.xlu0 %v961, 126
  %v1171 = vpop.permute.xlu0 %1170
  %1172 = vrot.lane.b32.xlu0 %v962, 126
  %v1173 = vpop.permute.xlu0 %1172
  %1174 = vrot.lane.b32.xlu0 %v963, 126
  %v1175 = vpop.permute.xlu0 %1174
  %1176 = vrot.lane.b32.xlu0 %v964, 126
  %v1177 = vpop.permute.xlu0 %1176
  %1178 = vrot.lane.b32.xlu0 %v965, 126
  %v1179 = vpop.permute.xlu0 %1178
  %1180 = vrot.lane.b32.xlu0 %v966, 126
  %v1181 = vpop.permute.xlu0 %1180
  %1182 = vrot.lane.b32.xlu0 %v967, 126
  %v1183 = vpop.permute.xlu0 %1182
  %1184 = vrot.lane.b32.xlu0 %v968, 126
  %v1185 = vpop.permute.xlu0 %1184
  %1186 = vrot.lane.b32.xlu0 %v969, 126
  %v1187 = vpop.permute.xlu0 %1186
  %1188 = vrot.lane.b32.xlu0 %v970, 126
  %v1189 = vpop.permute.xlu0 %1188
  %1190 = vrot.lane.b32.xlu0 %v971, 126
  %v1191 = vpop.permute.xlu0 %1190
  %1192 = vrot.lane.b32.xlu0 %v972, 126
  %v1193 = vpop.permute.xlu0 %1192
  %1194 = vrot.lane.b32.xlu0 %v973, 126
  %v1195 = vpop.permute.xlu0 %1194
  %1196 = vrot.lane.b32.xlu0 %v974, 126
  %v1197 = vpop.permute.xlu0 %1196
  %1198 = vrot.lane.b32.xlu0 %v975, 126
  %v1199 = vpop.permute.xlu0 %1198
  %v1232 = vmul.f32 %v944, %v1137
  %v1233 = vmul.f32 %v945, %v1139
  %v1234 = vmul.f32 %v946, %v1141
  %v1235 = vmul.f32 %v947, %v1143
  %v1236 = vmul.f32 %v948, %v1145
  %v1237 = vmul.f32 %v949, %v1147
  %v1238 = vmul.f32 %v950, %v1149
  %v1239 = vmul.f32 %v951, %v1151
  %v1240 = vmul.f32 %v952, %v1153
  %v1241 = vmul.f32 %v953, %v1155
  %v1242 = vmul.f32 %v954, %v1157
  %v1243 = vmul.f32 %v955, %v1159
  %v1244 = vmul.f32 %v956, %v1161
  %v1245 = vmul.f32 %v957, %v1163
  %v1246 = vmul.f32 %v958, %v1165
  %v1247 = vmul.f32 %v959, %v1167
  %v1248 = vmul.f32 %v960, %v1169
  %v1249 = vmul.f32 %v961, %v1171
  %v1250 = vmul.f32 %v962, %v1173
  %v1251 = vmul.f32 %v963, %v1175
  %v1252 = vmul.f32 %v964, %v1177
  %v1253 = vmul.f32 %v965, %v1179
  %v1254 = vmul.f32 %v966, %v1181
  %v1255 = vmul.f32 %v967, %v1183
  %v1256 = vmul.f32 %v968, %v1185
  %v1257 = vmul.f32 %v969, %v1187
  %v1258 = vmul.f32 %v970, %v1189
  %v1259 = vmul.f32 %v971, %v1191
  %v1260 = vmul.f32 %v972, %v1193
  %v1261 = vmul.f32 %v973, %v1195
  %v1262 = vmul.f32 %v974, %v1197
  %v1263 = vmul.f32 %v975, %v1199
  %v1264 = vmul.f32 %v944, %v944
  %v1265 = vmul.f32 %v945, %v945
  %v1266 = vmul.f32 %v946, %v946
  %v1267 = vmul.f32 %v947, %v947
  %v1268 = vmul.f32 %v948, %v948
  %v1269 = vmul.f32 %v949, %v949
  %v1270 = vmul.f32 %v950, %v950
  %v1271 = vmul.f32 %v951, %v951
  %v1272 = vmul.f32 %v952, %v952
  %v1273 = vmul.f32 %v953, %v953
  %v1274 = vmul.f32 %v954, %v954
  %v1275 = vmul.f32 %v955, %v955
  %v1276 = vmul.f32 %v956, %v956
  %v1277 = vmul.f32 %v957, %v957
  %v1278 = vmul.f32 %v958, %v958
  %v1279 = vmul.f32 %v959, %v959
  %v1280 = vmul.f32 %v960, %v960
  %v1281 = vmul.f32 %v961, %v961
  %v1282 = vmul.f32 %v962, %v962
  %v1283 = vmul.f32 %v963, %v963
  %v1284 = vmul.f32 %v964, %v964
  %v1285 = vmul.f32 %v965, %v965
  %v1286 = vmul.f32 %v966, %v966
  %v1287 = vmul.f32 %v967, %v967
  %v1288 = vmul.f32 %v968, %v968
  %v1289 = vmul.f32 %v969, %v969
  %v1290 = vmul.f32 %v970, %v970
  %v1291 = vmul.f32 %v971, %v971
  %v1292 = vmul.f32 %v972, %v972
  %v1293 = vmul.f32 %v973, %v973
  %v1294 = vmul.f32 %v974, %v974
  %v1295 = vmul.f32 %v975, %v975
  %v1296 = vmul.f32 %v944, -0.48860252
  %v1297 = vmul.f32 %v945, -0.48860252
  %v1298 = vmul.f32 %v946, -0.48860252
  %v1299 = vmul.f32 %v947, -0.48860252
  %v1300 = vmul.f32 %v948, -0.48860252
  %v1301 = vmul.f32 %v949, -0.48860252
  %v1302 = vmul.f32 %v950, -0.48860252
  %v1303 = vmul.f32 %v951, -0.48860252
  %v1304 = vmul.f32 %v952, -0.48860252
  %v1305 = vmul.f32 %v953, -0.48860252
  %v1306 = vmul.f32 %v954, -0.48860252
  %v1307 = vmul.f32 %v955, -0.48860252
  %v1308 = vmul.f32 %v956, -0.48860252
  %v1309 = vmul.f32 %v957, -0.48860252
  %v1310 = vmul.f32 %v958, -0.48860252
  %v1311 = vmul.f32 %v959, -0.48860252
  %v1312 = vmul.f32 %v960, -0.48860252
  %v1313 = vmul.f32 %v961, -0.48860252
  %v1314 = vmul.f32 %v962, -0.48860252
  %v1315 = vmul.f32 %v963, -0.48860252
  %v1316 = vmul.f32 %v964, -0.48860252
  %v1317 = vmul.f32 %v965, -0.48860252
  %v1318 = vmul.f32 %v966, -0.48860252
  %v1319 = vmul.f32 %v967, -0.48860252
  %v1320 = vmul.f32 %v968, -0.48860252
  %v1321 = vmul.f32 %v969, -0.48860252
  %v1322 = vmul.f32 %v970, -0.48860252
  %v1323 = vmul.f32 %v971, -0.48860252
  %v1324 = vmul.f32 %v972, -0.48860252
  %v1325 = vmul.f32 %v973, -0.48860252
  %v1326 = vmul.f32 %v974, -0.48860252
  %v1327 = vmul.f32 %v975, -0.48860252
  %v1328 = vmul.f32 %v944, 0.48860252
  %v1329 = vmul.f32 %v945, 0.48860252
  %v1330 = vmul.f32 %v946, 0.48860252
  %v1331 = vmul.f32 %v947, 0.48860252
  %v1332 = vmul.f32 %v948, 0.48860252
  %v1333 = vmul.f32 %v949, 0.48860252
  %v1334 = vmul.f32 %v950, 0.48860252
  %v1335 = vmul.f32 %v951, 0.48860252
  %v1336 = vmul.f32 %v952, 0.48860252
  %v1337 = vmul.f32 %v953, 0.48860252
  %v1338 = vmul.f32 %v954, 0.48860252
  %v1339 = vmul.f32 %v955, 0.48860252
  %v1340 = vmul.f32 %v956, 0.48860252
  %v1341 = vmul.f32 %v957, 0.48860252
  %v1342 = vmul.f32 %v958, 0.48860252
  %v1343 = vmul.f32 %v959, 0.48860252
  %v1344 = vmul.f32 %v960, 0.48860252
  %v1345 = vmul.f32 %v961, 0.48860252
  %v1346 = vmul.f32 %v962, 0.48860252
  %v1347 = vmul.f32 %v963, 0.48860252
  %v1348 = vmul.f32 %v964, 0.48860252
  %v1349 = vmul.f32 %v965, 0.48860252
  %v1350 = vmul.f32 %v966, 0.48860252
  %v1351 = vmul.f32 %v967, 0.48860252
  %v1352 = vmul.f32 %v968, 0.48860252
  %v1353 = vmul.f32 %v969, 0.48860252
  %v1354 = vmul.f32 %v970, 0.48860252
  %v1355 = vmul.f32 %v971, 0.48860252
  %v1356 = vmul.f32 %v972, 0.48860252
  %v1357 = vmul.f32 %v973, 0.48860252
  %v1358 = vmul.f32 %v974, 0.48860252
  %v1359 = vmul.f32 %v975, 0.48860252
  %v1360 = vmul.f32 %v1104, 1.0925485
  %v1361 = vmul.f32 %v1105, 1.0925485
  %v1362 = vmul.f32 %v1106, 1.0925485
  %v1363 = vmul.f32 %v1107, 1.0925485
  %v1364 = vmul.f32 %v1108, 1.0925485
  %v1365 = vmul.f32 %v1109, 1.0925485
  %v1366 = vmul.f32 %v1110, 1.0925485
  %v1367 = vmul.f32 %v1111, 1.0925485
  %v1368 = vmul.f32 %v1112, 1.0925485
  %v1369 = vmul.f32 %v1113, 1.0925485
  %v1370 = vmul.f32 %v1114, 1.0925485
  %v1371 = vmul.f32 %v1115, 1.0925485
  %v1372 = vmul.f32 %v1116, 1.0925485
  %v1373 = vmul.f32 %v1117, 1.0925485
  %v1374 = vmul.f32 %v1118, 1.0925485
  %v1375 = vmul.f32 %v1119, 1.0925485
  %v1376 = vmul.f32 %v1120, 1.0925485
  %v1377 = vmul.f32 %v1121, 1.0925485
  %v1378 = vmul.f32 %v1122, 1.0925485
  %v1379 = vmul.f32 %v1123, 1.0925485
  %v1380 = vmul.f32 %v1124, 1.0925485
  %v1381 = vmul.f32 %v1125, 1.0925485
  %v1382 = vmul.f32 %v1126, 1.0925485
  %v1383 = vmul.f32 %v1127, 1.0925485
  %v1384 = vmul.f32 %v1128, 1.0925485
  %v1385 = vmul.f32 %v1129, 1.0925485
  %v1386 = vmul.f32 %v1130, 1.0925485
  %v1387 = vmul.f32 %v1131, 1.0925485
  %v1388 = vmul.f32 %v1132, 1.0925485
  %v1389 = vmul.f32 %v1133, 1.0925485
  %v1390 = vmul.f32 %v1134, 1.0925485
  %v1391 = vmul.f32 %v1135, 1.0925485
  %v1392 = vmul.f32 %v1104, -1.0925485
  %v1393 = vmul.f32 %v1105, -1.0925485
  %v1394 = vmul.f32 %v1106, -1.0925485
  %v1395 = vmul.f32 %v1107, -1.0925485
  %v1396 = vmul.f32 %v1108, -1.0925485
  %v1397 = vmul.f32 %v1109, -1.0925485
  %v1398 = vmul.f32 %v1110, -1.0925485
  %v1399 = vmul.f32 %v1111, -1.0925485
  %v1400 = vmul.f32 %v1112, -1.0925485
  %v1401 = vmul.f32 %v1113, -1.0925485
  %v1402 = vmul.f32 %v1114, -1.0925485
  %v1403 = vmul.f32 %v1115, -1.0925485
  %v1404 = vmul.f32 %v1116, -1.0925485
  %v1405 = vmul.f32 %v1117, -1.0925485
  %v1406 = vmul.f32 %v1118, -1.0925485
  %v1407 = vmul.f32 %v1119, -1.0925485
  %v1408 = vmul.f32 %v1120, -1.0925485
  %v1409 = vmul.f32 %v1121, -1.0925485
  %v1410 = vmul.f32 %v1122, -1.0925485
  %v1411 = vmul.f32 %v1123, -1.0925485
  %v1412 = vmul.f32 %v1124, -1.0925485
  %v1413 = vmul.f32 %v1125, -1.0925485
  %v1414 = vmul.f32 %v1126, -1.0925485
  %v1415 = vmul.f32 %v1127, -1.0925485
  %v1416 = vmul.f32 %v1128, -1.0925485
  %v1417 = vmul.f32 %v1129, -1.0925485
  %v1418 = vmul.f32 %v1130, -1.0925485
  %v1419 = vmul.f32 %v1131, -1.0925485
  %v1420 = vmul.f32 %v1132, -1.0925485
  %v1421 = vmul.f32 %v1133, -1.0925485
  %v1422 = vmul.f32 %v1134, -1.0925485
  %v1423 = vmul.f32 %v1135, -1.0925485
  %v1424 = vmul.f32 %v1264, 0.9461747
  %v1425 = vmul.f32 %v1265, 0.9461747
  %v1426 = vmul.f32 %v1266, 0.9461747
  %v1427 = vmul.f32 %v1267, 0.9461747
  %v1428 = vmul.f32 %v1268, 0.9461747
  %v1429 = vmul.f32 %v1269, 0.9461747
  %v1430 = vmul.f32 %v1270, 0.9461747
  %v1431 = vmul.f32 %v1271, 0.9461747
  %v1432 = vmul.f32 %v1272, 0.9461747
  %v1433 = vmul.f32 %v1273, 0.9461747
  %v1434 = vmul.f32 %v1274, 0.9461747
  %v1435 = vmul.f32 %v1275, 0.9461747
  %v1436 = vmul.f32 %v1276, 0.9461747
  %v1437 = vmul.f32 %v1277, 0.9461747
  %v1438 = vmul.f32 %v1278, 0.9461747
  %v1439 = vmul.f32 %v1279, 0.9461747
  %v1440 = vmul.f32 %v1280, 0.9461747
  %v1441 = vmul.f32 %v1281, 0.9461747
  %v1442 = vmul.f32 %v1282, 0.9461747
  %v1443 = vmul.f32 %v1283, 0.9461747
  %v1444 = vmul.f32 %v1284, 0.9461747
  %v1445 = vmul.f32 %v1285, 0.9461747
  %v1446 = vmul.f32 %v1286, 0.9461747
  %v1447 = vmul.f32 %v1287, 0.9461747
  %v1448 = vmul.f32 %v1288, 0.9461747
  %v1449 = vmul.f32 %v1289, 0.9461747
  %v1450 = vmul.f32 %v1290, 0.9461747
  %v1451 = vmul.f32 %v1291, 0.9461747
  %v1452 = vmul.f32 %v1292, 0.9461747
  %v1453 = vmul.f32 %v1293, 0.9461747
  %v1454 = vmul.f32 %v1294, 0.9461747
  %v1455 = vmul.f32 %v1295, 0.9461747
  %v1456 = vsub.f32 %v1424, 0.31539157
  %v1457 = vsub.f32 %v1425, 0.31539157
  %v1458 = vsub.f32 %v1426, 0.31539157
  %v1459 = vsub.f32 %v1427, 0.31539157
  %v1460 = vsub.f32 %v1428, 0.31539157
  %v1461 = vsub.f32 %v1429, 0.31539157
  %v1462 = vsub.f32 %v1430, 0.31539157
  %v1463 = vsub.f32 %v1431, 0.31539157
  %v1464 = vsub.f32 %v1432, 0.31539157
  %v1465 = vsub.f32 %v1433, 0.31539157
  %v1466 = vsub.f32 %v1434, 0.31539157
  %v1467 = vsub.f32 %v1435, 0.31539157
  %v1468 = vsub.f32 %v1436, 0.31539157
  %v1469 = vsub.f32 %v1437, 0.31539157
  %v1470 = vsub.f32 %v1438, 0.31539157
  %v1471 = vsub.f32 %v1439, 0.31539157
  %v1472 = vsub.f32 %v1440, 0.31539157
  %v1473 = vsub.f32 %v1441, 0.31539157
  %v1474 = vsub.f32 %v1442, 0.31539157
  %v1475 = vsub.f32 %v1443, 0.31539157
  %v1476 = vsub.f32 %v1444, 0.31539157
  %v1477 = vsub.f32 %v1445, 0.31539157
  %v1478 = vsub.f32 %v1446, 0.31539157
  %v1479 = vsub.f32 %v1447, 0.31539157
  %v1480 = vsub.f32 %v1448, 0.31539157
  %v1481 = vsub.f32 %v1449, 0.31539157
  %v1482 = vsub.f32 %v1450, 0.31539157
  %v1483 = vsub.f32 %v1451, 0.31539157
  %v1484 = vsub.f32 %v1452, 0.31539157
  %v1485 = vsub.f32 %v1453, 0.31539157
  %v1486 = vsub.f32 %v1454, 0.31539157
  %v1487 = vsub.f32 %v1455, 0.31539157
  %v1488 = vmul.f32 %v1232, -1.0925485
  %v1489 = vmul.f32 %v1233, -1.0925485
  %v1490 = vmul.f32 %v1234, -1.0925485
  %v1491 = vmul.f32 %v1235, -1.0925485
  %v1492 = vmul.f32 %v1236, -1.0925485
  %v1493 = vmul.f32 %v1237, -1.0925485
  %v1494 = vmul.f32 %v1238, -1.0925485
  %v1495 = vmul.f32 %v1239, -1.0925485
  %v1496 = vmul.f32 %v1240, -1.0925485
  %v1497 = vmul.f32 %v1241, -1.0925485
  %v1498 = vmul.f32 %v1242, -1.0925485
  %v1499 = vmul.f32 %v1243, -1.0925485
  %v1500 = vmul.f32 %v1244, -1.0925485
  %v1501 = vmul.f32 %v1245, -1.0925485
  %v1502 = vmul.f32 %v1246, -1.0925485
  %v1503 = vmul.f32 %v1247, -1.0925485
  %v1504 = vmul.f32 %v1248, -1.0925485
  %v1505 = vmul.f32 %v1249, -1.0925485
  %v1506 = vmul.f32 %v1250, -1.0925485
  %v1507 = vmul.f32 %v1251, -1.0925485
  %v1508 = vmul.f32 %v1252, -1.0925485
  %v1509 = vmul.f32 %v1253, -1.0925485
  %v1510 = vmul.f32 %v1254, -1.0925485
  %v1511 = vmul.f32 %v1255, -1.0925485
  %v1512 = vmul.f32 %v1256, -1.0925485
  %v1513 = vmul.f32 %v1257, -1.0925485
  %v1514 = vmul.f32 %v1258, -1.0925485
  %v1515 = vmul.f32 %v1259, -1.0925485
  %v1516 = vmul.f32 %v1260, -1.0925485
  %v1517 = vmul.f32 %v1261, -1.0925485
  %v1518 = vmul.f32 %v1262, -1.0925485
  %v1519 = vmul.f32 %v1263, -1.0925485
  %1552 = vrot.lane.b32.xlu0 %v1264, 127
  %v1553 = vpop.permute.xlu0 %1552
  %1554 = vrot.lane.b32.xlu0 %v1265, 127
  %v1555 = vpop.permute.xlu0 %1554
  %1556 = vrot.lane.b32.xlu0 %v1266, 127
  %v1557 = vpop.permute.xlu0 %1556
  %1558 = vrot.lane.b32.xlu0 %v1267, 127
  %v1559 = vpop.permute.xlu0 %1558
  %1560 = vrot.lane.b32.xlu0 %v1268, 127
  %v1561 = vpop.permute.xlu0 %1560
  %1562 = vrot.lane.b32.xlu0 %v1269, 127
  %v1563 = vpop.permute.xlu0 %1562
  %1564 = vrot.lane.b32.xlu0 %v1270, 127
  %v1565 = vpop.permute.xlu0 %1564
  %1566 = vrot.lane.b32.xlu0 %v1271, 127
  %v1567 = vpop.permute.xlu0 %1566
  %1568 = vrot.lane.b32.xlu0 %v1272, 127
  %v1569 = vpop.permute.xlu0 %1568
  %1570 = vrot.lane.b32.xlu0 %v1273, 127
  %v1571 = vpop.permute.xlu0 %1570
  %1572 = vrot.lane.b32.xlu0 %v1274, 127
  %v1573 = vpop.permute.xlu0 %1572
  %1574 = vrot.lane.b32.xlu0 %v1275, 127
  %v1575 = vpop.permute.xlu0 %1574
  %1576 = vrot.lane.b32.xlu0 %v1276, 127
  %v1577 = vpop.permute.xlu0 %1576
  %1578 = vrot.lane.b32.xlu0 %v1277, 127
  %v1579 = vpop.permute.xlu0 %1578
  %1580 = vrot.lane.b32.xlu0 %v1278, 127
  %v1581 = vpop.permute.xlu0 %1580
  %1582 = vrot.lane.b32.xlu0 %v1279, 127
  %v1583 = vpop.permute.xlu0 %1582
  %1584 = vrot.lane.b32.xlu0 %v1280, 127
  %v1585 = vpop.permute.xlu0 %1584
  %1586 = vrot.lane.b32.xlu0 %v1281, 127
  %v1587 = vpop.permute.xlu0 %1586
  %1588 = vrot.lane.b32.xlu0 %v1282, 127
  %v1589 = vpop.permute.xlu0 %1588
  %1590 = vrot.lane.b32.xlu0 %v1283, 127
  %v1591 = vpop.permute.xlu0 %1590
  %1592 = vrot.lane.b32.xlu0 %v1284, 127
  %v1593 = vpop.permute.xlu0 %1592
  %1594 = vrot.lane.b32.xlu0 %v1285, 127
  %v1595 = vpop.permute.xlu0 %1594
  %1596 = vrot.lane.b32.xlu0 %v1286, 127
  %v1597 = vpop.permute.xlu0 %1596
  %1598 = vrot.lane.b32.xlu0 %v1287, 127
  %v1599 = vpop.permute.xlu0 %1598
  %1600 = vrot.lane.b32.xlu0 %v1288, 127
  %v1601 = vpop.permute.xlu0 %1600
  %1602 = vrot.lane.b32.xlu0 %v1289, 127
  %v1603 = vpop.permute.xlu0 %1602
  %1604 = vrot.lane.b32.xlu0 %v1290, 127
  %v1605 = vpop.permute.xlu0 %1604
  %1606 = vrot.lane.b32.xlu0 %v1291, 127
  %v1607 = vpop.permute.xlu0 %1606
  %1608 = vrot.lane.b32.xlu0 %v1292, 127
  %v1609 = vpop.permute.xlu0 %1608
  %1610 = vrot.lane.b32.xlu0 %v1293, 127
  %v1611 = vpop.permute.xlu0 %1610
  %1612 = vrot.lane.b32.xlu0 %v1294, 127
  %v1613 = vpop.permute.xlu0 %1612
  %1614 = vrot.lane.b32.xlu0 %v1295, 127
  %v1615 = vpop.permute.xlu0 %1614
  %v1648 = vsub.f32 %v1264, %v1553
  %v1649 = vsub.f32 %v1265, %v1555
  %v1650 = vsub.f32 %v1266, %v1557
  %v1651 = vsub.f32 %v1267, %v1559
  %v1652 = vsub.f32 %v1268, %v1561
  %v1653 = vsub.f32 %v1269, %v1563
  %v1654 = vsub.f32 %v1270, %v1565
  %v1655 = vsub.f32 %v1271, %v1567
  %v1656 = vsub.f32 %v1272, %v1569
  %v1657 = vsub.f32 %v1273, %v1571
  %v1658 = vsub.f32 %v1274, %v1573
  %v1659 = vsub.f32 %v1275, %v1575
  %v1660 = vsub.f32 %v1276, %v1577
  %v1661 = vsub.f32 %v1277, %v1579
  %v1662 = vsub.f32 %v1278, %v1581
  %v1663 = vsub.f32 %v1279, %v1583
  %v1664 = vsub.f32 %v1280, %v1585
  %v1665 = vsub.f32 %v1281, %v1587
  %v1666 = vsub.f32 %v1282, %v1589
  %v1667 = vsub.f32 %v1283, %v1591
  %v1668 = vsub.f32 %v1284, %v1593
  %v1669 = vsub.f32 %v1285, %v1595
  %v1670 = vsub.f32 %v1286, %v1597
  %v1671 = vsub.f32 %v1287, %v1599
  %v1672 = vsub.f32 %v1288, %v1601
  %v1673 = vsub.f32 %v1289, %v1603
  %v1674 = vsub.f32 %v1290, %v1605
  %v1675 = vsub.f32 %v1291, %v1607
  %v1676 = vsub.f32 %v1292, %v1609
  %v1677 = vsub.f32 %v1293, %v1611
  %v1678 = vsub.f32 %v1294, %v1613
  %v1679 = vsub.f32 %v1295, %v1615
  %v1680 = vmul.f32 %v1648, 0.54627424
  %v1681 = vmul.f32 %v1649, 0.54627424
  %v1682 = vmul.f32 %v1650, 0.54627424
  %v1683 = vmul.f32 %v1651, 0.54627424
  %v1684 = vmul.f32 %v1652, 0.54627424
  %v1685 = vmul.f32 %v1653, 0.54627424
  %v1686 = vmul.f32 %v1654, 0.54627424
  %v1687 = vmul.f32 %v1655, 0.54627424
  %v1688 = vmul.f32 %v1656, 0.54627424
  %v1689 = vmul.f32 %v1657, 0.54627424
  %v1690 = vmul.f32 %v1658, 0.54627424
  %v1691 = vmul.f32 %v1659, 0.54627424
  %v1692 = vmul.f32 %v1660, 0.54627424
  %v1693 = vmul.f32 %v1661, 0.54627424
  %v1694 = vmul.f32 %v1662, 0.54627424
  %v1695 = vmul.f32 %v1663, 0.54627424
  %v1696 = vmul.f32 %v1664, 0.54627424
  %v1697 = vmul.f32 %v1665, 0.54627424
  %v1698 = vmul.f32 %v1666, 0.54627424
  %v1699 = vmul.f32 %v1667, 0.54627424
  %v1700 = vmul.f32 %v1668, 0.54627424
  %v1701 = vmul.f32 %v1669, 0.54627424
  %v1702 = vmul.f32 %v1670, 0.54627424
  %v1703 = vmul.f32 %v1671, 0.54627424
  %v1704 = vmul.f32 %v1672, 0.54627424
  %v1705 = vmul.f32 %v1673, 0.54627424
  %v1706 = vmul.f32 %v1674, 0.54627424
  %v1707 = vmul.f32 %v1675, 0.54627424
  %v1708 = vmul.f32 %v1676, 0.54627424
  %v1709 = vmul.f32 %v1677, 0.54627424
  %v1710 = vmul.f32 %v1678, 0.54627424
  %v1711 = vmul.f32 %v1679, 0.54627424
  %v1712 = vmul.f32 %v944, 0.5900436
  %v1713 = vmul.f32 %v945, 0.5900436
  %v1714 = vmul.f32 %v946, 0.5900436
  %v1715 = vmul.f32 %v947, 0.5900436
  %v1716 = vmul.f32 %v948, 0.5900436
  %v1717 = vmul.f32 %v949, 0.5900436
  %v1718 = vmul.f32 %v950, 0.5900436
  %v1719 = vmul.f32 %v951, 0.5900436
  %v1720 = vmul.f32 %v952, 0.5900436
  %v1721 = vmul.f32 %v953, 0.5900436
  %v1722 = vmul.f32 %v954, 0.5900436
  %v1723 = vmul.f32 %v955, 0.5900436
  %v1724 = vmul.f32 %v956, 0.5900436
  %v1725 = vmul.f32 %v957, 0.5900436
  %v1726 = vmul.f32 %v958, 0.5900436
  %v1727 = vmul.f32 %v959, 0.5900436
  %v1728 = vmul.f32 %v960, 0.5900436
  %v1729 = vmul.f32 %v961, 0.5900436
  %v1730 = vmul.f32 %v962, 0.5900436
  %v1731 = vmul.f32 %v963, 0.5900436
  %v1732 = vmul.f32 %v964, 0.5900436
  %v1733 = vmul.f32 %v965, 0.5900436
  %v1734 = vmul.f32 %v966, 0.5900436
  %v1735 = vmul.f32 %v967, 0.5900436
  %v1736 = vmul.f32 %v968, 0.5900436
  %v1737 = vmul.f32 %v969, 0.5900436
  %v1738 = vmul.f32 %v970, 0.5900436
  %v1739 = vmul.f32 %v971, 0.5900436
  %v1740 = vmul.f32 %v972, 0.5900436
  %v1741 = vmul.f32 %v973, 0.5900436
  %v1742 = vmul.f32 %v974, 0.5900436
  %v1743 = vmul.f32 %v975, 0.5900436
  %v1744 = vmul.f32 %v1264, -3.0
  %v1745 = vmul.f32 %v1265, -3.0
  %v1746 = vmul.f32 %v1266, -3.0
  %v1747 = vmul.f32 %v1267, -3.0
  %v1748 = vmul.f32 %v1268, -3.0
  %v1749 = vmul.f32 %v1269, -3.0
  %v1750 = vmul.f32 %v1270, -3.0
  %v1751 = vmul.f32 %v1271, -3.0
  %v1752 = vmul.f32 %v1272, -3.0
  %v1753 = vmul.f32 %v1273, -3.0
  %v1754 = vmul.f32 %v1274, -3.0
  %v1755 = vmul.f32 %v1275, -3.0
  %v1756 = vmul.f32 %v1276, -3.0
  %v1757 = vmul.f32 %v1277, -3.0
  %v1758 = vmul.f32 %v1278, -3.0
  %v1759 = vmul.f32 %v1279, -3.0
  %v1760 = vmul.f32 %v1280, -3.0
  %v1761 = vmul.f32 %v1281, -3.0
  %v1762 = vmul.f32 %v1282, -3.0
  %v1763 = vmul.f32 %v1283, -3.0
  %v1764 = vmul.f32 %v1284, -3.0
  %v1765 = vmul.f32 %v1285, -3.0
  %v1766 = vmul.f32 %v1286, -3.0
  %v1767 = vmul.f32 %v1287, -3.0
  %v1768 = vmul.f32 %v1288, -3.0
  %v1769 = vmul.f32 %v1289, -3.0
  %v1770 = vmul.f32 %v1290, -3.0
  %v1771 = vmul.f32 %v1291, -3.0
  %v1772 = vmul.f32 %v1292, -3.0
  %v1773 = vmul.f32 %v1293, -3.0
  %v1774 = vmul.f32 %v1294, -3.0
  %v1775 = vmul.f32 %v1295, -3.0
  %v1776 = vadd.f32 %v1744, %v1553
  %v1777 = vadd.f32 %v1745, %v1555
  %v1778 = vadd.f32 %v1746, %v1557
  %v1779 = vadd.f32 %v1747, %v1559
  %v1780 = vadd.f32 %v1748, %v1561
  %v1781 = vadd.f32 %v1749, %v1563
  %v1782 = vadd.f32 %v1750, %v1565
  %v1783 = vadd.f32 %v1751, %v1567
  %v1784 = vadd.f32 %v1752, %v1569
  %v1785 = vadd.f32 %v1753, %v1571
  %v1786 = vadd.f32 %v1754, %v1573
  %v1787 = vadd.f32 %v1755, %v1575
  %v1788 = vadd.f32 %v1756, %v1577
  %v1789 = vadd.f32 %v1757, %v1579
  %v1790 = vadd.f32 %v1758, %v1581
  %v1791 = vadd.f32 %v1759, %v1583
  %v1792 = vadd.f32 %v1760, %v1585
  %v1793 = vadd.f32 %v1761, %v1587
  %v1794 = vadd.f32 %v1762, %v1589
  %v1795 = vadd.f32 %v1763, %v1591
  %v1796 = vadd.f32 %v1764, %v1593
  %v1797 = vadd.f32 %v1765, %v1595
  %v1798 = vadd.f32 %v1766, %v1597
  %v1799 = vadd.f32 %v1767, %v1599
  %v1800 = vadd.f32 %v1768, %v1601
  %v1801 = vadd.f32 %v1769, %v1603
  %v1802 = vadd.f32 %v1770, %v1605
  %v1803 = vadd.f32 %v1771, %v1607
  %v1804 = vadd.f32 %v1772, %v1609
  %v1805 = vadd.f32 %v1773, %v1611
  %v1806 = vadd.f32 %v1774, %v1613
  %v1807 = vadd.f32 %v1775, %v1615
  %1840 = vrot.lane.b32.xlu0 %v1776, 1
  %v1841 = vpop.permute.xlu0 %1840
  %1842 = vrot.lane.b32.xlu0 %v1777, 1
  %v1843 = vpop.permute.xlu0 %1842
  %1844 = vrot.lane.b32.xlu0 %v1778, 1
  %v1845 = vpop.permute.xlu0 %1844
  %1846 = vrot.lane.b32.xlu0 %v1779, 1
  %v1847 = vpop.permute.xlu0 %1846
  %1848 = vrot.lane.b32.xlu0 %v1780, 1
  %v1849 = vpop.permute.xlu0 %1848
  %1850 = vrot.lane.b32.xlu0 %v1781, 1
  %v1851 = vpop.permute.xlu0 %1850
  %1852 = vrot.lane.b32.xlu0 %v1782, 1
  %v1853 = vpop.permute.xlu0 %1852
  %1854 = vrot.lane.b32.xlu0 %v1783, 1
  %v1855 = vpop.permute.xlu0 %1854
  %1856 = vrot.lane.b32.xlu0 %v1784, 1
  %v1857 = vpop.permute.xlu0 %1856
  %1858 = vrot.lane.b32.xlu0 %v1785, 1
  %v1859 = vpop.permute.xlu0 %1858
  %1860 = vrot.lane.b32.xlu0 %v1786, 1
  %v1861 = vpop.permute.xlu0 %1860
  %1862 = vrot.lane.b32.xlu0 %v1787, 1
  %v1863 = vpop.permute.xlu0 %1862
  %1864 = vrot.lane.b32.xlu0 %v1788, 1
  %v1865 = vpop.permute.xlu0 %1864
  %1866 = vrot.lane.b32.xlu0 %v1789, 1
  %v1867 = vpop.permute.xlu0 %1866
  %1868 = vrot.lane.b32.xlu0 %v1790, 1
  %v1869 = vpop.permute.xlu0 %1868
  %1870 = vrot.lane.b32.xlu0 %v1791, 1
  %v1871 = vpop.permute.xlu0 %1870
  %1872 = vrot.lane.b32.xlu0 %v1792, 1
  %v1873 = vpop.permute.xlu0 %1872
  %1874 = vrot.lane.b32.xlu0 %v1793, 1
  %v1875 = vpop.permute.xlu0 %1874
  %1876 = vrot.lane.b32.xlu0 %v1794, 1
  %v1877 = vpop.permute.xlu0 %1876
  %1878 = vrot.lane.b32.xlu0 %v1795, 1
  %v1879 = vpop.permute.xlu0 %1878
  %1880 = vrot.lane.b32.xlu0 %v1796, 1
  %v1881 = vpop.permute.xlu0 %1880
  %1882 = vrot.lane.b32.xlu0 %v1797, 1
  %v1883 = vpop.permute.xlu0 %1882
  %1884 = vrot.lane.b32.xlu0 %v1798, 1
  %v1885 = vpop.permute.xlu0 %1884
  %1886 = vrot.lane.b32.xlu0 %v1799, 1
  %v1887 = vpop.permute.xlu0 %1886
  %1888 = vrot.lane.b32.xlu0 %v1800, 1
  %v1889 = vpop.permute.xlu0 %1888
  %1890 = vrot.lane.b32.xlu0 %v1801, 1
  %v1891 = vpop.permute.xlu0 %1890
  %1892 = vrot.lane.b32.xlu0 %v1802, 1
  %v1893 = vpop.permute.xlu0 %1892
  %1894 = vrot.lane.b32.xlu0 %v1803, 1
  %v1895 = vpop.permute.xlu0 %1894
  %1896 = vrot.lane.b32.xlu0 %v1804, 1
  %v1897 = vpop.permute.xlu0 %1896
  %1898 = vrot.lane.b32.xlu0 %v1805, 1
  %v1899 = vpop.permute.xlu0 %1898
  %1900 = vrot.lane.b32.xlu0 %v1806, 1
  %v1901 = vpop.permute.xlu0 %1900
  %1902 = vrot.lane.b32.xlu0 %v1807, 1
  %v1903 = vpop.permute.xlu0 %1902
  %v1936 = vmul.f32 %v1712, %v1841
  %v1937 = vmul.f32 %v1713, %v1843
  %v1938 = vmul.f32 %v1714, %v1845
  %v1939 = vmul.f32 %v1715, %v1847
  %v1940 = vmul.f32 %v1716, %v1849
  %v1941 = vmul.f32 %v1717, %v1851
  %v1942 = vmul.f32 %v1718, %v1853
  %v1943 = vmul.f32 %v1719, %v1855
  %v1944 = vmul.f32 %v1720, %v1857
  %v1945 = vmul.f32 %v1721, %v1859
  %v1946 = vmul.f32 %v1722, %v1861
  %v1947 = vmul.f32 %v1723, %v1863
  %v1948 = vmul.f32 %v1724, %v1865
  %v1949 = vmul.f32 %v1725, %v1867
  %v1950 = vmul.f32 %v1726, %v1869
  %v1951 = vmul.f32 %v1727, %v1871
  %v1952 = vmul.f32 %v1728, %v1873
  %v1953 = vmul.f32 %v1729, %v1875
  %v1954 = vmul.f32 %v1730, %v1877
  %v1955 = vmul.f32 %v1731, %v1879
  %v1956 = vmul.f32 %v1732, %v1881
  %v1957 = vmul.f32 %v1733, %v1883
  %v1958 = vmul.f32 %v1734, %v1885
  %v1959 = vmul.f32 %v1735, %v1887
  %v1960 = vmul.f32 %v1736, %v1889
  %v1961 = vmul.f32 %v1737, %v1891
  %v1962 = vmul.f32 %v1738, %v1893
  %v1963 = vmul.f32 %v1739, %v1895
  %v1964 = vmul.f32 %v1740, %v1897
  %v1965 = vmul.f32 %v1741, %v1899
  %v1966 = vmul.f32 %v1742, %v1901
  %v1967 = vmul.f32 %v1743, %v1903
  %v1968 = vmul.f32 %v1104, 2.8906114
  %v1969 = vmul.f32 %v1105, 2.8906114
  %v1970 = vmul.f32 %v1106, 2.8906114
  %v1971 = vmul.f32 %v1107, 2.8906114
  %v1972 = vmul.f32 %v1108, 2.8906114
  %v1973 = vmul.f32 %v1109, 2.8906114
  %v1974 = vmul.f32 %v1110, 2.8906114
  %v1975 = vmul.f32 %v1111, 2.8906114
  %v1976 = vmul.f32 %v1112, 2.8906114
  %v1977 = vmul.f32 %v1113, 2.8906114
  %v1978 = vmul.f32 %v1114, 2.8906114
  %v1979 = vmul.f32 %v1115, 2.8906114
  %v1980 = vmul.f32 %v1116, 2.8906114
  %v1981 = vmul.f32 %v1117, 2.8906114
  %v1982 = vmul.f32 %v1118, 2.8906114
  %v1983 = vmul.f32 %v1119, 2.8906114
  %v1984 = vmul.f32 %v1120, 2.8906114
  %v1985 = vmul.f32 %v1121, 2.8906114
  %v1986 = vmul.f32 %v1122, 2.8906114
  %v1987 = vmul.f32 %v1123, 2.8906114
  %v1988 = vmul.f32 %v1124, 2.8906114
  %v1989 = vmul.f32 %v1125, 2.8906114
  %v1990 = vmul.f32 %v1126, 2.8906114
  %v1991 = vmul.f32 %v1127, 2.8906114
  %v1992 = vmul.f32 %v1128, 2.8906114
  %v1993 = vmul.f32 %v1129, 2.8906114
  %v1994 = vmul.f32 %v1130, 2.8906114
  %v1995 = vmul.f32 %v1131, 2.8906114
  %v1996 = vmul.f32 %v1132, 2.8906114
  %v1997 = vmul.f32 %v1133, 2.8906114
  %v1998 = vmul.f32 %v1134, 2.8906114
  %v1999 = vmul.f32 %v1135, 2.8906114
  %v2000 = vmul.f32 %v1968, %v1137
  %v2001 = vmul.f32 %v1969, %v1139
  %v2002 = vmul.f32 %v1970, %v1141
  %v2003 = vmul.f32 %v1971, %v1143
  %v2004 = vmul.f32 %v1972, %v1145
  %v2005 = vmul.f32 %v1973, %v1147
  %v2006 = vmul.f32 %v1974, %v1149
  %v2007 = vmul.f32 %v1975, %v1151
  %v2008 = vmul.f32 %v1976, %v1153
  %v2009 = vmul.f32 %v1977, %v1155
  %v2010 = vmul.f32 %v1978, %v1157
  %v2011 = vmul.f32 %v1979, %v1159
  %v2012 = vmul.f32 %v1980, %v1161
  %v2013 = vmul.f32 %v1981, %v1163
  %v2014 = vmul.f32 %v1982, %v1165
  %v2015 = vmul.f32 %v1983, %v1167
  %v2016 = vmul.f32 %v1984, %v1169
  %v2017 = vmul.f32 %v1985, %v1171
  %v2018 = vmul.f32 %v1986, %v1173
  %v2019 = vmul.f32 %v1987, %v1175
  %v2020 = vmul.f32 %v1988, %v1177
  %v2021 = vmul.f32 %v1989, %v1179
  %v2022 = vmul.f32 %v1990, %v1181
  %v2023 = vmul.f32 %v1991, %v1183
  %v2024 = vmul.f32 %v1992, %v1185
  %v2025 = vmul.f32 %v1993, %v1187
  %v2026 = vmul.f32 %v1994, %v1189
  %v2027 = vmul.f32 %v1995, %v1191
  %v2028 = vmul.f32 %v1996, %v1193
  %v2029 = vmul.f32 %v1997, %v1195
  %v2030 = vmul.f32 %v1998, %v1197
  %v2031 = vmul.f32 %v1999, %v1199
  %v2032 = vmul.f32 %v944, 0.4570458
  %v2033 = vmul.f32 %v945, 0.4570458
  %v2034 = vmul.f32 %v946, 0.4570458
  %v2035 = vmul.f32 %v947, 0.4570458
  %v2036 = vmul.f32 %v948, 0.4570458
  %v2037 = vmul.f32 %v949, 0.4570458
  %v2038 = vmul.f32 %v950, 0.4570458
  %v2039 = vmul.f32 %v951, 0.4570458
  %v2040 = vmul.f32 %v952, 0.4570458
  %v2041 = vmul.f32 %v953, 0.4570458
  %v2042 = vmul.f32 %v954, 0.4570458
  %v2043 = vmul.f32 %v955, 0.4570458
  %v2044 = vmul.f32 %v956, 0.4570458
  %v2045 = vmul.f32 %v957, 0.4570458
  %v2046 = vmul.f32 %v958, 0.4570458
  %v2047 = vmul.f32 %v959, 0.4570458
  %v2048 = vmul.f32 %v960, 0.4570458
  %v2049 = vmul.f32 %v961, 0.4570458
  %v2050 = vmul.f32 %v962, 0.4570458
  %v2051 = vmul.f32 %v963, 0.4570458
  %v2052 = vmul.f32 %v964, 0.4570458
  %v2053 = vmul.f32 %v965, 0.4570458
  %v2054 = vmul.f32 %v966, 0.4570458
  %v2055 = vmul.f32 %v967, 0.4570458
  %v2056 = vmul.f32 %v968, 0.4570458
  %v2057 = vmul.f32 %v969, 0.4570458
  %v2058 = vmul.f32 %v970, 0.4570458
  %v2059 = vmul.f32 %v971, 0.4570458
  %v2060 = vmul.f32 %v972, 0.4570458
  %v2061 = vmul.f32 %v973, 0.4570458
  %v2062 = vmul.f32 %v974, 0.4570458
  %v2063 = vmul.f32 %v975, 0.4570458
  %v2064 = vmul.f32 %v1264, 5.0
  %v2065 = vmul.f32 %v1265, 5.0
  %v2066 = vmul.f32 %v1266, 5.0
  %v2067 = vmul.f32 %v1267, 5.0
  %v2068 = vmul.f32 %v1268, 5.0
  %v2069 = vmul.f32 %v1269, 5.0
  %v2070 = vmul.f32 %v1270, 5.0
  %v2071 = vmul.f32 %v1271, 5.0
  %v2072 = vmul.f32 %v1272, 5.0
  %v2073 = vmul.f32 %v1273, 5.0
  %v2074 = vmul.f32 %v1274, 5.0
  %v2075 = vmul.f32 %v1275, 5.0
  %v2076 = vmul.f32 %v1276, 5.0
  %v2077 = vmul.f32 %v1277, 5.0
  %v2078 = vmul.f32 %v1278, 5.0
  %v2079 = vmul.f32 %v1279, 5.0
  %v2080 = vmul.f32 %v1280, 5.0
  %v2081 = vmul.f32 %v1281, 5.0
  %v2082 = vmul.f32 %v1282, 5.0
  %v2083 = vmul.f32 %v1283, 5.0
  %v2084 = vmul.f32 %v1284, 5.0
  %v2085 = vmul.f32 %v1285, 5.0
  %v2086 = vmul.f32 %v1286, 5.0
  %v2087 = vmul.f32 %v1287, 5.0
  %v2088 = vmul.f32 %v1288, 5.0
  %v2089 = vmul.f32 %v1289, 5.0
  %v2090 = vmul.f32 %v1290, 5.0
  %v2091 = vmul.f32 %v1291, 5.0
  %v2092 = vmul.f32 %v1292, 5.0
  %v2093 = vmul.f32 %v1293, 5.0
  %v2094 = vmul.f32 %v1294, 5.0
  %v2095 = vmul.f32 %v1295, 5.0
  %v2096 = vsub.f32 1.0, %v2064
  %v2097 = vsub.f32 1.0, %v2065
  %v2098 = vsub.f32 1.0, %v2066
  %v2099 = vsub.f32 1.0, %v2067
  %v2100 = vsub.f32 1.0, %v2068
  %v2101 = vsub.f32 1.0, %v2069
  %v2102 = vsub.f32 1.0, %v2070
  %v2103 = vsub.f32 1.0, %v2071
  %v2104 = vsub.f32 1.0, %v2072
  %v2105 = vsub.f32 1.0, %v2073
  %v2106 = vsub.f32 1.0, %v2074
  %v2107 = vsub.f32 1.0, %v2075
  %v2108 = vsub.f32 1.0, %v2076
  %v2109 = vsub.f32 1.0, %v2077
  %v2110 = vsub.f32 1.0, %v2078
  %v2111 = vsub.f32 1.0, %v2079
  %v2112 = vsub.f32 1.0, %v2080
  %v2113 = vsub.f32 1.0, %v2081
  %v2114 = vsub.f32 1.0, %v2082
  %v2115 = vsub.f32 1.0, %v2083
  %v2116 = vsub.f32 1.0, %v2084
  %v2117 = vsub.f32 1.0, %v2085
  %v2118 = vsub.f32 1.0, %v2086
  %v2119 = vsub.f32 1.0, %v2087
  %v2120 = vsub.f32 1.0, %v2088
  %v2121 = vsub.f32 1.0, %v2089
  %v2122 = vsub.f32 1.0, %v2090
  %v2123 = vsub.f32 1.0, %v2091
  %v2124 = vsub.f32 1.0, %v2092
  %v2125 = vsub.f32 1.0, %v2093
  %v2126 = vsub.f32 1.0, %v2094
  %v2127 = vsub.f32 1.0, %v2095
  %2160 = vrot.lane.b32.xlu0 %v2096, 127
  %v2161 = vpop.permute.xlu0 %2160
  %2162 = vrot.lane.b32.xlu0 %v2097, 127
  %v2163 = vpop.permute.xlu0 %2162
  %2164 = vrot.lane.b32.xlu0 %v2098, 127
  %v2165 = vpop.permute.xlu0 %2164
  %2166 = vrot.lane.b32.xlu0 %v2099, 127
  %v2167 = vpop.permute.xlu0 %2166
  %2168 = vrot.lane.b32.xlu0 %v2100, 127
  %v2169 = vpop.permute.xlu0 %2168
  %2170 = vrot.lane.b32.xlu0 %v2101, 127
  %v2171 = vpop.permute.xlu0 %2170
  %2172 = vrot.lane.b32.xlu0 %v2102, 127
  %v2173 = vpop.permute.xlu0 %2172
  %2174 = vrot.lane.b32.xlu0 %v2103, 127
  %v2175 = vpop.permute.xlu0 %2174
  %2176 = vrot.lane.b32.xlu0 %v2104, 127
  %v2177 = vpop.permute.xlu0 %2176
  %2178 = vrot.lane.b32.xlu0 %v2105, 127
  %v2179 = vpop.permute.xlu0 %2178
  %2180 = vrot.lane.b32.xlu0 %v2106, 127
  %v2181 = vpop.permute.xlu0 %2180
  %2182 = vrot.lane.b32.xlu0 %v2107, 127
  %v2183 = vpop.permute.xlu0 %2182
  %2184 = vrot.lane.b32.xlu0 %v2108, 127
  %v2185 = vpop.permute.xlu0 %2184
  %2186 = vrot.lane.b32.xlu0 %v2109, 127
  %v2187 = vpop.permute.xlu0 %2186
  %2188 = vrot.lane.b32.xlu0 %v2110, 127
  %v2189 = vpop.permute.xlu0 %2188
  %2190 = vrot.lane.b32.xlu0 %v2111, 127
  %v2191 = vpop.permute.xlu0 %2190
  %2192 = vrot.lane.b32.xlu0 %v2112, 127
  %v2193 = vpop.permute.xlu0 %2192
  %2194 = vrot.lane.b32.xlu0 %v2113, 127
  %v2195 = vpop.permute.xlu0 %2194
  %2196 = vrot.lane.b32.xlu0 %v2114, 127
  %v2197 = vpop.permute.xlu0 %2196
  %2198 = vrot.lane.b32.xlu0 %v2115, 127
  %v2199 = vpop.permute.xlu0 %2198
  %2200 = vrot.lane.b32.xlu0 %v2116, 127
  %v2201 = vpop.permute.xlu0 %2200
  %2202 = vrot.lane.b32.xlu0 %v2117, 127
  %v2203 = vpop.permute.xlu0 %2202
  %2204 = vrot.lane.b32.xlu0 %v2118, 127
  %v2205 = vpop.permute.xlu0 %2204
  %2206 = vrot.lane.b32.xlu0 %v2119, 127
  %v2207 = vpop.permute.xlu0 %2206
  %2208 = vrot.lane.b32.xlu0 %v2120, 127
  %v2209 = vpop.permute.xlu0 %2208
  %2210 = vrot.lane.b32.xlu0 %v2121, 127
  %v2211 = vpop.permute.xlu0 %2210
  %2212 = vrot.lane.b32.xlu0 %v2122, 127
  %v2213 = vpop.permute.xlu0 %2212
  %2214 = vrot.lane.b32.xlu0 %v2123, 127
  %v2215 = vpop.permute.xlu0 %2214
  %2216 = vrot.lane.b32.xlu0 %v2124, 127
  %v2217 = vpop.permute.xlu0 %2216
  %2218 = vrot.lane.b32.xlu0 %v2125, 127
  %v2219 = vpop.permute.xlu0 %2218
  %2220 = vrot.lane.b32.xlu0 %v2126, 127
  %v2221 = vpop.permute.xlu0 %2220
  %2222 = vrot.lane.b32.xlu0 %v2127, 127
  %v2223 = vpop.permute.xlu0 %2222
  %v2256 = vmul.f32 %v2032, %v2161
  %v2257 = vmul.f32 %v2033, %v2163
  %v2258 = vmul.f32 %v2034, %v2165
  %v2259 = vmul.f32 %v2035, %v2167
  %v2260 = vmul.f32 %v2036, %v2169
  %v2261 = vmul.f32 %v2037, %v2171
  %v2262 = vmul.f32 %v2038, %v2173
  %v2263 = vmul.f32 %v2039, %v2175
  %v2264 = vmul.f32 %v2040, %v2177
  %v2265 = vmul.f32 %v2041, %v2179
  %v2266 = vmul.f32 %v2042, %v2181
  %v2267 = vmul.f32 %v2043, %v2183
  %v2268 = vmul.f32 %v2044, %v2185
  %v2269 = vmul.f32 %v2045, %v2187
  %v2270 = vmul.f32 %v2046, %v2189
  %v2271 = vmul.f32 %v2047, %v2191
  %v2272 = vmul.f32 %v2048, %v2193
  %v2273 = vmul.f32 %v2049, %v2195
  %v2274 = vmul.f32 %v2050, %v2197
  %v2275 = vmul.f32 %v2051, %v2199
  %v2276 = vmul.f32 %v2052, %v2201
  %v2277 = vmul.f32 %v2053, %v2203
  %v2278 = vmul.f32 %v2054, %v2205
  %v2279 = vmul.f32 %v2055, %v2207
  %v2280 = vmul.f32 %v2056, %v2209
  %v2281 = vmul.f32 %v2057, %v2211
  %v2282 = vmul.f32 %v2058, %v2213
  %v2283 = vmul.f32 %v2059, %v2215
  %v2284 = vmul.f32 %v2060, %v2217
  %v2285 = vmul.f32 %v2061, %v2219
  %v2286 = vmul.f32 %v2062, %v2221
  %v2287 = vmul.f32 %v2063, %v2223
  %v2288 = vmul.f32 %v944, 0.37317634
  %v2289 = vmul.f32 %v945, 0.37317634
  %v2290 = vmul.f32 %v946, 0.37317634
  %v2291 = vmul.f32 %v947, 0.37317634
  %v2292 = vmul.f32 %v948, 0.37317634
  %v2293 = vmul.f32 %v949, 0.37317634
  %v2294 = vmul.f32 %v950, 0.37317634
  %v2295 = vmul.f32 %v951, 0.37317634
  %v2296 = vmul.f32 %v952, 0.37317634
  %v2297 = vmul.f32 %v953, 0.37317634
  %v2298 = vmul.f32 %v954, 0.37317634
  %v2299 = vmul.f32 %v955, 0.37317634
  %v2300 = vmul.f32 %v956, 0.37317634
  %v2301 = vmul.f32 %v957, 0.37317634
  %v2302 = vmul.f32 %v958, 0.37317634
  %v2303 = vmul.f32 %v959, 0.37317634
  %v2304 = vmul.f32 %v960, 0.37317634
  %v2305 = vmul.f32 %v961, 0.37317634
  %v2306 = vmul.f32 %v962, 0.37317634
  %v2307 = vmul.f32 %v963, 0.37317634
  %v2308 = vmul.f32 %v964, 0.37317634
  %v2309 = vmul.f32 %v965, 0.37317634
  %v2310 = vmul.f32 %v966, 0.37317634
  %v2311 = vmul.f32 %v967, 0.37317634
  %v2312 = vmul.f32 %v968, 0.37317634
  %v2313 = vmul.f32 %v969, 0.37317634
  %v2314 = vmul.f32 %v970, 0.37317634
  %v2315 = vmul.f32 %v971, 0.37317634
  %v2316 = vmul.f32 %v972, 0.37317634
  %v2317 = vmul.f32 %v973, 0.37317634
  %v2318 = vmul.f32 %v974, 0.37317634
  %v2319 = vmul.f32 %v975, 0.37317634
  %v2320 = vsub.f32 %v2064, 3.0
  %v2321 = vsub.f32 %v2065, 3.0
  %v2322 = vsub.f32 %v2066, 3.0
  %v2323 = vsub.f32 %v2067, 3.0
  %v2324 = vsub.f32 %v2068, 3.0
  %v2325 = vsub.f32 %v2069, 3.0
  %v2326 = vsub.f32 %v2070, 3.0
  %v2327 = vsub.f32 %v2071, 3.0
  %v2328 = vsub.f32 %v2072, 3.0
  %v2329 = vsub.f32 %v2073, 3.0
  %v2330 = vsub.f32 %v2074, 3.0
  %v2331 = vsub.f32 %v2075, 3.0
  %v2332 = vsub.f32 %v2076, 3.0
  %v2333 = vsub.f32 %v2077, 3.0
  %v2334 = vsub.f32 %v2078, 3.0
  %v2335 = vsub.f32 %v2079, 3.0
  %v2336 = vsub.f32 %v2080, 3.0
  %v2337 = vsub.f32 %v2081, 3.0
  %v2338 = vsub.f32 %v2082, 3.0
  %v2339 = vsub.f32 %v2083, 3.0
  %v2340 = vsub.f32 %v2084, 3.0
  %v2341 = vsub.f32 %v2085, 3.0
  %v2342 = vsub.f32 %v2086, 3.0
  %v2343 = vsub.f32 %v2087, 3.0
  %v2344 = vsub.f32 %v2088, 3.0
  %v2345 = vsub.f32 %v2089, 3.0
  %v2346 = vsub.f32 %v2090, 3.0
  %v2347 = vsub.f32 %v2091, 3.0
  %v2348 = vsub.f32 %v2092, 3.0
  %v2349 = vsub.f32 %v2093, 3.0
  %v2350 = vsub.f32 %v2094, 3.0
  %v2351 = vsub.f32 %v2095, 3.0
  %v2352 = vmul.f32 %v2288, %v2320
  %v2353 = vmul.f32 %v2289, %v2321
  %v2354 = vmul.f32 %v2290, %v2322
  %v2355 = vmul.f32 %v2291, %v2323
  %v2356 = vmul.f32 %v2292, %v2324
  %v2357 = vmul.f32 %v2293, %v2325
  %v2358 = vmul.f32 %v2294, %v2326
  %v2359 = vmul.f32 %v2295, %v2327
  %v2360 = vmul.f32 %v2296, %v2328
  %v2361 = vmul.f32 %v2297, %v2329
  %v2362 = vmul.f32 %v2298, %v2330
  %v2363 = vmul.f32 %v2299, %v2331
  %v2364 = vmul.f32 %v2300, %v2332
  %v2365 = vmul.f32 %v2301, %v2333
  %v2366 = vmul.f32 %v2302, %v2334
  %v2367 = vmul.f32 %v2303, %v2335
  %v2368 = vmul.f32 %v2304, %v2336
  %v2369 = vmul.f32 %v2305, %v2337
  %v2370 = vmul.f32 %v2306, %v2338
  %v2371 = vmul.f32 %v2307, %v2339
  %v2372 = vmul.f32 %v2308, %v2340
  %v2373 = vmul.f32 %v2309, %v2341
  %v2374 = vmul.f32 %v2310, %v2342
  %v2375 = vmul.f32 %v2311, %v2343
  %v2376 = vmul.f32 %v2312, %v2344
  %v2377 = vmul.f32 %v2313, %v2345
  %v2378 = vmul.f32 %v2314, %v2346
  %v2379 = vmul.f32 %v2315, %v2347
  %v2380 = vmul.f32 %v2316, %v2348
  %v2381 = vmul.f32 %v2317, %v2349
  %v2382 = vmul.f32 %v2318, %v2350
  %v2383 = vmul.f32 %v2319, %v2351
  %2384 = vrot.lane.b32.xlu0 %v2096, 126
  %v2385 = vpop.permute.xlu0 %2384
  %2386 = vrot.lane.b32.xlu0 %v2097, 126
  %v2387 = vpop.permute.xlu0 %2386
  %2388 = vrot.lane.b32.xlu0 %v2098, 126
  %v2389 = vpop.permute.xlu0 %2388
  %2390 = vrot.lane.b32.xlu0 %v2099, 126
  %v2391 = vpop.permute.xlu0 %2390
  %2392 = vrot.lane.b32.xlu0 %v2100, 126
  %v2393 = vpop.permute.xlu0 %2392
  %2394 = vrot.lane.b32.xlu0 %v2101, 126
  %v2395 = vpop.permute.xlu0 %2394
  %2396 = vrot.lane.b32.xlu0 %v2102, 126
  %v2397 = vpop.permute.xlu0 %2396
  %2398 = vrot.lane.b32.xlu0 %v2103, 126
  %v2399 = vpop.permute.xlu0 %2398
  %2400 = vrot.lane.b32.xlu0 %v2104, 126
  %v2401 = vpop.permute.xlu0 %2400
  %2402 = vrot.lane.b32.xlu0 %v2105, 126
  %v2403 = vpop.permute.xlu0 %2402
  %2404 = vrot.lane.b32.xlu0 %v2106, 126
  %v2405 = vpop.permute.xlu0 %2404
  %2406 = vrot.lane.b32.xlu0 %v2107, 126
  %v2407 = vpop.permute.xlu0 %2406
  %2408 = vrot.lane.b32.xlu0 %v2108, 126
  %v2409 = vpop.permute.xlu0 %2408
  %2410 = vrot.lane.b32.xlu0 %v2109, 126
  %v2411 = vpop.permute.xlu0 %2410
  %2412 = vrot.lane.b32.xlu0 %v2110, 126
  %v2413 = vpop.permute.xlu0 %2412
  %2414 = vrot.lane.b32.xlu0 %v2111, 126
  %v2415 = vpop.permute.xlu0 %2414
  %2416 = vrot.lane.b32.xlu0 %v2112, 126
  %v2417 = vpop.permute.xlu0 %2416
  %2418 = vrot.lane.b32.xlu0 %v2113, 126
  %v2419 = vpop.permute.xlu0 %2418
  %2420 = vrot.lane.b32.xlu0 %v2114, 126
  %v2421 = vpop.permute.xlu0 %2420
  %2422 = vrot.lane.b32.xlu0 %v2115, 126
  %v2423 = vpop.permute.xlu0 %2422
  %2424 = vrot.lane.b32.xlu0 %v2116, 126
  %v2425 = vpop.permute.xlu0 %2424
  %2426 = vrot.lane.b32.xlu0 %v2117, 126
  %v2427 = vpop.permute.xlu0 %2426
  %2428 = vrot.lane.b32.xlu0 %v2118, 126
  %v2429 = vpop.permute.xlu0 %2428
  %2430 = vrot.lane.b32.xlu0 %v2119, 126
  %v2431 = vpop.permute.xlu0 %2430
  %2432 = vrot.lane.b32.xlu0 %v2120, 126
  %v2433 = vpop.permute.xlu0 %2432
  %2434 = vrot.lane.b32.xlu0 %v2121, 126
  %v2435 = vpop.permute.xlu0 %2434
  %2436 = vrot.lane.b32.xlu0 %v2122, 126
  %v2437 = vpop.permute.xlu0 %2436
  %2438 = vrot.lane.b32.xlu0 %v2123, 126
  %v2439 = vpop.permute.xlu0 %2438
  %2440 = vrot.lane.b32.xlu0 %v2124, 126
  %v2441 = vpop.permute.xlu0 %2440
  %2442 = vrot.lane.b32.xlu0 %v2125, 126
  %v2443 = vpop.permute.xlu0 %2442
  %2444 = vrot.lane.b32.xlu0 %v2126, 126
  %v2445 = vpop.permute.xlu0 %2444
  %2446 = vrot.lane.b32.xlu0 %v2127, 126
  %v2447 = vpop.permute.xlu0 %2446
  %v2480 = vmul.f32 %v2032, %v2385
  %v2481 = vmul.f32 %v2033, %v2387
  %v2482 = vmul.f32 %v2034, %v2389
  %v2483 = vmul.f32 %v2035, %v2391
  %v2484 = vmul.f32 %v2036, %v2393
  %v2485 = vmul.f32 %v2037, %v2395
  %v2486 = vmul.f32 %v2038, %v2397
  %v2487 = vmul.f32 %v2039, %v2399
  %v2488 = vmul.f32 %v2040, %v2401
  %v2489 = vmul.f32 %v2041, %v2403
  %v2490 = vmul.f32 %v2042, %v2405
  %v2491 = vmul.f32 %v2043, %v2407
  %v2492 = vmul.f32 %v2044, %v2409
  %v2493 = vmul.f32 %v2045, %v2411
  %v2494 = vmul.f32 %v2046, %v2413
  %v2495 = vmul.f32 %v2047, %v2415
  %v2496 = vmul.f32 %v2048, %v2417
  %v2497 = vmul.f32 %v2049, %v2419
  %v2498 = vmul.f32 %v2050, %v2421
  %v2499 = vmul.f32 %v2051, %v2423
  %v2500 = vmul.f32 %v2052, %v2425
  %v2501 = vmul.f32 %v2053, %v2427
  %v2502 = vmul.f32 %v2054, %v2429
  %v2503 = vmul.f32 %v2055, %v2431
  %v2504 = vmul.f32 %v2056, %v2433
  %v2505 = vmul.f32 %v2057, %v2435
  %v2506 = vmul.f32 %v2058, %v2437
  %v2507 = vmul.f32 %v2059, %v2439
  %v2508 = vmul.f32 %v2060, %v2441
  %v2509 = vmul.f32 %v2061, %v2443
  %v2510 = vmul.f32 %v2062, %v2445
  %v2511 = vmul.f32 %v2063, %v2447
  %v2512 = vmul.f32 %v944, 1.4453057
  %v2513 = vmul.f32 %v945, 1.4453057
  %v2514 = vmul.f32 %v946, 1.4453057
  %v2515 = vmul.f32 %v947, 1.4453057
  %v2516 = vmul.f32 %v948, 1.4453057
  %v2517 = vmul.f32 %v949, 1.4453057
  %v2518 = vmul.f32 %v950, 1.4453057
  %v2519 = vmul.f32 %v951, 1.4453057
  %v2520 = vmul.f32 %v952, 1.4453057
  %v2521 = vmul.f32 %v953, 1.4453057
  %v2522 = vmul.f32 %v954, 1.4453057
  %v2523 = vmul.f32 %v955, 1.4453057
  %v2524 = vmul.f32 %v956, 1.4453057
  %v2525 = vmul.f32 %v957, 1.4453057
  %v2526 = vmul.f32 %v958, 1.4453057
  %v2527 = vmul.f32 %v959, 1.4453057
  %v2528 = vmul.f32 %v960, 1.4453057
  %v2529 = vmul.f32 %v961, 1.4453057
  %v2530 = vmul.f32 %v962, 1.4453057
  %v2531 = vmul.f32 %v963, 1.4453057
  %v2532 = vmul.f32 %v964, 1.4453057
  %v2533 = vmul.f32 %v965, 1.4453057
  %v2534 = vmul.f32 %v966, 1.4453057
  %v2535 = vmul.f32 %v967, 1.4453057
  %v2536 = vmul.f32 %v968, 1.4453057
  %v2537 = vmul.f32 %v969, 1.4453057
  %v2538 = vmul.f32 %v970, 1.4453057
  %v2539 = vmul.f32 %v971, 1.4453057
  %v2540 = vmul.f32 %v972, 1.4453057
  %v2541 = vmul.f32 %v973, 1.4453057
  %v2542 = vmul.f32 %v974, 1.4453057
  %v2543 = vmul.f32 %v975, 1.4453057
  %2576 = vrot.lane.b32.xlu0 %v1648, 2
  %v2577 = vpop.permute.xlu0 %2576
  %2578 = vrot.lane.b32.xlu0 %v1649, 2
  %v2579 = vpop.permute.xlu0 %2578
  %2580 = vrot.lane.b32.xlu0 %v1650, 2
  %v2581 = vpop.permute.xlu0 %2580
  %2582 = vrot.lane.b32.xlu0 %v1651, 2
  %v2583 = vpop.permute.xlu0 %2582
  %2584 = vrot.lane.b32.xlu0 %v1652, 2
  %v2585 = vpop.permute.xlu0 %2584
  %2586 = vrot.lane.b32.xlu0 %v1653, 2
  %v2587 = vpop.permute.xlu0 %2586
  %2588 = vrot.lane.b32.xlu0 %v1654, 2
  %v2589 = vpop.permute.xlu0 %2588
  %2590 = vrot.lane.b32.xlu0 %v1655, 2
  %v2591 = vpop.permute.xlu0 %2590
  %2592 = vrot.lane.b32.xlu0 %v1656, 2
  %v2593 = vpop.permute.xlu0 %2592
  %2594 = vrot.lane.b32.xlu0 %v1657, 2
  %v2595 = vpop.permute.xlu0 %2594
  %2596 = vrot.lane.b32.xlu0 %v1658, 2
  %v2597 = vpop.permute.xlu0 %2596
  %2598 = vrot.lane.b32.xlu0 %v1659, 2
  %v2599 = vpop.permute.xlu0 %2598
  %2600 = vrot.lane.b32.xlu0 %v1660, 2
  %v2601 = vpop.permute.xlu0 %2600
  %2602 = vrot.lane.b32.xlu0 %v1661, 2
  %v2603 = vpop.permute.xlu0 %2602
  %2604 = vrot.lane.b32.xlu0 %v1662, 2
  %v2605 = vpop.permute.xlu0 %2604
  %2606 = vrot.lane.b32.xlu0 %v1663, 2
  %v2607 = vpop.permute.xlu0 %2606
  %2608 = vrot.lane.b32.xlu0 %v1664, 2
  %v2609 = vpop.permute.xlu0 %2608
  %2610 = vrot.lane.b32.xlu0 %v1665, 2
  %v2611 = vpop.permute.xlu0 %2610
  %2612 = vrot.lane.b32.xlu0 %v1666, 2
  %v2613 = vpop.permute.xlu0 %2612
  %2614 = vrot.lane.b32.xlu0 %v1667, 2
  %v2615 = vpop.permute.xlu0 %2614
  %2616 = vrot.lane.b32.xlu0 %v1668, 2
  %v2617 = vpop.permute.xlu0 %2616
  %2618 = vrot.lane.b32.xlu0 %v1669, 2
  %v2619 = vpop.permute.xlu0 %2618
  %2620 = vrot.lane.b32.xlu0 %v1670, 2
  %v2621 = vpop.permute.xlu0 %2620
  %2622 = vrot.lane.b32.xlu0 %v1671, 2
  %v2623 = vpop.permute.xlu0 %2622
  %2624 = vrot.lane.b32.xlu0 %v1672, 2
  %v2625 = vpop.permute.xlu0 %2624
  %2626 = vrot.lane.b32.xlu0 %v1673, 2
  %v2627 = vpop.permute.xlu0 %2626
  %2628 = vrot.lane.b32.xlu0 %v1674, 2
  %v2629 = vpop.permute.xlu0 %2628
  %2630 = vrot.lane.b32.xlu0 %v1675, 2
  %v2631 = vpop.permute.xlu0 %2630
  %2632 = vrot.lane.b32.xlu0 %v1676, 2
  %v2633 = vpop.permute.xlu0 %2632
  %2634 = vrot.lane.b32.xlu0 %v1677, 2
  %v2635 = vpop.permute.xlu0 %2634
  %2636 = vrot.lane.b32.xlu0 %v1678, 2
  %v2637 = vpop.permute.xlu0 %2636
  %2638 = vrot.lane.b32.xlu0 %v1679, 2
  %v2639 = vpop.permute.xlu0 %2638
  %v2672 = vmul.f32 %v2512, %v2577
  %v2673 = vmul.f32 %v2513, %v2579
  %v2674 = vmul.f32 %v2514, %v2581
  %v2675 = vmul.f32 %v2515, %v2583
  %v2676 = vmul.f32 %v2516, %v2585
  %v2677 = vmul.f32 %v2517, %v2587
  %v2678 = vmul.f32 %v2518, %v2589
  %v2679 = vmul.f32 %v2519, %v2591
  %v2680 = vmul.f32 %v2520, %v2593
  %v2681 = vmul.f32 %v2521, %v2595
  %v2682 = vmul.f32 %v2522, %v2597
  %v2683 = vmul.f32 %v2523, %v2599
  %v2684 = vmul.f32 %v2524, %v2601
  %v2685 = vmul.f32 %v2525, %v2603
  %v2686 = vmul.f32 %v2526, %v2605
  %v2687 = vmul.f32 %v2527, %v2607
  %v2688 = vmul.f32 %v2528, %v2609
  %v2689 = vmul.f32 %v2529, %v2611
  %v2690 = vmul.f32 %v2530, %v2613
  %v2691 = vmul.f32 %v2531, %v2615
  %v2692 = vmul.f32 %v2532, %v2617
  %v2693 = vmul.f32 %v2533, %v2619
  %v2694 = vmul.f32 %v2534, %v2621
  %v2695 = vmul.f32 %v2535, %v2623
  %v2696 = vmul.f32 %v2536, %v2625
  %v2697 = vmul.f32 %v2537, %v2627
  %v2698 = vmul.f32 %v2538, %v2629
  %v2699 = vmul.f32 %v2539, %v2631
  %v2700 = vmul.f32 %v2540, %v2633
  %v2701 = vmul.f32 %v2541, %v2635
  %v2702 = vmul.f32 %v2542, %v2637
  %v2703 = vmul.f32 %v2543, %v2639
  %v2704 = vsub.f32 0.0, %v1264
  %v2705 = vsub.f32 0.0, %v1265
  %v2706 = vsub.f32 0.0, %v1266
  %v2707 = vsub.f32 0.0, %v1267
  %v2708 = vsub.f32 0.0, %v1268
  %v2709 = vsub.f32 0.0, %v1269
  %v2710 = vsub.f32 0.0, %v1270
  %v2711 = vsub.f32 0.0, %v1271
  %v2712 = vsub.f32 0.0, %v1272
  %v2713 = vsub.f32 0.0, %v1273
  %v2714 = vsub.f32 0.0, %v1274
  %v2715 = vsub.f32 0.0, %v1275
  %v2716 = vsub.f32 0.0, %v1276
  %v2717 = vsub.f32 0.0, %v1277
  %v2718 = vsub.f32 0.0, %v1278
  %v2719 = vsub.f32 0.0, %v1279
  %v2720 = vsub.f32 0.0, %v1280
  %v2721 = vsub.f32 0.0, %v1281
  %v2722 = vsub.f32 0.0, %v1282
  %v2723 = vsub.f32 0.0, %v1283
  %v2724 = vsub.f32 0.0, %v1284
  %v2725 = vsub.f32 0.0, %v1285
  %v2726 = vsub.f32 0.0, %v1286
  %v2727 = vsub.f32 0.0, %v1287
  %v2728 = vsub.f32 0.0, %v1288
  %v2729 = vsub.f32 0.0, %v1289
  %v2730 = vsub.f32 0.0, %v1290
  %v2731 = vsub.f32 0.0, %v1291
  %v2732 = vsub.f32 0.0, %v1292
  %v2733 = vsub.f32 0.0, %v1293
  %v2734 = vsub.f32 0.0, %v1294
  %v2735 = vsub.f32 0.0, %v1295
  %v2736 = vmul.f32 %v1264, 3.0
  %v2737 = vmul.f32 %v1265, 3.0
  %v2738 = vmul.f32 %v1266, 3.0
  %v2739 = vmul.f32 %v1267, 3.0
  %v2740 = vmul.f32 %v1268, 3.0
  %v2741 = vmul.f32 %v1269, 3.0
  %v2742 = vmul.f32 %v1270, 3.0
  %v2743 = vmul.f32 %v1271, 3.0
  %v2744 = vmul.f32 %v1272, 3.0
  %v2745 = vmul.f32 %v1273, 3.0
  %v2746 = vmul.f32 %v1274, 3.0
  %v2747 = vmul.f32 %v1275, 3.0
  %v2748 = vmul.f32 %v1276, 3.0
  %v2749 = vmul.f32 %v1277, 3.0
  %v2750 = vmul.f32 %v1278, 3.0
  %v2751 = vmul.f32 %v1279, 3.0
  %v2752 = vmul.f32 %v1280, 3.0
  %v2753 = vmul.f32 %v1281, 3.0
  %v2754 = vmul.f32 %v1282, 3.0
  %v2755 = vmul.f32 %v1283, 3.0
  %v2756 = vmul.f32 %v1284, 3.0
  %v2757 = vmul.f32 %v1285, 3.0
  %v2758 = vmul.f32 %v1286, 3.0
  %v2759 = vmul.f32 %v1287, 3.0
  %v2760 = vmul.f32 %v1288, 3.0
  %v2761 = vmul.f32 %v1289, 3.0
  %v2762 = vmul.f32 %v1290, 3.0
  %v2763 = vmul.f32 %v1291, 3.0
  %v2764 = vmul.f32 %v1292, 3.0
  %v2765 = vmul.f32 %v1293, 3.0
  %v2766 = vmul.f32 %v1294, 3.0
  %v2767 = vmul.f32 %v1295, 3.0
  %2800 = vrot.lane.b32.xlu0 %v2736, 127
  %v2801 = vpop.permute.xlu0 %2800
  %2802 = vrot.lane.b32.xlu0 %v2737, 127
  %v2803 = vpop.permute.xlu0 %2802
  %2804 = vrot.lane.b32.xlu0 %v2738, 127
  %v2805 = vpop.permute.xlu0 %2804
  %2806 = vrot.lane.b32.xlu0 %v2739, 127
  %v2807 = vpop.permute.xlu0 %2806
  %2808 = vrot.lane.b32.xlu0 %v2740, 127
  %v2809 = vpop.permute.xlu0 %2808
  %2810 = vrot.lane.b32.xlu0 %v2741, 127
  %v2811 = vpop.permute.xlu0 %2810
  %2812 = vrot.lane.b32.xlu0 %v2742, 127
  %v2813 = vpop.permute.xlu0 %2812
  %2814 = vrot.lane.b32.xlu0 %v2743, 127
  %v2815 = vpop.permute.xlu0 %2814
  %2816 = vrot.lane.b32.xlu0 %v2744, 127
  %v2817 = vpop.permute.xlu0 %2816
  %2818 = vrot.lane.b32.xlu0 %v2745, 127
  %v2819 = vpop.permute.xlu0 %2818
  %2820 = vrot.lane.b32.xlu0 %v2746, 127
  %v2821 = vpop.permute.xlu0 %2820
  %2822 = vrot.lane.b32.xlu0 %v2747, 127
  %v2823 = vpop.permute.xlu0 %2822
  %2824 = vrot.lane.b32.xlu0 %v2748, 127
  %v2825 = vpop.permute.xlu0 %2824
  %2826 = vrot.lane.b32.xlu0 %v2749, 127
  %v2827 = vpop.permute.xlu0 %2826
  %2828 = vrot.lane.b32.xlu0 %v2750, 127
  %v2829 = vpop.permute.xlu0 %2828
  %2830 = vrot.lane.b32.xlu0 %v2751, 127
  %v2831 = vpop.permute.xlu0 %2830
  %2832 = vrot.lane.b32.xlu0 %v2752, 127
  %v2833 = vpop.permute.xlu0 %2832
  %2834 = vrot.lane.b32.xlu0 %v2753, 127
  %v2835 = vpop.permute.xlu0 %2834
  %2836 = vrot.lane.b32.xlu0 %v2754, 127
  %v2837 = vpop.permute.xlu0 %2836
  %2838 = vrot.lane.b32.xlu0 %v2755, 127
  %v2839 = vpop.permute.xlu0 %2838
  %2840 = vrot.lane.b32.xlu0 %v2756, 127
  %v2841 = vpop.permute.xlu0 %2840
  %2842 = vrot.lane.b32.xlu0 %v2757, 127
  %v2843 = vpop.permute.xlu0 %2842
  %2844 = vrot.lane.b32.xlu0 %v2758, 127
  %v2845 = vpop.permute.xlu0 %2844
  %2846 = vrot.lane.b32.xlu0 %v2759, 127
  %v2847 = vpop.permute.xlu0 %2846
  %2848 = vrot.lane.b32.xlu0 %v2760, 127
  %v2849 = vpop.permute.xlu0 %2848
  %2850 = vrot.lane.b32.xlu0 %v2761, 127
  %v2851 = vpop.permute.xlu0 %2850
  %2852 = vrot.lane.b32.xlu0 %v2762, 127
  %v2853 = vpop.permute.xlu0 %2852
  %2854 = vrot.lane.b32.xlu0 %v2763, 127
  %v2855 = vpop.permute.xlu0 %2854
  %2856 = vrot.lane.b32.xlu0 %v2764, 127
  %v2857 = vpop.permute.xlu0 %2856
  %2858 = vrot.lane.b32.xlu0 %v2765, 127
  %v2859 = vpop.permute.xlu0 %2858
  %2860 = vrot.lane.b32.xlu0 %v2766, 127
  %v2861 = vpop.permute.xlu0 %2860
  %2862 = vrot.lane.b32.xlu0 %v2767, 127
  %v2863 = vpop.permute.xlu0 %2862
  %v2896 = vadd.f32 %v2704, %v2801
  %v2897 = vadd.f32 %v2705, %v2803
  %v2898 = vadd.f32 %v2706, %v2805
  %v2899 = vadd.f32 %v2707, %v2807
  %v2900 = vadd.f32 %v2708, %v2809
  %v2901 = vadd.f32 %v2709, %v2811
  %v2902 = vadd.f32 %v2710, %v2813
  %v2903 = vadd.f32 %v2711, %v2815
  %v2904 = vadd.f32 %v2712, %v2817
  %v2905 = vadd.f32 %v2713, %v2819
  %v2906 = vadd.f32 %v2714, %v2821
  %v2907 = vadd.f32 %v2715, %v2823
  %v2908 = vadd.f32 %v2716, %v2825
  %v2909 = vadd.f32 %v2717, %v2827
  %v2910 = vadd.f32 %v2718, %v2829
  %v2911 = vadd.f32 %v2719, %v2831
  %v2912 = vadd.f32 %v2720, %v2833
  %v2913 = vadd.f32 %v2721, %v2835
  %v2914 = vadd.f32 %v2722, %v2837
  %v2915 = vadd.f32 %v2723, %v2839
  %v2916 = vadd.f32 %v2724, %v2841
  %v2917 = vadd.f32 %v2725, %v2843
  %v2918 = vadd.f32 %v2726, %v2845
  %v2919 = vadd.f32 %v2727, %v2847
  %v2920 = vadd.f32 %v2728, %v2849
  %v2921 = vadd.f32 %v2729, %v2851
  %v2922 = vadd.f32 %v2730, %v2853
  %v2923 = vadd.f32 %v2731, %v2855
  %v2924 = vadd.f32 %v2732, %v2857
  %v2925 = vadd.f32 %v2733, %v2859
  %v2926 = vadd.f32 %v2734, %v2861
  %v2927 = vadd.f32 %v2735, %v2863
  %v2928 = vmul.f32 %v1712, %v2896
  %v2929 = vmul.f32 %v1713, %v2897
  %v2930 = vmul.f32 %v1714, %v2898
  %v2931 = vmul.f32 %v1715, %v2899
  %v2932 = vmul.f32 %v1716, %v2900
  %v2933 = vmul.f32 %v1717, %v2901
  %v2934 = vmul.f32 %v1718, %v2902
  %v2935 = vmul.f32 %v1719, %v2903
  %v2936 = vmul.f32 %v1720, %v2904
  %v2937 = vmul.f32 %v1721, %v2905
  %v2938 = vmul.f32 %v1722, %v2906
  %v2939 = vmul.f32 %v1723, %v2907
  %v2940 = vmul.f32 %v1724, %v2908
  %v2941 = vmul.f32 %v1725, %v2909
  %v2942 = vmul.f32 %v1726, %v2910
  %v2943 = vmul.f32 %v1727, %v2911
  %v2944 = vmul.f32 %v1728, %v2912
  %v2945 = vmul.f32 %v1729, %v2913
  %v2946 = vmul.f32 %v1730, %v2914
  %v2947 = vmul.f32 %v1731, %v2915
  %v2948 = vmul.f32 %v1732, %v2916
  %v2949 = vmul.f32 %v1733, %v2917
  %v2950 = vmul.f32 %v1734, %v2918
  %v2951 = vmul.f32 %v1735, %v2919
  %v2952 = vmul.f32 %v1736, %v2920
  %v2953 = vmul.f32 %v1737, %v2921
  %v2954 = vmul.f32 %v1738, %v2922
  %v2955 = vmul.f32 %v1739, %v2923
  %v2956 = vmul.f32 %v1740, %v2924
  %v2957 = vmul.f32 %v1741, %v2925
  %v2958 = vmul.f32 %v1742, %v2926
  %v2959 = vmul.f32 %v1743, %v2927
  %2992 = vrot.lane.b32.xlu0 %v1296, 96
  %v2993 = vpop.permute.xlu0 %2992
  %2994 = vrot.lane.b32.xlu0 %v1297, 96
  %v2995 = vpop.permute.xlu0 %2994
  %2996 = vrot.lane.b32.xlu0 %v1298, 96
  %v2997 = vpop.permute.xlu0 %2996
  %2998 = vrot.lane.b32.xlu0 %v1299, 96
  %v2999 = vpop.permute.xlu0 %2998
  %3000 = vrot.lane.b32.xlu0 %v1300, 96
  %v3001 = vpop.permute.xlu0 %3000
  %3002 = vrot.lane.b32.xlu0 %v1301, 96
  %v3003 = vpop.permute.xlu0 %3002
  %3004 = vrot.lane.b32.xlu0 %v1302, 96
  %v3005 = vpop.permute.xlu0 %3004
  %3006 = vrot.lane.b32.xlu0 %v1303, 96
  %v3007 = vpop.permute.xlu0 %3006
  %3008 = vrot.lane.b32.xlu0 %v1304, 96
  %v3009 = vpop.permute.xlu0 %3008
  %3010 = vrot.lane.b32.xlu0 %v1305, 96
  %v3011 = vpop.permute.xlu0 %3010
  %3012 = vrot.lane.b32.xlu0 %v1306, 96
  %v3013 = vpop.permute.xlu0 %3012
  %3014 = vrot.lane.b32.xlu0 %v1307, 96
  %v3015 = vpop.permute.xlu0 %3014
  %3016 = vrot.lane.b32.xlu0 %v1308, 96
  %v3017 = vpop.permute.xlu0 %3016
  %3018 = vrot.lane.b32.xlu0 %v1309, 96
  %v3019 = vpop.permute.xlu0 %3018
  %3020 = vrot.lane.b32.xlu0 %v1310, 96
  %v3021 = vpop.permute.xlu0 %3020
  %3022 = vrot.lane.b32.xlu0 %v1311, 96
  %v3023 = vpop.permute.xlu0 %3022
  %3024 = vrot.lane.b32.xlu0 %v1312, 96
  %v3025 = vpop.permute.xlu0 %3024
  %3026 = vrot.lane.b32.xlu0 %v1313, 96
  %v3027 = vpop.permute.xlu0 %3026
  %3028 = vrot.lane.b32.xlu0 %v1314, 96
  %v3029 = vpop.permute.xlu0 %3028
  %3030 = vrot.lane.b32.xlu0 %v1315, 96
  %v3031 = vpop.permute.xlu0 %3030
  %3032 = vrot.lane.b32.xlu0 %v1316, 96
  %v3033 = vpop.permute.xlu0 %3032
  %3034 = vrot.lane.b32.xlu0 %v1317, 96
  %v3035 = vpop.permute.xlu0 %3034
  %3036 = vrot.lane.b32.xlu0 %v1318, 96
  %v3037 = vpop.permute.xlu0 %3036
  %3038 = vrot.lane.b32.xlu0 %v1319, 96
  %v3039 = vpop.permute.xlu0 %3038
  %3040 = vrot.lane.b32.xlu0 %v1320, 96
  %v3041 = vpop.permute.xlu0 %3040
  %3042 = vrot.lane.b32.xlu0 %v1321, 96
  %v3043 = vpop.permute.xlu0 %3042
  %3044 = vrot.lane.b32.xlu0 %v1322, 96
  %v3045 = vpop.permute.xlu0 %3044
  %3046 = vrot.lane.b32.xlu0 %v1323, 96
  %v3047 = vpop.permute.xlu0 %3046
  %3048 = vrot.lane.b32.xlu0 %v1324, 96
  %v3049 = vpop.permute.xlu0 %3048
  %3050 = vrot.lane.b32.xlu0 %v1325, 96
  %v3051 = vpop.permute.xlu0 %3050
  %3052 = vrot.lane.b32.xlu0 %v1326, 96
  %v3053 = vpop.permute.xlu0 %3052
  %3054 = vrot.lane.b32.xlu0 %v1327, 96
  %v3055 = vpop.permute.xlu0 %3054
  %3120 = vrot.lane.b32.xlu0 %v1328, 96
  %v3121 = vpop.permute.xlu0 %3120
  %3122 = vrot.lane.b32.xlu0 %v1329, 96
  %v3123 = vpop.permute.xlu0 %3122
  %3124 = vrot.lane.b32.xlu0 %v1330, 96
  %v3125 = vpop.permute.xlu0 %3124
  %3126 = vrot.lane.b32.xlu0 %v1331, 96
  %v3127 = vpop.permute.xlu0 %3126
  %3128 = vrot.lane.b32.xlu0 %v1332, 96
  %v3129 = vpop.permute.xlu0 %3128
  %3130 = vrot.lane.b32.xlu0 %v1333, 96
  %v3131 = vpop.permute.xlu0 %3130
  %3132 = vrot.lane.b32.xlu0 %v1334, 96
  %v3133 = vpop.permute.xlu0 %3132
  %3134 = vrot.lane.b32.xlu0 %v1335, 96
  %v3135 = vpop.permute.xlu0 %3134
  %3136 = vrot.lane.b32.xlu0 %v1336, 96
  %v3137 = vpop.permute.xlu0 %3136
  %3138 = vrot.lane.b32.xlu0 %v1337, 96
  %v3139 = vpop.permute.xlu0 %3138
  %3140 = vrot.lane.b32.xlu0 %v1338, 96
  %v3141 = vpop.permute.xlu0 %3140
  %3142 = vrot.lane.b32.xlu0 %v1339, 96
  %v3143 = vpop.permute.xlu0 %3142
  %3144 = vrot.lane.b32.xlu0 %v1340, 96
  %v3145 = vpop.permute.xlu0 %3144
  %3146 = vrot.lane.b32.xlu0 %v1341, 96
  %v3147 = vpop.permute.xlu0 %3146
  %3148 = vrot.lane.b32.xlu0 %v1342, 96
  %v3149 = vpop.permute.xlu0 %3148
  %3150 = vrot.lane.b32.xlu0 %v1343, 96
  %v3151 = vpop.permute.xlu0 %3150
  %3152 = vrot.lane.b32.xlu0 %v1344, 96
  %v3153 = vpop.permute.xlu0 %3152
  %3154 = vrot.lane.b32.xlu0 %v1345, 96
  %v3155 = vpop.permute.xlu0 %3154
  %3156 = vrot.lane.b32.xlu0 %v1346, 96
  %v3157 = vpop.permute.xlu0 %3156
  %3158 = vrot.lane.b32.xlu0 %v1347, 96
  %v3159 = vpop.permute.xlu0 %3158
  %3160 = vrot.lane.b32.xlu0 %v1348, 96
  %v3161 = vpop.permute.xlu0 %3160
  %3162 = vrot.lane.b32.xlu0 %v1349, 96
  %v3163 = vpop.permute.xlu0 %3162
  %3164 = vrot.lane.b32.xlu0 %v1350, 96
  %v3165 = vpop.permute.xlu0 %3164
  %3166 = vrot.lane.b32.xlu0 %v1351, 96
  %v3167 = vpop.permute.xlu0 %3166
  %3168 = vrot.lane.b32.xlu0 %v1352, 96
  %v3169 = vpop.permute.xlu0 %3168
  %3170 = vrot.lane.b32.xlu0 %v1353, 96
  %v3171 = vpop.permute.xlu0 %3170
  %3172 = vrot.lane.b32.xlu0 %v1354, 96
  %v3173 = vpop.permute.xlu0 %3172
  %3174 = vrot.lane.b32.xlu0 %v1355, 96
  %v3175 = vpop.permute.xlu0 %3174
  %3176 = vrot.lane.b32.xlu0 %v1356, 96
  %v3177 = vpop.permute.xlu0 %3176
  %3178 = vrot.lane.b32.xlu0 %v1357, 96
  %v3179 = vpop.permute.xlu0 %3178
  %3180 = vrot.lane.b32.xlu0 %v1358, 96
  %v3181 = vpop.permute.xlu0 %3180
  %3182 = vrot.lane.b32.xlu0 %v1359, 96
  %v3183 = vpop.permute.xlu0 %3182
  %3216 = vrot.lane.b32.xlu0 %v1296, 99
  %v3217 = vpop.permute.xlu0 %3216
  %3218 = vrot.lane.b32.xlu0 %v1297, 99
  %v3219 = vpop.permute.xlu0 %3218
  %3220 = vrot.lane.b32.xlu0 %v1298, 99
  %v3221 = vpop.permute.xlu0 %3220
  %3222 = vrot.lane.b32.xlu0 %v1299, 99
  %v3223 = vpop.permute.xlu0 %3222
  %3224 = vrot.lane.b32.xlu0 %v1300, 99
  %v3225 = vpop.permute.xlu0 %3224
  %3226 = vrot.lane.b32.xlu0 %v1301, 99
  %v3227 = vpop.permute.xlu0 %3226
  %3228 = vrot.lane.b32.xlu0 %v1302, 99
  %v3229 = vpop.permute.xlu0 %3228
  %3230 = vrot.lane.b32.xlu0 %v1303, 99
  %v3231 = vpop.permute.xlu0 %3230
  %3232 = vrot.lane.b32.xlu0 %v1304, 99
  %v3233 = vpop.permute.xlu0 %3232
  %3234 = vrot.lane.b32.xlu0 %v1305, 99
  %v3235 = vpop.permute.xlu0 %3234
  %3236 = vrot.lane.b32.xlu0 %v1306, 99
  %v3237 = vpop.permute.xlu0 %3236
  %3238 = vrot.lane.b32.xlu0 %v1307, 99
  %v3239 = vpop.permute.xlu0 %3238
  %3240 = vrot.lane.b32.xlu0 %v1308, 99
  %v3241 = vpop.permute.xlu0 %3240
  %3242 = vrot.lane.b32.xlu0 %v1309, 99
  %v3243 = vpop.permute.xlu0 %3242
  %3244 = vrot.lane.b32.xlu0 %v1310, 99
  %v3245 = vpop.permute.xlu0 %3244
  %3246 = vrot.lane.b32.xlu0 %v1311, 99
  %v3247 = vpop.permute.xlu0 %3246
  %3248 = vrot.lane.b32.xlu0 %v1312, 99
  %v3249 = vpop.permute.xlu0 %3248
  %3250 = vrot.lane.b32.xlu0 %v1313, 99
  %v3251 = vpop.permute.xlu0 %3250
  %3252 = vrot.lane.b32.xlu0 %v1314, 99
  %v3253 = vpop.permute.xlu0 %3252
  %3254 = vrot.lane.b32.xlu0 %v1315, 99
  %v3255 = vpop.permute.xlu0 %3254
  %3256 = vrot.lane.b32.xlu0 %v1316, 99
  %v3257 = vpop.permute.xlu0 %3256
  %3258 = vrot.lane.b32.xlu0 %v1317, 99
  %v3259 = vpop.permute.xlu0 %3258
  %3260 = vrot.lane.b32.xlu0 %v1318, 99
  %v3261 = vpop.permute.xlu0 %3260
  %3262 = vrot.lane.b32.xlu0 %v1319, 99
  %v3263 = vpop.permute.xlu0 %3262
  %3264 = vrot.lane.b32.xlu0 %v1320, 99
  %v3265 = vpop.permute.xlu0 %3264
  %3266 = vrot.lane.b32.xlu0 %v1321, 99
  %v3267 = vpop.permute.xlu0 %3266
  %3268 = vrot.lane.b32.xlu0 %v1322, 99
  %v3269 = vpop.permute.xlu0 %3268
  %3270 = vrot.lane.b32.xlu0 %v1323, 99
  %v3271 = vpop.permute.xlu0 %3270
  %3272 = vrot.lane.b32.xlu0 %v1324, 99
  %v3273 = vpop.permute.xlu0 %3272
  %3274 = vrot.lane.b32.xlu0 %v1325, 99
  %v3275 = vpop.permute.xlu0 %3274
  %3276 = vrot.lane.b32.xlu0 %v1326, 99
  %v3277 = vpop.permute.xlu0 %3276
  %3278 = vrot.lane.b32.xlu0 %v1327, 99
  %v3279 = vpop.permute.xlu0 %3278
  %3344 = vrot.lane.b32.xlu0 %v1360, 100
  %v3345 = vpop.permute.xlu0 %3344
  %3346 = vrot.lane.b32.xlu0 %v1361, 100
  %v3347 = vpop.permute.xlu0 %3346
  %3348 = vrot.lane.b32.xlu0 %v1362, 100
  %v3349 = vpop.permute.xlu0 %3348
  %3350 = vrot.lane.b32.xlu0 %v1363, 100
  %v3351 = vpop.permute.xlu0 %3350
  %3352 = vrot.lane.b32.xlu0 %v1364, 100
  %v3353 = vpop.permute.xlu0 %3352
  %3354 = vrot.lane.b32.xlu0 %v1365, 100
  %v3355 = vpop.permute.xlu0 %3354
  %3356 = vrot.lane.b32.xlu0 %v1366, 100
  %v3357 = vpop.permute.xlu0 %3356
  %3358 = vrot.lane.b32.xlu0 %v1367, 100
  %v3359 = vpop.permute.xlu0 %3358
  %3360 = vrot.lane.b32.xlu0 %v1368, 100
  %v3361 = vpop.permute.xlu0 %3360
  %3362 = vrot.lane.b32.xlu0 %v1369, 100
  %v3363 = vpop.permute.xlu0 %3362
  %3364 = vrot.lane.b32.xlu0 %v1370, 100
  %v3365 = vpop.permute.xlu0 %3364
  %3366 = vrot.lane.b32.xlu0 %v1371, 100
  %v3367 = vpop.permute.xlu0 %3366
  %3368 = vrot.lane.b32.xlu0 %v1372, 100
  %v3369 = vpop.permute.xlu0 %3368
  %3370 = vrot.lane.b32.xlu0 %v1373, 100
  %v3371 = vpop.permute.xlu0 %3370
  %3372 = vrot.lane.b32.xlu0 %v1374, 100
  %v3373 = vpop.permute.xlu0 %3372
  %3374 = vrot.lane.b32.xlu0 %v1375, 100
  %v3375 = vpop.permute.xlu0 %3374
  %3376 = vrot.lane.b32.xlu0 %v1376, 100
  %v3377 = vpop.permute.xlu0 %3376
  %3378 = vrot.lane.b32.xlu0 %v1377, 100
  %v3379 = vpop.permute.xlu0 %3378
  %3380 = vrot.lane.b32.xlu0 %v1378, 100
  %v3381 = vpop.permute.xlu0 %3380
  %3382 = vrot.lane.b32.xlu0 %v1379, 100
  %v3383 = vpop.permute.xlu0 %3382
  %3384 = vrot.lane.b32.xlu0 %v1380, 100
  %v3385 = vpop.permute.xlu0 %3384
  %3386 = vrot.lane.b32.xlu0 %v1381, 100
  %v3387 = vpop.permute.xlu0 %3386
  %3388 = vrot.lane.b32.xlu0 %v1382, 100
  %v3389 = vpop.permute.xlu0 %3388
  %3390 = vrot.lane.b32.xlu0 %v1383, 100
  %v3391 = vpop.permute.xlu0 %3390
  %3392 = vrot.lane.b32.xlu0 %v1384, 100
  %v3393 = vpop.permute.xlu0 %3392
  %3394 = vrot.lane.b32.xlu0 %v1385, 100
  %v3395 = vpop.permute.xlu0 %3394
  %3396 = vrot.lane.b32.xlu0 %v1386, 100
  %v3397 = vpop.permute.xlu0 %3396
  %3398 = vrot.lane.b32.xlu0 %v1387, 100
  %v3399 = vpop.permute.xlu0 %3398
  %3400 = vrot.lane.b32.xlu0 %v1388, 100
  %v3401 = vpop.permute.xlu0 %3400
  %3402 = vrot.lane.b32.xlu0 %v1389, 100
  %v3403 = vpop.permute.xlu0 %3402
  %3404 = vrot.lane.b32.xlu0 %v1390, 100
  %v3405 = vpop.permute.xlu0 %3404
  %3406 = vrot.lane.b32.xlu0 %v1391, 100
  %v3407 = vpop.permute.xlu0 %3406
  %3472 = vrot.lane.b32.xlu0 %v1392, 100
  %v3473 = vpop.permute.xlu0 %3472
  %3474 = vrot.lane.b32.xlu0 %v1393, 100
  %v3475 = vpop.permute.xlu0 %3474
  %3476 = vrot.lane.b32.xlu0 %v1394, 100
  %v3477 = vpop.permute.xlu0 %3476
  %3478 = vrot.lane.b32.xlu0 %v1395, 100
  %v3479 = vpop.permute.xlu0 %3478
  %3480 = vrot.lane.b32.xlu0 %v1396, 100
  %v3481 = vpop.permute.xlu0 %3480
  %3482 = vrot.lane.b32.xlu0 %v1397, 100
  %v3483 = vpop.permute.xlu0 %3482
  %3484 = vrot.lane.b32.xlu0 %v1398, 100
  %v3485 = vpop.permute.xlu0 %3484
  %3486 = vrot.lane.b32.xlu0 %v1399, 100
  %v3487 = vpop.permute.xlu0 %3486
  %3488 = vrot.lane.b32.xlu0 %v1400, 100
  %v3489 = vpop.permute.xlu0 %3488
  %3490 = vrot.lane.b32.xlu0 %v1401, 100
  %v3491 = vpop.permute.xlu0 %3490
  %3492 = vrot.lane.b32.xlu0 %v1402, 100
  %v3493 = vpop.permute.xlu0 %3492
  %3494 = vrot.lane.b32.xlu0 %v1403, 100
  %v3495 = vpop.permute.xlu0 %3494
  %3496 = vrot.lane.b32.xlu0 %v1404, 100
  %v3497 = vpop.permute.xlu0 %3496
  %3498 = vrot.lane.b32.xlu0 %v1405, 100
  %v3499 = vpop.permute.xlu0 %3498
  %3500 = vrot.lane.b32.xlu0 %v1406, 100
  %v3501 = vpop.permute.xlu0 %3500
  %3502 = vrot.lane.b32.xlu0 %v1407, 100
  %v3503 = vpop.permute.xlu0 %3502
  %3504 = vrot.lane.b32.xlu0 %v1408, 100
  %v3505 = vpop.permute.xlu0 %3504
  %3506 = vrot.lane.b32.xlu0 %v1409, 100
  %v3507 = vpop.permute.xlu0 %3506
  %3508 = vrot.lane.b32.xlu0 %v1410, 100
  %v3509 = vpop.permute.xlu0 %3508
  %3510 = vrot.lane.b32.xlu0 %v1411, 100
  %v3511 = vpop.permute.xlu0 %3510
  %3512 = vrot.lane.b32.xlu0 %v1412, 100
  %v3513 = vpop.permute.xlu0 %3512
  %3514 = vrot.lane.b32.xlu0 %v1413, 100
  %v3515 = vpop.permute.xlu0 %3514
  %3516 = vrot.lane.b32.xlu0 %v1414, 100
  %v3517 = vpop.permute.xlu0 %3516
  %3518 = vrot.lane.b32.xlu0 %v1415, 100
  %v3519 = vpop.permute.xlu0 %3518
  %3520 = vrot.lane.b32.xlu0 %v1416, 100
  %v3521 = vpop.permute.xlu0 %3520
  %3522 = vrot.lane.b32.xlu0 %v1417, 100
  %v3523 = vpop.permute.xlu0 %3522
  %3524 = vrot.lane.b32.xlu0 %v1418, 100
  %v3525 = vpop.permute.xlu0 %3524
  %3526 = vrot.lane.b32.xlu0 %v1419, 100
  %v3527 = vpop.permute.xlu0 %3526
  %3528 = vrot.lane.b32.xlu0 %v1420, 100
  %v3529 = vpop.permute.xlu0 %3528
  %3530 = vrot.lane.b32.xlu0 %v1421, 100
  %v3531 = vpop.permute.xlu0 %3530
  %3532 = vrot.lane.b32.xlu0 %v1422, 100
  %v3533 = vpop.permute.xlu0 %3532
  %3534 = vrot.lane.b32.xlu0 %v1423, 100
  %v3535 = vpop.permute.xlu0 %3534
  %3600 = vrot.lane.b32.xlu0 %v1456, 100
  %v3601 = vpop.permute.xlu0 %3600
  %3602 = vrot.lane.b32.xlu0 %v1457, 100
  %v3603 = vpop.permute.xlu0 %3602
  %3604 = vrot.lane.b32.xlu0 %v1458, 100
  %v3605 = vpop.permute.xlu0 %3604
  %3606 = vrot.lane.b32.xlu0 %v1459, 100
  %v3607 = vpop.permute.xlu0 %3606
  %3608 = vrot.lane.b32.xlu0 %v1460, 100
  %v3609 = vpop.permute.xlu0 %3608
  %3610 = vrot.lane.b32.xlu0 %v1461, 100
  %v3611 = vpop.permute.xlu0 %3610
  %3612 = vrot.lane.b32.xlu0 %v1462, 100
  %v3613 = vpop.permute.xlu0 %3612
  %3614 = vrot.lane.b32.xlu0 %v1463, 100
  %v3615 = vpop.permute.xlu0 %3614
  %3616 = vrot.lane.b32.xlu0 %v1464, 100
  %v3617 = vpop.permute.xlu0 %3616
  %3618 = vrot.lane.b32.xlu0 %v1465, 100
  %v3619 = vpop.permute.xlu0 %3618
  %3620 = vrot.lane.b32.xlu0 %v1466, 100
  %v3621 = vpop.permute.xlu0 %3620
  %3622 = vrot.lane.b32.xlu0 %v1467, 100
  %v3623 = vpop.permute.xlu0 %3622
  %3624 = vrot.lane.b32.xlu0 %v1468, 100
  %v3625 = vpop.permute.xlu0 %3624
  %3626 = vrot.lane.b32.xlu0 %v1469, 100
  %v3627 = vpop.permute.xlu0 %3626
  %3628 = vrot.lane.b32.xlu0 %v1470, 100
  %v3629 = vpop.permute.xlu0 %3628
  %3630 = vrot.lane.b32.xlu0 %v1471, 100
  %v3631 = vpop.permute.xlu0 %3630
  %3632 = vrot.lane.b32.xlu0 %v1472, 100
  %v3633 = vpop.permute.xlu0 %3632
  %3634 = vrot.lane.b32.xlu0 %v1473, 100
  %v3635 = vpop.permute.xlu0 %3634
  %3636 = vrot.lane.b32.xlu0 %v1474, 100
  %v3637 = vpop.permute.xlu0 %3636
  %3638 = vrot.lane.b32.xlu0 %v1475, 100
  %v3639 = vpop.permute.xlu0 %3638
  %3640 = vrot.lane.b32.xlu0 %v1476, 100
  %v3641 = vpop.permute.xlu0 %3640
  %3642 = vrot.lane.b32.xlu0 %v1477, 100
  %v3643 = vpop.permute.xlu0 %3642
  %3644 = vrot.lane.b32.xlu0 %v1478, 100
  %v3645 = vpop.permute.xlu0 %3644
  %3646 = vrot.lane.b32.xlu0 %v1479, 100
  %v3647 = vpop.permute.xlu0 %3646
  %3648 = vrot.lane.b32.xlu0 %v1480, 100
  %v3649 = vpop.permute.xlu0 %3648
  %3650 = vrot.lane.b32.xlu0 %v1481, 100
  %v3651 = vpop.permute.xlu0 %3650
  %3652 = vrot.lane.b32.xlu0 %v1482, 100
  %v3653 = vpop.permute.xlu0 %3652
  %3654 = vrot.lane.b32.xlu0 %v1483, 100
  %v3655 = vpop.permute.xlu0 %3654
  %3656 = vrot.lane.b32.xlu0 %v1484, 100
  %v3657 = vpop.permute.xlu0 %3656
  %3658 = vrot.lane.b32.xlu0 %v1485, 100
  %v3659 = vpop.permute.xlu0 %3658
  %3660 = vrot.lane.b32.xlu0 %v1486, 100
  %v3661 = vpop.permute.xlu0 %3660
  %3662 = vrot.lane.b32.xlu0 %v1487, 100
  %v3663 = vpop.permute.xlu0 %3662
  %3728 = vrot.lane.b32.xlu0 %v1488, 103
  %v3729 = vpop.permute.xlu0 %3728
  %3730 = vrot.lane.b32.xlu0 %v1489, 103
  %v3731 = vpop.permute.xlu0 %3730
  %3732 = vrot.lane.b32.xlu0 %v1490, 103
  %v3733 = vpop.permute.xlu0 %3732
  %3734 = vrot.lane.b32.xlu0 %v1491, 103
  %v3735 = vpop.permute.xlu0 %3734
  %3736 = vrot.lane.b32.xlu0 %v1492, 103
  %v3737 = vpop.permute.xlu0 %3736
  %3738 = vrot.lane.b32.xlu0 %v1493, 103
  %v3739 = vpop.permute.xlu0 %3738
  %3740 = vrot.lane.b32.xlu0 %v1494, 103
  %v3741 = vpop.permute.xlu0 %3740
  %3742 = vrot.lane.b32.xlu0 %v1495, 103
  %v3743 = vpop.permute.xlu0 %3742
  %3744 = vrot.lane.b32.xlu0 %v1496, 103
  %v3745 = vpop.permute.xlu0 %3744
  %3746 = vrot.lane.b32.xlu0 %v1497, 103
  %v3747 = vpop.permute.xlu0 %3746
  %3748 = vrot.lane.b32.xlu0 %v1498, 103
  %v3749 = vpop.permute.xlu0 %3748
  %3750 = vrot.lane.b32.xlu0 %v1499, 103
  %v3751 = vpop.permute.xlu0 %3750
  %3752 = vrot.lane.b32.xlu0 %v1500, 103
  %v3753 = vpop.permute.xlu0 %3752
  %3754 = vrot.lane.b32.xlu0 %v1501, 103
  %v3755 = vpop.permute.xlu0 %3754
  %3756 = vrot.lane.b32.xlu0 %v1502, 103
  %v3757 = vpop.permute.xlu0 %3756
  %3758 = vrot.lane.b32.xlu0 %v1503, 103
  %v3759 = vpop.permute.xlu0 %3758
  %3760 = vrot.lane.b32.xlu0 %v1504, 103
  %v3761 = vpop.permute.xlu0 %3760
  %3762 = vrot.lane.b32.xlu0 %v1505, 103
  %v3763 = vpop.permute.xlu0 %3762
  %3764 = vrot.lane.b32.xlu0 %v1506, 103
  %v3765 = vpop.permute.xlu0 %3764
  %3766 = vrot.lane.b32.xlu0 %v1507, 103
  %v3767 = vpop.permute.xlu0 %3766
  %3768 = vrot.lane.b32.xlu0 %v1508, 103
  %v3769 = vpop.permute.xlu0 %3768
  %3770 = vrot.lane.b32.xlu0 %v1509, 103
  %v3771 = vpop.permute.xlu0 %3770
  %3772 = vrot.lane.b32.xlu0 %v1510, 103
  %v3773 = vpop.permute.xlu0 %3772
  %3774 = vrot.lane.b32.xlu0 %v1511, 103
  %v3775 = vpop.permute.xlu0 %3774
  %3776 = vrot.lane.b32.xlu0 %v1512, 103
  %v3777 = vpop.permute.xlu0 %3776
  %3778 = vrot.lane.b32.xlu0 %v1513, 103
  %v3779 = vpop.permute.xlu0 %3778
  %3780 = vrot.lane.b32.xlu0 %v1514, 103
  %v3781 = vpop.permute.xlu0 %3780
  %3782 = vrot.lane.b32.xlu0 %v1515, 103
  %v3783 = vpop.permute.xlu0 %3782
  %3784 = vrot.lane.b32.xlu0 %v1516, 103
  %v3785 = vpop.permute.xlu0 %3784
  %3786 = vrot.lane.b32.xlu0 %v1517, 103
  %v3787 = vpop.permute.xlu0 %3786
  %3788 = vrot.lane.b32.xlu0 %v1518, 103
  %v3789 = vpop.permute.xlu0 %3788
  %3790 = vrot.lane.b32.xlu0 %v1519, 103
  %v3791 = vpop.permute.xlu0 %3790
  %3856 = vrot.lane.b32.xlu0 %v1680, 104
  %v3857 = vpop.permute.xlu0 %3856
  %3858 = vrot.lane.b32.xlu0 %v1681, 104
  %v3859 = vpop.permute.xlu0 %3858
  %3860 = vrot.lane.b32.xlu0 %v1682, 104
  %v3861 = vpop.permute.xlu0 %3860
  %3862 = vrot.lane.b32.xlu0 %v1683, 104
  %v3863 = vpop.permute.xlu0 %3862
  %3864 = vrot.lane.b32.xlu0 %v1684, 104
  %v3865 = vpop.permute.xlu0 %3864
  %3866 = vrot.lane.b32.xlu0 %v1685, 104
  %v3867 = vpop.permute.xlu0 %3866
  %3868 = vrot.lane.b32.xlu0 %v1686, 104
  %v3869 = vpop.permute.xlu0 %3868
  %3870 = vrot.lane.b32.xlu0 %v1687, 104
  %v3871 = vpop.permute.xlu0 %3870
  %3872 = vrot.lane.b32.xlu0 %v1688, 104
  %v3873 = vpop.permute.xlu0 %3872
  %3874 = vrot.lane.b32.xlu0 %v1689, 104
  %v3875 = vpop.permute.xlu0 %3874
  %3876 = vrot.lane.b32.xlu0 %v1690, 104
  %v3877 = vpop.permute.xlu0 %3876
  %3878 = vrot.lane.b32.xlu0 %v1691, 104
  %v3879 = vpop.permute.xlu0 %3878
  %3880 = vrot.lane.b32.xlu0 %v1692, 104
  %v3881 = vpop.permute.xlu0 %3880
  %3882 = vrot.lane.b32.xlu0 %v1693, 104
  %v3883 = vpop.permute.xlu0 %3882
  %3884 = vrot.lane.b32.xlu0 %v1694, 104
  %v3885 = vpop.permute.xlu0 %3884
  %3886 = vrot.lane.b32.xlu0 %v1695, 104
  %v3887 = vpop.permute.xlu0 %3886
  %3888 = vrot.lane.b32.xlu0 %v1696, 104
  %v3889 = vpop.permute.xlu0 %3888
  %3890 = vrot.lane.b32.xlu0 %v1697, 104
  %v3891 = vpop.permute.xlu0 %3890
  %3892 = vrot.lane.b32.xlu0 %v1698, 104
  %v3893 = vpop.permute.xlu0 %3892
  %3894 = vrot.lane.b32.xlu0 %v1699, 104
  %v3895 = vpop.permute.xlu0 %3894
  %3896 = vrot.lane.b32.xlu0 %v1700, 104
  %v3897 = vpop.permute.xlu0 %3896
  %3898 = vrot.lane.b32.xlu0 %v1701, 104
  %v3899 = vpop.permute.xlu0 %3898
  %3900 = vrot.lane.b32.xlu0 %v1702, 104
  %v3901 = vpop.permute.xlu0 %3900
  %3902 = vrot.lane.b32.xlu0 %v1703, 104
  %v3903 = vpop.permute.xlu0 %3902
  %3904 = vrot.lane.b32.xlu0 %v1704, 104
  %v3905 = vpop.permute.xlu0 %3904
  %3906 = vrot.lane.b32.xlu0 %v1705, 104
  %v3907 = vpop.permute.xlu0 %3906
  %3908 = vrot.lane.b32.xlu0 %v1706, 104
  %v3909 = vpop.permute.xlu0 %3908
  %3910 = vrot.lane.b32.xlu0 %v1707, 104
  %v3911 = vpop.permute.xlu0 %3910
  %3912 = vrot.lane.b32.xlu0 %v1708, 104
  %v3913 = vpop.permute.xlu0 %3912
  %3914 = vrot.lane.b32.xlu0 %v1709, 104
  %v3915 = vpop.permute.xlu0 %3914
  %3916 = vrot.lane.b32.xlu0 %v1710, 104
  %v3917 = vpop.permute.xlu0 %3916
  %3918 = vrot.lane.b32.xlu0 %v1711, 104
  %v3919 = vpop.permute.xlu0 %3918
  %3984 = vrot.lane.b32.xlu0 %v1936, 104
  %v3985 = vpop.permute.xlu0 %3984
  %3986 = vrot.lane.b32.xlu0 %v1937, 104
  %v3987 = vpop.permute.xlu0 %3986
  %3988 = vrot.lane.b32.xlu0 %v1938, 104
  %v3989 = vpop.permute.xlu0 %3988
  %3990 = vrot.lane.b32.xlu0 %v1939, 104
  %v3991 = vpop.permute.xlu0 %3990
  %3992 = vrot.lane.b32.xlu0 %v1940, 104
  %v3993 = vpop.permute.xlu0 %3992
  %3994 = vrot.lane.b32.xlu0 %v1941, 104
  %v3995 = vpop.permute.xlu0 %3994
  %3996 = vrot.lane.b32.xlu0 %v1942, 104
  %v3997 = vpop.permute.xlu0 %3996
  %3998 = vrot.lane.b32.xlu0 %v1943, 104
  %v3999 = vpop.permute.xlu0 %3998
  %4000 = vrot.lane.b32.xlu0 %v1944, 104
  %v4001 = vpop.permute.xlu0 %4000
  %4002 = vrot.lane.b32.xlu0 %v1945, 104
  %v4003 = vpop.permute.xlu0 %4002
  %4004 = vrot.lane.b32.xlu0 %v1946, 104
  %v4005 = vpop.permute.xlu0 %4004
  %4006 = vrot.lane.b32.xlu0 %v1947, 104
  %v4007 = vpop.permute.xlu0 %4006
  %4008 = vrot.lane.b32.xlu0 %v1948, 104
  %v4009 = vpop.permute.xlu0 %4008
  %4010 = vrot.lane.b32.xlu0 %v1949, 104
  %v4011 = vpop.permute.xlu0 %4010
  %4012 = vrot.lane.b32.xlu0 %v1950, 104
  %v4013 = vpop.permute.xlu0 %4012
  %4014 = vrot.lane.b32.xlu0 %v1951, 104
  %v4015 = vpop.permute.xlu0 %4014
  %4016 = vrot.lane.b32.xlu0 %v1952, 104
  %v4017 = vpop.permute.xlu0 %4016
  %4018 = vrot.lane.b32.xlu0 %v1953, 104
  %v4019 = vpop.permute.xlu0 %4018
  %4020 = vrot.lane.b32.xlu0 %v1954, 104
  %v4021 = vpop.permute.xlu0 %4020
  %4022 = vrot.lane.b32.xlu0 %v1955, 104
  %v4023 = vpop.permute.xlu0 %4022
  %4024 = vrot.lane.b32.xlu0 %v1956, 104
  %v4025 = vpop.permute.xlu0 %4024
  %4026 = vrot.lane.b32.xlu0 %v1957, 104
  %v4027 = vpop.permute.xlu0 %4026
  %4028 = vrot.lane.b32.xlu0 %v1958, 104
  %v4029 = vpop.permute.xlu0 %4028
  %4030 = vrot.lane.b32.xlu0 %v1959, 104
  %v4031 = vpop.permute.xlu0 %4030
  %4032 = vrot.lane.b32.xlu0 %v1960, 104
  %v4033 = vpop.permute.xlu0 %4032
  %4034 = vrot.lane.b32.xlu0 %v1961, 104
  %v4035 = vpop.permute.xlu0 %4034
  %4036 = vrot.lane.b32.xlu0 %v1962, 104
  %v4037 = vpop.permute.xlu0 %4036
  %4038 = vrot.lane.b32.xlu0 %v1963, 104
  %v4039 = vpop.permute.xlu0 %4038
  %4040 = vrot.lane.b32.xlu0 %v1964, 104
  %v4041 = vpop.permute.xlu0 %4040
  %4042 = vrot.lane.b32.xlu0 %v1965, 104
  %v4043 = vpop.permute.xlu0 %4042
  %4044 = vrot.lane.b32.xlu0 %v1966, 104
  %v4045 = vpop.permute.xlu0 %4044
  %4046 = vrot.lane.b32.xlu0 %v1967, 104
  %v4047 = vpop.permute.xlu0 %4046
  %4112 = vrot.lane.b32.xlu0 %v2000, 106
  %v4113 = vpop.permute.xlu0 %4112
  %4114 = vrot.lane.b32.xlu0 %v2001, 106
  %v4115 = vpop.permute.xlu0 %4114
  %4116 = vrot.lane.b32.xlu0 %v2002, 106
  %v4117 = vpop.permute.xlu0 %4116
  %4118 = vrot.lane.b32.xlu0 %v2003, 106
  %v4119 = vpop.permute.xlu0 %4118
  %4120 = vrot.lane.b32.xlu0 %v2004, 106
  %v4121 = vpop.permute.xlu0 %4120
  %4122 = vrot.lane.b32.xlu0 %v2005, 106
  %v4123 = vpop.permute.xlu0 %4122
  %4124 = vrot.lane.b32.xlu0 %v2006, 106
  %v4125 = vpop.permute.xlu0 %4124
  %4126 = vrot.lane.b32.xlu0 %v2007, 106
  %v4127 = vpop.permute.xlu0 %4126
  %4128 = vrot.lane.b32.xlu0 %v2008, 106
  %v4129 = vpop.permute.xlu0 %4128
  %4130 = vrot.lane.b32.xlu0 %v2009, 106
  %v4131 = vpop.permute.xlu0 %4130
  %4132 = vrot.lane.b32.xlu0 %v2010, 106
  %v4133 = vpop.permute.xlu0 %4132
  %4134 = vrot.lane.b32.xlu0 %v2011, 106
  %v4135 = vpop.permute.xlu0 %4134
  %4136 = vrot.lane.b32.xlu0 %v2012, 106
  %v4137 = vpop.permute.xlu0 %4136
  %4138 = vrot.lane.b32.xlu0 %v2013, 106
  %v4139 = vpop.permute.xlu0 %4138
  %4140 = vrot.lane.b32.xlu0 %v2014, 106
  %v4141 = vpop.permute.xlu0 %4140
  %4142 = vrot.lane.b32.xlu0 %v2015, 106
  %v4143 = vpop.permute.xlu0 %4142
  %4144 = vrot.lane.b32.xlu0 %v2016, 106
  %v4145 = vpop.permute.xlu0 %4144
  %4146 = vrot.lane.b32.xlu0 %v2017, 106
  %v4147 = vpop.permute.xlu0 %4146
  %4148 = vrot.lane.b32.xlu0 %v2018, 106
  %v4149 = vpop.permute.xlu0 %4148
  %4150 = vrot.lane.b32.xlu0 %v2019, 106
  %v4151 = vpop.permute.xlu0 %4150
  %4152 = vrot.lane.b32.xlu0 %v2020, 106
  %v4153 = vpop.permute.xlu0 %4152
  %4154 = vrot.lane.b32.xlu0 %v2021, 106
  %v4155 = vpop.permute.xlu0 %4154
  %4156 = vrot.lane.b32.xlu0 %v2022, 106
  %v4157 = vpop.permute.xlu0 %4156
  %4158 = vrot.lane.b32.xlu0 %v2023, 106
  %v4159 = vpop.permute.xlu0 %4158
  %4160 = vrot.lane.b32.xlu0 %v2024, 106
  %v4161 = vpop.permute.xlu0 %4160
  %4162 = vrot.lane.b32.xlu0 %v2025, 106
  %v4163 = vpop.permute.xlu0 %4162
  %4164 = vrot.lane.b32.xlu0 %v2026, 106
  %v4165 = vpop.permute.xlu0 %4164
  %4166 = vrot.lane.b32.xlu0 %v2027, 106
  %v4167 = vpop.permute.xlu0 %4166
  %4168 = vrot.lane.b32.xlu0 %v2028, 106
  %v4169 = vpop.permute.xlu0 %4168
  %4170 = vrot.lane.b32.xlu0 %v2029, 106
  %v4171 = vpop.permute.xlu0 %4170
  %4172 = vrot.lane.b32.xlu0 %v2030, 106
  %v4173 = vpop.permute.xlu0 %4172
  %4174 = vrot.lane.b32.xlu0 %v2031, 106
  %v4175 = vpop.permute.xlu0 %4174
  %4240 = vrot.lane.b32.xlu0 %v2256, 106
  %v4241 = vpop.permute.xlu0 %4240
  %4242 = vrot.lane.b32.xlu0 %v2257, 106
  %v4243 = vpop.permute.xlu0 %4242
  %4244 = vrot.lane.b32.xlu0 %v2258, 106
  %v4245 = vpop.permute.xlu0 %4244
  %4246 = vrot.lane.b32.xlu0 %v2259, 106
  %v4247 = vpop.permute.xlu0 %4246
  %4248 = vrot.lane.b32.xlu0 %v2260, 106
  %v4249 = vpop.permute.xlu0 %4248
  %4250 = vrot.lane.b32.xlu0 %v2261, 106
  %v4251 = vpop.permute.xlu0 %4250
  %4252 = vrot.lane.b32.xlu0 %v2262, 106
  %v4253 = vpop.permute.xlu0 %4252
  %4254 = vrot.lane.b32.xlu0 %v2263, 106
  %v4255 = vpop.permute.xlu0 %4254
  %4256 = vrot.lane.b32.xlu0 %v2264, 106
  %v4257 = vpop.permute.xlu0 %4256
  %4258 = vrot.lane.b32.xlu0 %v2265, 106
  %v4259 = vpop.permute.xlu0 %4258
  %4260 = vrot.lane.b32.xlu0 %v2266, 106
  %v4261 = vpop.permute.xlu0 %4260
  %4262 = vrot.lane.b32.xlu0 %v2267, 106
  %v4263 = vpop.permute.xlu0 %4262
  %4264 = vrot.lane.b32.xlu0 %v2268, 106
  %v4265 = vpop.permute.xlu0 %4264
  %4266 = vrot.lane.b32.xlu0 %v2269, 106
  %v4267 = vpop.permute.xlu0 %4266
  %4268 = vrot.lane.b32.xlu0 %v2270, 106
  %v4269 = vpop.permute.xlu0 %4268
  %4270 = vrot.lane.b32.xlu0 %v2271, 106
  %v4271 = vpop.permute.xlu0 %4270
  %4272 = vrot.lane.b32.xlu0 %v2272, 106
  %v4273 = vpop.permute.xlu0 %4272
  %4274 = vrot.lane.b32.xlu0 %v2273, 106
  %v4275 = vpop.permute.xlu0 %4274
  %4276 = vrot.lane.b32.xlu0 %v2274, 106
  %v4277 = vpop.permute.xlu0 %4276
  %4278 = vrot.lane.b32.xlu0 %v2275, 106
  %v4279 = vpop.permute.xlu0 %4278
  %4280 = vrot.lane.b32.xlu0 %v2276, 106
  %v4281 = vpop.permute.xlu0 %4280
  %4282 = vrot.lane.b32.xlu0 %v2277, 106
  %v4283 = vpop.permute.xlu0 %4282
  %4284 = vrot.lane.b32.xlu0 %v2278, 106
  %v4285 = vpop.permute.xlu0 %4284
  %4286 = vrot.lane.b32.xlu0 %v2279, 106
  %v4287 = vpop.permute.xlu0 %4286
  %4288 = vrot.lane.b32.xlu0 %v2280, 106
  %v4289 = vpop.permute.xlu0 %4288
  %4290 = vrot.lane.b32.xlu0 %v2281, 106
  %v4291 = vpop.permute.xlu0 %4290
  %4292 = vrot.lane.b32.xlu0 %v2282, 106
  %v4293 = vpop.permute.xlu0 %4292
  %4294 = vrot.lane.b32.xlu0 %v2283, 106
  %v4295 = vpop.permute.xlu0 %4294
  %4296 = vrot.lane.b32.xlu0 %v2284, 106
  %v4297 = vpop.permute.xlu0 %4296
  %4298 = vrot.lane.b32.xlu0 %v2285, 106
  %v4299 = vpop.permute.xlu0 %4298
  %4300 = vrot.lane.b32.xlu0 %v2286, 106
  %v4301 = vpop.permute.xlu0 %4300
  %4302 = vrot.lane.b32.xlu0 %v2287, 106
  %v4303 = vpop.permute.xlu0 %4302
  %4368 = vrot.lane.b32.xlu0 %v2352, 106
  %v4369 = vpop.permute.xlu0 %4368
  %4370 = vrot.lane.b32.xlu0 %v2353, 106
  %v4371 = vpop.permute.xlu0 %4370
  %4372 = vrot.lane.b32.xlu0 %v2354, 106
  %v4373 = vpop.permute.xlu0 %4372
  %4374 = vrot.lane.b32.xlu0 %v2355, 106
  %v4375 = vpop.permute.xlu0 %4374
  %4376 = vrot.lane.b32.xlu0 %v2356, 106
  %v4377 = vpop.permute.xlu0 %4376
  %4378 = vrot.lane.b32.xlu0 %v2357, 106
  %v4379 = vpop.permute.xlu0 %4378
  %4380 = vrot.lane.b32.xlu0 %v2358, 106
  %v4381 = vpop.permute.xlu0 %4380
  %4382 = vrot.lane.b32.xlu0 %v2359, 106
  %v4383 = vpop.permute.xlu0 %4382
  %4384 = vrot.lane.b32.xlu0 %v2360, 106
  %v4385 = vpop.permute.xlu0 %4384
  %4386 = vrot.lane.b32.xlu0 %v2361, 106
  %v4387 = vpop.permute.xlu0 %4386
  %4388 = vrot.lane.b32.xlu0 %v2362, 106
  %v4389 = vpop.permute.xlu0 %4388
  %4390 = vrot.lane.b32.xlu0 %v2363, 106
  %v4391 = vpop.permute.xlu0 %4390
  %4392 = vrot.lane.b32.xlu0 %v2364, 106
  %v4393 = vpop.permute.xlu0 %4392
  %4394 = vrot.lane.b32.xlu0 %v2365, 106
  %v4395 = vpop.permute.xlu0 %4394
  %4396 = vrot.lane.b32.xlu0 %v2366, 106
  %v4397 = vpop.permute.xlu0 %4396
  %4398 = vrot.lane.b32.xlu0 %v2367, 106
  %v4399 = vpop.permute.xlu0 %4398
  %4400 = vrot.lane.b32.xlu0 %v2368, 106
  %v4401 = vpop.permute.xlu0 %4400
  %4402 = vrot.lane.b32.xlu0 %v2369, 106
  %v4403 = vpop.permute.xlu0 %4402
  %4404 = vrot.lane.b32.xlu0 %v2370, 106
  %v4405 = vpop.permute.xlu0 %4404
  %4406 = vrot.lane.b32.xlu0 %v2371, 106
  %v4407 = vpop.permute.xlu0 %4406
  %4408 = vrot.lane.b32.xlu0 %v2372, 106
  %v4409 = vpop.permute.xlu0 %4408
  %4410 = vrot.lane.b32.xlu0 %v2373, 106
  %v4411 = vpop.permute.xlu0 %4410
  %4412 = vrot.lane.b32.xlu0 %v2374, 106
  %v4413 = vpop.permute.xlu0 %4412
  %4414 = vrot.lane.b32.xlu0 %v2375, 106
  %v4415 = vpop.permute.xlu0 %4414
  %4416 = vrot.lane.b32.xlu0 %v2376, 106
  %v4417 = vpop.permute.xlu0 %4416
  %4418 = vrot.lane.b32.xlu0 %v2377, 106
  %v4419 = vpop.permute.xlu0 %4418
  %4420 = vrot.lane.b32.xlu0 %v2378, 106
  %v4421 = vpop.permute.xlu0 %4420
  %4422 = vrot.lane.b32.xlu0 %v2379, 106
  %v4423 = vpop.permute.xlu0 %4422
  %4424 = vrot.lane.b32.xlu0 %v2380, 106
  %v4425 = vpop.permute.xlu0 %4424
  %4426 = vrot.lane.b32.xlu0 %v2381, 106
  %v4427 = vpop.permute.xlu0 %4426
  %4428 = vrot.lane.b32.xlu0 %v2382, 106
  %v4429 = vpop.permute.xlu0 %4428
  %4430 = vrot.lane.b32.xlu0 %v2383, 106
  %v4431 = vpop.permute.xlu0 %4430
  %4496 = vrot.lane.b32.xlu0 %v2480, 109
  %v4497 = vpop.permute.xlu0 %4496
  %4498 = vrot.lane.b32.xlu0 %v2481, 109
  %v4499 = vpop.permute.xlu0 %4498
  %4500 = vrot.lane.b32.xlu0 %v2482, 109
  %v4501 = vpop.permute.xlu0 %4500
  %4502 = vrot.lane.b32.xlu0 %v2483, 109
  %v4503 = vpop.permute.xlu0 %4502
  %4504 = vrot.lane.b32.xlu0 %v2484, 109
  %v4505 = vpop.permute.xlu0 %4504
  %4506 = vrot.lane.b32.xlu0 %v2485, 109
  %v4507 = vpop.permute.xlu0 %4506
  %4508 = vrot.lane.b32.xlu0 %v2486, 109
  %v4509 = vpop.permute.xlu0 %4508
  %4510 = vrot.lane.b32.xlu0 %v2487, 109
  %v4511 = vpop.permute.xlu0 %4510
  %4512 = vrot.lane.b32.xlu0 %v2488, 109
  %v4513 = vpop.permute.xlu0 %4512
  %4514 = vrot.lane.b32.xlu0 %v2489, 109
  %v4515 = vpop.permute.xlu0 %4514
  %4516 = vrot.lane.b32.xlu0 %v2490, 109
  %v4517 = vpop.permute.xlu0 %4516
  %4518 = vrot.lane.b32.xlu0 %v2491, 109
  %v4519 = vpop.permute.xlu0 %4518
  %4520 = vrot.lane.b32.xlu0 %v2492, 109
  %v4521 = vpop.permute.xlu0 %4520
  %4522 = vrot.lane.b32.xlu0 %v2493, 109
  %v4523 = vpop.permute.xlu0 %4522
  %4524 = vrot.lane.b32.xlu0 %v2494, 109
  %v4525 = vpop.permute.xlu0 %4524
  %4526 = vrot.lane.b32.xlu0 %v2495, 109
  %v4527 = vpop.permute.xlu0 %4526
  %4528 = vrot.lane.b32.xlu0 %v2496, 109
  %v4529 = vpop.permute.xlu0 %4528
  %4530 = vrot.lane.b32.xlu0 %v2497, 109
  %v4531 = vpop.permute.xlu0 %4530
  %4532 = vrot.lane.b32.xlu0 %v2498, 109
  %v4533 = vpop.permute.xlu0 %4532
  %4534 = vrot.lane.b32.xlu0 %v2499, 109
  %v4535 = vpop.permute.xlu0 %4534
  %4536 = vrot.lane.b32.xlu0 %v2500, 109
  %v4537 = vpop.permute.xlu0 %4536
  %4538 = vrot.lane.b32.xlu0 %v2501, 109
  %v4539 = vpop.permute.xlu0 %4538
  %4540 = vrot.lane.b32.xlu0 %v2502, 109
  %v4541 = vpop.permute.xlu0 %4540
  %4542 = vrot.lane.b32.xlu0 %v2503, 109
  %v4543 = vpop.permute.xlu0 %4542
  %4544 = vrot.lane.b32.xlu0 %v2504, 109
  %v4545 = vpop.permute.xlu0 %4544
  %4546 = vrot.lane.b32.xlu0 %v2505, 109
  %v4547 = vpop.permute.xlu0 %4546
  %4548 = vrot.lane.b32.xlu0 %v2506, 109
  %v4549 = vpop.permute.xlu0 %4548
  %4550 = vrot.lane.b32.xlu0 %v2507, 109
  %v4551 = vpop.permute.xlu0 %4550
  %4552 = vrot.lane.b32.xlu0 %v2508, 109
  %v4553 = vpop.permute.xlu0 %4552
  %4554 = vrot.lane.b32.xlu0 %v2509, 109
  %v4555 = vpop.permute.xlu0 %4554
  %4556 = vrot.lane.b32.xlu0 %v2510, 109
  %v4557 = vpop.permute.xlu0 %4556
  %4558 = vrot.lane.b32.xlu0 %v2511, 109
  %v4559 = vpop.permute.xlu0 %4558
  %4624 = vrot.lane.b32.xlu0 %v2672, 108
  %v4625 = vpop.permute.xlu0 %4624
  %4626 = vrot.lane.b32.xlu0 %v2673, 108
  %v4627 = vpop.permute.xlu0 %4626
  %4628 = vrot.lane.b32.xlu0 %v2674, 108
  %v4629 = vpop.permute.xlu0 %4628
  %4630 = vrot.lane.b32.xlu0 %v2675, 108
  %v4631 = vpop.permute.xlu0 %4630
  %4632 = vrot.lane.b32.xlu0 %v2676, 108
  %v4633 = vpop.permute.xlu0 %4632
  %4634 = vrot.lane.b32.xlu0 %v2677, 108
  %v4635 = vpop.permute.xlu0 %4634
  %4636 = vrot.lane.b32.xlu0 %v2678, 108
  %v4637 = vpop.permute.xlu0 %4636
  %4638 = vrot.lane.b32.xlu0 %v2679, 108
  %v4639 = vpop.permute.xlu0 %4638
  %4640 = vrot.lane.b32.xlu0 %v2680, 108
  %v4641 = vpop.permute.xlu0 %4640
  %4642 = vrot.lane.b32.xlu0 %v2681, 108
  %v4643 = vpop.permute.xlu0 %4642
  %4644 = vrot.lane.b32.xlu0 %v2682, 108
  %v4645 = vpop.permute.xlu0 %4644
  %4646 = vrot.lane.b32.xlu0 %v2683, 108
  %v4647 = vpop.permute.xlu0 %4646
  %4648 = vrot.lane.b32.xlu0 %v2684, 108
  %v4649 = vpop.permute.xlu0 %4648
  %4650 = vrot.lane.b32.xlu0 %v2685, 108
  %v4651 = vpop.permute.xlu0 %4650
  %4652 = vrot.lane.b32.xlu0 %v2686, 108
  %v4653 = vpop.permute.xlu0 %4652
  %4654 = vrot.lane.b32.xlu0 %v2687, 108
  %v4655 = vpop.permute.xlu0 %4654
  %4656 = vrot.lane.b32.xlu0 %v2688, 108
  %v4657 = vpop.permute.xlu0 %4656
  %4658 = vrot.lane.b32.xlu0 %v2689, 108
  %v4659 = vpop.permute.xlu0 %4658
  %4660 = vrot.lane.b32.xlu0 %v2690, 108
  %v4661 = vpop.permute.xlu0 %4660
  %4662 = vrot.lane.b32.xlu0 %v2691, 108
  %v4663 = vpop.permute.xlu0 %4662
  %4664 = vrot.lane.b32.xlu0 %v2692, 108
  %v4665 = vpop.permute.xlu0 %4664
  %4666 = vrot.lane.b32.xlu0 %v2693, 108
  %v4667 = vpop.permute.xlu0 %4666
  %4668 = vrot.lane.b32.xlu0 %v2694, 108
  %v4669 = vpop.permute.xlu0 %4668
  %4670 = vrot.lane.b32.xlu0 %v2695, 108
  %v4671 = vpop.permute.xlu0 %4670
  %4672 = vrot.lane.b32.xlu0 %v2696, 108
  %v4673 = vpop.permute.xlu0 %4672
  %4674 = vrot.lane.b32.xlu0 %v2697, 108
  %v4675 = vpop.permute.xlu0 %4674
  %4676 = vrot.lane.b32.xlu0 %v2698, 108
  %v4677 = vpop.permute.xlu0 %4676
  %4678 = vrot.lane.b32.xlu0 %v2699, 108
  %v4679 = vpop.permute.xlu0 %4678
  %4680 = vrot.lane.b32.xlu0 %v2700, 108
  %v4681 = vpop.permute.xlu0 %4680
  %4682 = vrot.lane.b32.xlu0 %v2701, 108
  %v4683 = vpop.permute.xlu0 %4682
  %4684 = vrot.lane.b32.xlu0 %v2702, 108
  %v4685 = vpop.permute.xlu0 %4684
  %4686 = vrot.lane.b32.xlu0 %v2703, 108
  %v4687 = vpop.permute.xlu0 %4686
  %4752 = vrot.lane.b32.xlu0 %v2928, 111
  %v4753 = vpop.permute.xlu0 %4752
  %4754 = vrot.lane.b32.xlu0 %v2929, 111
  %v4755 = vpop.permute.xlu0 %4754
  %4756 = vrot.lane.b32.xlu0 %v2930, 111
  %v4757 = vpop.permute.xlu0 %4756
  %4758 = vrot.lane.b32.xlu0 %v2931, 111
  %v4759 = vpop.permute.xlu0 %4758
  %4760 = vrot.lane.b32.xlu0 %v2932, 111
  %v4761 = vpop.permute.xlu0 %4760
  %4762 = vrot.lane.b32.xlu0 %v2933, 111
  %v4763 = vpop.permute.xlu0 %4762
  %4764 = vrot.lane.b32.xlu0 %v2934, 111
  %v4765 = vpop.permute.xlu0 %4764
  %4766 = vrot.lane.b32.xlu0 %v2935, 111
  %v4767 = vpop.permute.xlu0 %4766
  %4768 = vrot.lane.b32.xlu0 %v2936, 111
  %v4769 = vpop.permute.xlu0 %4768
  %4770 = vrot.lane.b32.xlu0 %v2937, 111
  %v4771 = vpop.permute.xlu0 %4770
  %4772 = vrot.lane.b32.xlu0 %v2938, 111
  %v4773 = vpop.permute.xlu0 %4772
  %4774 = vrot.lane.b32.xlu0 %v2939, 111
  %v4775 = vpop.permute.xlu0 %4774
  %4776 = vrot.lane.b32.xlu0 %v2940, 111
  %v4777 = vpop.permute.xlu0 %4776
  %4778 = vrot.lane.b32.xlu0 %v2941, 111
  %v4779 = vpop.permute.xlu0 %4778
  %4780 = vrot.lane.b32.xlu0 %v2942, 111
  %v4781 = vpop.permute.xlu0 %4780
  %4782 = vrot.lane.b32.xlu0 %v2943, 111
  %v4783 = vpop.permute.xlu0 %4782
  %4784 = vrot.lane.b32.xlu0 %v2944, 111
  %v4785 = vpop.permute.xlu0 %4784
  %4786 = vrot.lane.b32.xlu0 %v2945, 111
  %v4787 = vpop.permute.xlu0 %4786
  %4788 = vrot.lane.b32.xlu0 %v2946, 111
  %v4789 = vpop.permute.xlu0 %4788
  %4790 = vrot.lane.b32.xlu0 %v2947, 111
  %v4791 = vpop.permute.xlu0 %4790
  %4792 = vrot.lane.b32.xlu0 %v2948, 111
  %v4793 = vpop.permute.xlu0 %4792
  %4794 = vrot.lane.b32.xlu0 %v2949, 111
  %v4795 = vpop.permute.xlu0 %4794
  %4796 = vrot.lane.b32.xlu0 %v2950, 111
  %v4797 = vpop.permute.xlu0 %4796
  %4798 = vrot.lane.b32.xlu0 %v2951, 111
  %v4799 = vpop.permute.xlu0 %4798
  %4800 = vrot.lane.b32.xlu0 %v2952, 111
  %v4801 = vpop.permute.xlu0 %4800
  %4802 = vrot.lane.b32.xlu0 %v2953, 111
  %v4803 = vpop.permute.xlu0 %4802
  %4804 = vrot.lane.b32.xlu0 %v2954, 111
  %v4805 = vpop.permute.xlu0 %4804
  %4806 = vrot.lane.b32.xlu0 %v2955, 111
  %v4807 = vpop.permute.xlu0 %4806
  %4808 = vrot.lane.b32.xlu0 %v2956, 111
  %v4809 = vpop.permute.xlu0 %4808
  %4810 = vrot.lane.b32.xlu0 %v2957, 111
  %v4811 = vpop.permute.xlu0 %4810
  %4812 = vrot.lane.b32.xlu0 %v2958, 111
  %v4813 = vpop.permute.xlu0 %4812
  %4814 = vrot.lane.b32.xlu0 %v2959, 111
  %v4815 = vpop.permute.xlu0 %4814
  %vm4848 = vcmask 7168
  %v4849 = vsel %vm4848, 0.2820948, %v2993
  %v4850 = vsel %vm4848, 0.2820948, %v2995
  %v4851 = vsel %vm4848, 0.2820948, %v2997
  %v4852 = vsel %vm4848, 0.2820948, %v2999
  %v4853 = vsel %vm4848, 0.2820948, %v3001
  %v4854 = vsel %vm4848, 0.2820948, %v3003
  %v4855 = vsel %vm4848, 0.2820948, %v3005
  %v4856 = vsel %vm4848, 0.2820948, %v3007
  %v4857 = vsel %vm4848, 0.2820948, %v3009
  %v4858 = vsel %vm4848, 0.2820948, %v3011
  %v4859 = vsel %vm4848, 0.2820948, %v3013
  %v4860 = vsel %vm4848, 0.2820948, %v3015
  %v4861 = vsel %vm4848, 0.2820948, %v3017
  %v4862 = vsel %vm4848, 0.2820948, %v3019
  %v4863 = vsel %vm4848, 0.2820948, %v3021
  %v4864 = vsel %vm4848, 0.2820948, %v3023
  %v4865 = vsel %vm4848, 0.2820948, %v3025
  %v4866 = vsel %vm4848, 0.2820948, %v3027
  %v4867 = vsel %vm4848, 0.2820948, %v3029
  %v4868 = vsel %vm4848, 0.2820948, %v3031
  %v4869 = vsel %vm4848, 0.2820948, %v3033
  %v4870 = vsel %vm4848, 0.2820948, %v3035
  %v4871 = vsel %vm4848, 0.2820948, %v3037
  %v4872 = vsel %vm4848, 0.2820948, %v3039
  %v4873 = vsel %vm4848, 0.2820948, %v3041
  %v4874 = vsel %vm4848, 0.2820948, %v3043
  %v4875 = vsel %vm4848, 0.2820948, %v3045
  %v4876 = vsel %vm4848, 0.2820948, %v3047
  %v4877 = vsel %vm4848, 0.2820948, %v3049
  %v4878 = vsel %vm4848, 0.2820948, %v3051
  %v4879 = vsel %vm4848, 0.2820948, %v3053
  %v4880 = vsel %vm4848, 0.2820948, %v3055
  %vm4881 = vcmask 15360
  %v4882 = vsel %vm4881, %v4849, %v3121
  %v4883 = vsel %vm4881, %v4850, %v3123
  %v4884 = vsel %vm4881, %v4851, %v3125
  %v4885 = vsel %vm4881, %v4852, %v3127
  %v4886 = vsel %vm4881, %v4853, %v3129
  %v4887 = vsel %vm4881, %v4854, %v3131
  %v4888 = vsel %vm4881, %v4855, %v3133
  %v4889 = vsel %vm4881, %v4856, %v3135
  %v4890 = vsel %vm4881, %v4857, %v3137
  %v4891 = vsel %vm4881, %v4858, %v3139
  %v4892 = vsel %vm4881, %v4859, %v3141
  %v4893 = vsel %vm4881, %v4860, %v3143
  %v4894 = vsel %vm4881, %v4861, %v3145
  %v4895 = vsel %vm4881, %v4862, %v3147
  %v4896 = vsel %vm4881, %v4863, %v3149
  %v4897 = vsel %vm4881, %v4864, %v3151
  %v4898 = vsel %vm4881, %v4865, %v3153
  %v4899 = vsel %vm4881, %v4866, %v3155
  %v4900 = vsel %vm4881, %v4867, %v3157
  %v4901 = vsel %vm4881, %v4868, %v3159
  %v4902 = vsel %vm4881, %v4869, %v3161
  %v4903 = vsel %vm4881, %v4870, %v3163
  %v4904 = vsel %vm4881, %v4871, %v3165
  %v4905 = vsel %vm4881, %v4872, %v3167
  %v4906 = vsel %vm4881, %v4873, %v3169
  %v4907 = vsel %vm4881, %v4874, %v3171
  %v4908 = vsel %vm4881, %v4875, %v3173
  %v4909 = vsel %vm4881, %v4876, %v3175
  %v4910 = vsel %vm4881, %v4877, %v3177
  %v4911 = vsel %vm4881, %v4878, %v3179
  %v4912 = vsel %vm4881, %v4879, %v3181
  %v4913 = vsel %vm4881, %v4880, %v3183
  %v4914 = vsel %vm815, %v4882, %v3217
  %v4915 = vsel %vm815, %v4883, %v3219
  %v4916 = vsel %vm815, %v4884, %v3221
  %v4917 = vsel %vm815, %v4885, %v3223
  %v4918 = vsel %vm815, %v4886, %v3225
  %v4919 = vsel %vm815, %v4887, %v3227
  %v4920 = vsel %vm815, %v4888, %v3229
  %v4921 = vsel %vm815, %v4889, %v3231
  %v4922 = vsel %vm815, %v4890, %v3233
  %v4923 = vsel %vm815, %v4891, %v3235
  %v4924 = vsel %vm815, %v4892, %v3237
  %v4925 = vsel %vm815, %v4893, %v3239
  %v4926 = vsel %vm815, %v4894, %v3241
  %v4927 = vsel %vm815, %v4895, %v3243
  %v4928 = vsel %vm815, %v4896, %v3245
  %v4929 = vsel %vm815, %v4897, %v3247
  %v4930 = vsel %vm815, %v4898, %v3249
  %v4931 = vsel %vm815, %v4899, %v3251
  %v4932 = vsel %vm815, %v4900, %v3253
  %v4933 = vsel %vm815, %v4901, %v3255
  %v4934 = vsel %vm815, %v4902, %v3257
  %v4935 = vsel %vm815, %v4903, %v3259
  %v4936 = vsel %vm815, %v4904, %v3261
  %v4937 = vsel %vm815, %v4905, %v3263
  %v4938 = vsel %vm815, %v4906, %v3265
  %v4939 = vsel %vm815, %v4907, %v3267
  %v4940 = vsel %vm815, %v4908, %v3269
  %v4941 = vsel %vm815, %v4909, %v3271
  %v4942 = vsel %vm815, %v4910, %v3273
  %v4943 = vsel %vm815, %v4911, %v3275
  %v4944 = vsel %vm815, %v4912, %v3277
  %v4945 = vsel %vm815, %v4913, %v3279
  %vm4946 = vcmask 31744
  %v4947 = vsel %vm4946, %v4914, %v3345
  %v4948 = vsel %vm4946, %v4915, %v3347
  %v4949 = vsel %vm4946, %v4916, %v3349
  %v4950 = vsel %vm4946, %v4917, %v3351
  %v4951 = vsel %vm4946, %v4918, %v3353
  %v4952 = vsel %vm4946, %v4919, %v3355
  %v4953 = vsel %vm4946, %v4920, %v3357
  %v4954 = vsel %vm4946, %v4921, %v3359
  %v4955 = vsel %vm4946, %v4922, %v3361
  %v4956 = vsel %vm4946, %v4923, %v3363
  %v4957 = vsel %vm4946, %v4924, %v3365
  %v4958 = vsel %vm4946, %v4925, %v3367
  %v4959 = vsel %vm4946, %v4926, %v3369
  %v4960 = vsel %vm4946, %v4927, %v3371
  %v4961 = vsel %vm4946, %v4928, %v3373
  %v4962 = vsel %vm4946, %v4929, %v3375
  %v4963 = vsel %vm4946, %v4930, %v3377
  %v4964 = vsel %vm4946, %v4931, %v3379
  %v4965 = vsel %vm4946, %v4932, %v3381
  %v4966 = vsel %vm4946, %v4933, %v3383
  %v4967 = vsel %vm4946, %v4934, %v3385
  %v4968 = vsel %vm4946, %v4935, %v3387
  %v4969 = vsel %vm4946, %v4936, %v3389
  %v4970 = vsel %vm4946, %v4937, %v3391
  %v4971 = vsel %vm4946, %v4938, %v3393
  %v4972 = vsel %vm4946, %v4939, %v3395
  %v4973 = vsel %vm4946, %v4940, %v3397
  %v4974 = vsel %vm4946, %v4941, %v3399
  %v4975 = vsel %vm4946, %v4942, %v3401
  %v4976 = vsel %vm4946, %v4943, %v3403
  %v4977 = vsel %vm4946, %v4944, %v3405
  %v4978 = vsel %vm4946, %v4945, %v3407
  %vm4979 = vcmask 39936
  %v4980 = vsel %vm4979, %v4947, %v3473
  %v4981 = vsel %vm4979, %v4948, %v3475
  %v4982 = vsel %vm4979, %v4949, %v3477
  %v4983 = vsel %vm4979, %v4950, %v3479
  %v4984 = vsel %vm4979, %v4951, %v3481
  %v4985 = vsel %vm4979, %v4952, %v3483
  %v4986 = vsel %vm4979, %v4953, %v3485
  %v4987 = vsel %vm4979, %v4954, %v3487
  %v4988 = vsel %vm4979, %v4955, %v3489
  %v4989 = vsel %vm4979, %v4956, %v3491
  %v4990 = vsel %vm4979, %v4957, %v3493
  %v4991 = vsel %vm4979, %v4958, %v3495
  %v4992 = vsel %vm4979, %v4959, %v3497
  %v4993 = vsel %vm4979, %v4960, %v3499
  %v4994 = vsel %vm4979, %v4961, %v3501
  %v4995 = vsel %vm4979, %v4962, %v3503
  %v4996 = vsel %vm4979, %v4963, %v3505
  %v4997 = vsel %vm4979, %v4964, %v3507
  %v4998 = vsel %vm4979, %v4965, %v3509
  %v4999 = vsel %vm4979, %v4966, %v3511
  %v5000 = vsel %vm4979, %v4967, %v3513
  %v5001 = vsel %vm4979, %v4968, %v3515
  %v5002 = vsel %vm4979, %v4969, %v3517
  %v5003 = vsel %vm4979, %v4970, %v3519
  %v5004 = vsel %vm4979, %v4971, %v3521
  %v5005 = vsel %vm4979, %v4972, %v3523
  %v5006 = vsel %vm4979, %v4973, %v3525
  %v5007 = vsel %vm4979, %v4974, %v3527
  %v5008 = vsel %vm4979, %v4975, %v3529
  %v5009 = vsel %vm4979, %v4976, %v3531
  %v5010 = vsel %vm4979, %v4977, %v3533
  %v5011 = vsel %vm4979, %v4978, %v3535
  %vm5012 = vcmask 48128
  %v5013 = vsel %vm5012, %v4980, %v3601
  %v5014 = vsel %vm5012, %v4981, %v3603
  %v5015 = vsel %vm5012, %v4982, %v3605
  %v5016 = vsel %vm5012, %v4983, %v3607
  %v5017 = vsel %vm5012, %v4984, %v3609
  %v5018 = vsel %vm5012, %v4985, %v3611
  %v5019 = vsel %vm5012, %v4986, %v3613
  %v5020 = vsel %vm5012, %v4987, %v3615
  %v5021 = vsel %vm5012, %v4988, %v3617
  %v5022 = vsel %vm5012, %v4989, %v3619
  %v5023 = vsel %vm5012, %v4990, %v3621
  %v5024 = vsel %vm5012, %v4991, %v3623
  %v5025 = vsel %vm5012, %v4992, %v3625
  %v5026 = vsel %vm5012, %v4993, %v3627
  %v5027 = vsel %vm5012, %v4994, %v3629
  %v5028 = vsel %vm5012, %v4995, %v3631
  %v5029 = vsel %vm5012, %v4996, %v3633
  %v5030 = vsel %vm5012, %v4997, %v3635
  %v5031 = vsel %vm5012, %v4998, %v3637
  %v5032 = vsel %vm5012, %v4999, %v3639
  %v5033 = vsel %vm5012, %v5000, %v3641
  %v5034 = vsel %vm5012, %v5001, %v3643
  %v5035 = vsel %vm5012, %v5002, %v3645
  %v5036 = vsel %vm5012, %v5003, %v3647
  %v5037 = vsel %vm5012, %v5004, %v3649
  %v5038 = vsel %vm5012, %v5005, %v3651
  %v5039 = vsel %vm5012, %v5006, %v3653
  %v5040 = vsel %vm5012, %v5007, %v3655
  %v5041 = vsel %vm5012, %v5008, %v3657
  %v5042 = vsel %vm5012, %v5009, %v3659
  %v5043 = vsel %vm5012, %v5010, %v3661
  %v5044 = vsel %vm5012, %v5011, %v3663
  %vm5045 = vcmask 56320
  %v5046 = vsel %vm5045, %v5013, %v3729
  %v5047 = vsel %vm5045, %v5014, %v3731
  %v5048 = vsel %vm5045, %v5015, %v3733
  %v5049 = vsel %vm5045, %v5016, %v3735
  %v5050 = vsel %vm5045, %v5017, %v3737
  %v5051 = vsel %vm5045, %v5018, %v3739
  %v5052 = vsel %vm5045, %v5019, %v3741
  %v5053 = vsel %vm5045, %v5020, %v3743
  %v5054 = vsel %vm5045, %v5021, %v3745
  %v5055 = vsel %vm5045, %v5022, %v3747
  %v5056 = vsel %vm5045, %v5023, %v3749
  %v5057 = vsel %vm5045, %v5024, %v3751
  %v5058 = vsel %vm5045, %v5025, %v3753
  %v5059 = vsel %vm5045, %v5026, %v3755
  %v5060 = vsel %vm5045, %v5027, %v3757
  %v5061 = vsel %vm5045, %v5028, %v3759
  %v5062 = vsel %vm5045, %v5029, %v3761
  %v5063 = vsel %vm5045, %v5030, %v3763
  %v5064 = vsel %vm5045, %v5031, %v3765
  %v5065 = vsel %vm5045, %v5032, %v3767
  %v5066 = vsel %vm5045, %v5033, %v3769
  %v5067 = vsel %vm5045, %v5034, %v3771
  %v5068 = vsel %vm5045, %v5035, %v3773
  %v5069 = vsel %vm5045, %v5036, %v3775
  %v5070 = vsel %vm5045, %v5037, %v3777
  %v5071 = vsel %vm5045, %v5038, %v3779
  %v5072 = vsel %vm5045, %v5039, %v3781
  %v5073 = vsel %vm5045, %v5040, %v3783
  %v5074 = vsel %vm5045, %v5041, %v3785
  %v5075 = vsel %vm5045, %v5042, %v3787
  %v5076 = vsel %vm5045, %v5043, %v3789
  %v5077 = vsel %vm5045, %v5044, %v3791
  %vm5078 = vcmask 64512
  %v5079 = vsel %vm5078, %v5046, %v3857
  %v5080 = vsel %vm5078, %v5047, %v3859
  %v5081 = vsel %vm5078, %v5048, %v3861
  %v5082 = vsel %vm5078, %v5049, %v3863
  %v5083 = vsel %vm5078, %v5050, %v3865
  %v5084 = vsel %vm5078, %v5051, %v3867
  %v5085 = vsel %vm5078, %v5052, %v3869
  %v5086 = vsel %vm5078, %v5053, %v3871
  %v5087 = vsel %vm5078, %v5054, %v3873
  %v5088 = vsel %vm5078, %v5055, %v3875
  %v5089 = vsel %vm5078, %v5056, %v3877
  %v5090 = vsel %vm5078, %v5057, %v3879
  %v5091 = vsel %vm5078, %v5058, %v3881
  %v5092 = vsel %vm5078, %v5059, %v3883
  %v5093 = vsel %vm5078, %v5060, %v3885
  %v5094 = vsel %vm5078, %v5061, %v3887
  %v5095 = vsel %vm5078, %v5062, %v3889
  %v5096 = vsel %vm5078, %v5063, %v3891
  %v5097 = vsel %vm5078, %v5064, %v3893
  %v5098 = vsel %vm5078, %v5065, %v3895
  %v5099 = vsel %vm5078, %v5066, %v3897
  %v5100 = vsel %vm5078, %v5067, %v3899
  %v5101 = vsel %vm5078, %v5068, %v3901
  %v5102 = vsel %vm5078, %v5069, %v3903
  %v5103 = vsel %vm5078, %v5070, %v3905
  %v5104 = vsel %vm5078, %v5071, %v3907
  %v5105 = vsel %vm5078, %v5072, %v3909
  %v5106 = vsel %vm5078, %v5073, %v3911
  %v5107 = vsel %vm5078, %v5074, %v3913
  %v5108 = vsel %vm5078, %v5075, %v3915
  %v5109 = vsel %vm5078, %v5076, %v3917
  %v5110 = vsel %vm5078, %v5077, %v3919
  %vm5111 = vcmask 72704
  %v5112 = vsel %vm5111, %v5079, %v3985
  %v5113 = vsel %vm5111, %v5080, %v3987
  %v5114 = vsel %vm5111, %v5081, %v3989
  %v5115 = vsel %vm5111, %v5082, %v3991
  %v5116 = vsel %vm5111, %v5083, %v3993
  %v5117 = vsel %vm5111, %v5084, %v3995
  %v5118 = vsel %vm5111, %v5085, %v3997
  %v5119 = vsel %vm5111, %v5086, %v3999
  %v5120 = vsel %vm5111, %v5087, %v4001
  %v5121 = vsel %vm5111, %v5088, %v4003
  %v5122 = vsel %vm5111, %v5089, %v4005
  %v5123 = vsel %vm5111, %v5090, %v4007
  %v5124 = vsel %vm5111, %v5091, %v4009
  %v5125 = vsel %vm5111, %v5092, %v4011
  %v5126 = vsel %vm5111, %v5093, %v4013
  %v5127 = vsel %vm5111, %v5094, %v4015
  %v5128 = vsel %vm5111, %v5095, %v4017
  %v5129 = vsel %vm5111, %v5096, %v4019
  %v5130 = vsel %vm5111, %v5097, %v4021
  %v5131 = vsel %vm5111, %v5098, %v4023
  %v5132 = vsel %vm5111, %v5099, %v4025
  %v5133 = vsel %vm5111, %v5100, %v4027
  %v5134 = vsel %vm5111, %v5101, %v4029
  %v5135 = vsel %vm5111, %v5102, %v4031
  %v5136 = vsel %vm5111, %v5103, %v4033
  %v5137 = vsel %vm5111, %v5104, %v4035
  %v5138 = vsel %vm5111, %v5105, %v4037
  %v5139 = vsel %vm5111, %v5106, %v4039
  %v5140 = vsel %vm5111, %v5107, %v4041
  %v5141 = vsel %vm5111, %v5108, %v4043
  %v5142 = vsel %vm5111, %v5109, %v4045
  %v5143 = vsel %vm5111, %v5110, %v4047
  %vm5144 = vcmask 80896
  %v5145 = vsel %vm5144, %v5112, %v4113
  %v5146 = vsel %vm5144, %v5113, %v4115
  %v5147 = vsel %vm5144, %v5114, %v4117
  %v5148 = vsel %vm5144, %v5115, %v4119
  %v5149 = vsel %vm5144, %v5116, %v4121
  %v5150 = vsel %vm5144, %v5117, %v4123
  %v5151 = vsel %vm5144, %v5118, %v4125
  %v5152 = vsel %vm5144, %v5119, %v4127
  %v5153 = vsel %vm5144, %v5120, %v4129
  %v5154 = vsel %vm5144, %v5121, %v4131
  %v5155 = vsel %vm5144, %v5122, %v4133
  %v5156 = vsel %vm5144, %v5123, %v4135
  %v5157 = vsel %vm5144, %v5124, %v4137
  %v5158 = vsel %vm5144, %v5125, %v4139
  %v5159 = vsel %vm5144, %v5126, %v4141
  %v5160 = vsel %vm5144, %v5127, %v4143
  %v5161 = vsel %vm5144, %v5128, %v4145
  %v5162 = vsel %vm5144, %v5129, %v4147
  %v5163 = vsel %vm5144, %v5130, %v4149
  %v5164 = vsel %vm5144, %v5131, %v4151
  %v5165 = vsel %vm5144, %v5132, %v4153
  %v5166 = vsel %vm5144, %v5133, %v4155
  %v5167 = vsel %vm5144, %v5134, %v4157
  %v5168 = vsel %vm5144, %v5135, %v4159
  %v5169 = vsel %vm5144, %v5136, %v4161
  %v5170 = vsel %vm5144, %v5137, %v4163
  %v5171 = vsel %vm5144, %v5138, %v4165
  %v5172 = vsel %vm5144, %v5139, %v4167
  %v5173 = vsel %vm5144, %v5140, %v4169
  %v5174 = vsel %vm5144, %v5141, %v4171
  %v5175 = vsel %vm5144, %v5142, %v4173
  %v5176 = vsel %vm5144, %v5143, %v4175
  %vm5177 = vcmask 89088
  %v5178 = vsel %vm5177, %v5145, %v4241
  %v5179 = vsel %vm5177, %v5146, %v4243
  %v5180 = vsel %vm5177, %v5147, %v4245
  %v5181 = vsel %vm5177, %v5148, %v4247
  %v5182 = vsel %vm5177, %v5149, %v4249
  %v5183 = vsel %vm5177, %v5150, %v4251
  %v5184 = vsel %vm5177, %v5151, %v4253
  %v5185 = vsel %vm5177, %v5152, %v4255
  %v5186 = vsel %vm5177, %v5153, %v4257
  %v5187 = vsel %vm5177, %v5154, %v4259
  %v5188 = vsel %vm5177, %v5155, %v4261
  %v5189 = vsel %vm5177, %v5156, %v4263
  %v5190 = vsel %vm5177, %v5157, %v4265
  %v5191 = vsel %vm5177, %v5158, %v4267
  %v5192 = vsel %vm5177, %v5159, %v4269
  %v5193 = vsel %vm5177, %v5160, %v4271
  %v5194 = vsel %vm5177, %v5161, %v4273
  %v5195 = vsel %vm5177, %v5162, %v4275
  %v5196 = vsel %vm5177, %v5163, %v4277
  %v5197 = vsel %vm5177, %v5164, %v4279
  %v5198 = vsel %vm5177, %v5165, %v4281
  %v5199 = vsel %vm5177, %v5166, %v4283
  %v5200 = vsel %vm5177, %v5167, %v4285
  %v5201 = vsel %vm5177, %v5168, %v4287
  %v5202 = vsel %vm5177, %v5169, %v4289
  %v5203 = vsel %vm5177, %v5170, %v4291
  %v5204 = vsel %vm5177, %v5171, %v4293
  %v5205 = vsel %vm5177, %v5172, %v4295
  %v5206 = vsel %vm5177, %v5173, %v4297
  %v5207 = vsel %vm5177, %v5174, %v4299
  %v5208 = vsel %vm5177, %v5175, %v4301
  %v5209 = vsel %vm5177, %v5176, %v4303
  %vm5210 = vcmask 97280
  %v5211 = vsel %vm5210, %v5178, %v4369
  %v5212 = vsel %vm5210, %v5179, %v4371
  %v5213 = vsel %vm5210, %v5180, %v4373
  %v5214 = vsel %vm5210, %v5181, %v4375
  %v5215 = vsel %vm5210, %v5182, %v4377
  %v5216 = vsel %vm5210, %v5183, %v4379
  %v5217 = vsel %vm5210, %v5184, %v4381
  %v5218 = vsel %vm5210, %v5185, %v4383
  %v5219 = vsel %vm5210, %v5186, %v4385
  %v5220 = vsel %vm5210, %v5187, %v4387
  %v5221 = vsel %vm5210, %v5188, %v4389
  %v5222 = vsel %vm5210, %v5189, %v4391
  %v5223 = vsel %vm5210, %v5190, %v4393
  %v5224 = vsel %vm5210, %v5191, %v4395
  %v5225 = vsel %vm5210, %v5192, %v4397
  %v5226 = vsel %vm5210, %v5193, %v4399
  %v5227 = vsel %vm5210, %v5194, %v4401
  %v5228 = vsel %vm5210, %v5195, %v4403
  %v5229 = vsel %vm5210, %v5196, %v4405
  %v5230 = vsel %vm5210, %v5197, %v4407
  %v5231 = vsel %vm5210, %v5198, %v4409
  %v5232 = vsel %vm5210, %v5199, %v4411
  %v5233 = vsel %vm5210, %v5200, %v4413
  %v5234 = vsel %vm5210, %v5201, %v4415
  %v5235 = vsel %vm5210, %v5202, %v4417
  %v5236 = vsel %vm5210, %v5203, %v4419
  %v5237 = vsel %vm5210, %v5204, %v4421
  %v5238 = vsel %vm5210, %v5205, %v4423
  %v5239 = vsel %vm5210, %v5206, %v4425
  %v5240 = vsel %vm5210, %v5207, %v4427
  %v5241 = vsel %vm5210, %v5208, %v4429
  %v5242 = vsel %vm5210, %v5209, %v4431
  %vm5243 = vcmask 105472
  %v5244 = vsel %vm5243, %v5211, %v4497
  %v5245 = vsel %vm5243, %v5212, %v4499
  %v5246 = vsel %vm5243, %v5213, %v4501
  %v5247 = vsel %vm5243, %v5214, %v4503
  %v5248 = vsel %vm5243, %v5215, %v4505
  %v5249 = vsel %vm5243, %v5216, %v4507
  %v5250 = vsel %vm5243, %v5217, %v4509
  %v5251 = vsel %vm5243, %v5218, %v4511
  %v5252 = vsel %vm5243, %v5219, %v4513
  %v5253 = vsel %vm5243, %v5220, %v4515
  %v5254 = vsel %vm5243, %v5221, %v4517
  %v5255 = vsel %vm5243, %v5222, %v4519
  %v5256 = vsel %vm5243, %v5223, %v4521
  %v5257 = vsel %vm5243, %v5224, %v4523
  %v5258 = vsel %vm5243, %v5225, %v4525
  %v5259 = vsel %vm5243, %v5226, %v4527
  %v5260 = vsel %vm5243, %v5227, %v4529
  %v5261 = vsel %vm5243, %v5228, %v4531
  %v5262 = vsel %vm5243, %v5229, %v4533
  %v5263 = vsel %vm5243, %v5230, %v4535
  %v5264 = vsel %vm5243, %v5231, %v4537
  %v5265 = vsel %vm5243, %v5232, %v4539
  %v5266 = vsel %vm5243, %v5233, %v4541
  %v5267 = vsel %vm5243, %v5234, %v4543
  %v5268 = vsel %vm5243, %v5235, %v4545
  %v5269 = vsel %vm5243, %v5236, %v4547
  %v5270 = vsel %vm5243, %v5237, %v4549
  %v5271 = vsel %vm5243, %v5238, %v4551
  %v5272 = vsel %vm5243, %v5239, %v4553
  %v5273 = vsel %vm5243, %v5240, %v4555
  %v5274 = vsel %vm5243, %v5241, %v4557
  %v5275 = vsel %vm5243, %v5242, %v4559
  %vm5276 = vcmask 113664
  %v5277 = vsel %vm5276, %v5244, %v4625
  %v5278 = vsel %vm5276, %v5245, %v4627
  %v5279 = vsel %vm5276, %v5246, %v4629
  %v5280 = vsel %vm5276, %v5247, %v4631
  %v5281 = vsel %vm5276, %v5248, %v4633
  %v5282 = vsel %vm5276, %v5249, %v4635
  %v5283 = vsel %vm5276, %v5250, %v4637
  %v5284 = vsel %vm5276, %v5251, %v4639
  %v5285 = vsel %vm5276, %v5252, %v4641
  %v5286 = vsel %vm5276, %v5253, %v4643
  %v5287 = vsel %vm5276, %v5254, %v4645
  %v5288 = vsel %vm5276, %v5255, %v4647
  %v5289 = vsel %vm5276, %v5256, %v4649
  %v5290 = vsel %vm5276, %v5257, %v4651
  %v5291 = vsel %vm5276, %v5258, %v4653
  %v5292 = vsel %vm5276, %v5259, %v4655
  %v5293 = vsel %vm5276, %v5260, %v4657
  %v5294 = vsel %vm5276, %v5261, %v4659
  %v5295 = vsel %vm5276, %v5262, %v4661
  %v5296 = vsel %vm5276, %v5263, %v4663
  %v5297 = vsel %vm5276, %v5264, %v4665
  %v5298 = vsel %vm5276, %v5265, %v4667
  %v5299 = vsel %vm5276, %v5266, %v4669
  %v5300 = vsel %vm5276, %v5267, %v4671
  %v5301 = vsel %vm5276, %v5268, %v4673
  %v5302 = vsel %vm5276, %v5269, %v4675
  %v5303 = vsel %vm5276, %v5270, %v4677
  %v5304 = vsel %vm5276, %v5271, %v4679
  %v5305 = vsel %vm5276, %v5272, %v4681
  %v5306 = vsel %vm5276, %v5273, %v4683
  %v5307 = vsel %vm5276, %v5274, %v4685
  %v5308 = vsel %vm5276, %v5275, %v4687
  %vm5309 = vcmask 121856
  %v5310 = vsel %vm5309, %v5277, %v4753
  %v5311 = vsel %vm5309, %v5278, %v4755
  %v5312 = vsel %vm5309, %v5279, %v4757
  %v5313 = vsel %vm5309, %v5280, %v4759
  %v5314 = vsel %vm5309, %v5281, %v4761
  %v5315 = vsel %vm5309, %v5282, %v4763
  %v5316 = vsel %vm5309, %v5283, %v4765
  %v5317 = vsel %vm5309, %v5284, %v4767
  %v5318 = vsel %vm5309, %v5285, %v4769
  %v5319 = vsel %vm5309, %v5286, %v4771
  %v5320 = vsel %vm5309, %v5287, %v4773
  %v5321 = vsel %vm5309, %v5288, %v4775
  %v5322 = vsel %vm5309, %v5289, %v4777
  %v5323 = vsel %vm5309, %v5290, %v4779
  %v5324 = vsel %vm5309, %v5291, %v4781
  %v5325 = vsel %vm5309, %v5292, %v4783
  %v5326 = vsel %vm5309, %v5293, %v4785
  %v5327 = vsel %vm5309, %v5294, %v4787
  %v5328 = vsel %vm5309, %v5295, %v4789
  %v5329 = vsel %vm5309, %v5296, %v4791
  %v5330 = vsel %vm5309, %v5297, %v4793
  %v5331 = vsel %vm5309, %v5298, %v4795
  %v5332 = vsel %vm5309, %v5299, %v4797
  %v5333 = vsel %vm5309, %v5300, %v4799
  %v5334 = vsel %vm5309, %v5301, %v4801
  %v5335 = vsel %vm5309, %v5302, %v4803
  %v5336 = vsel %vm5309, %v5303, %v4805
  %v5337 = vsel %vm5309, %v5304, %v4807
  %v5338 = vsel %vm5309, %v5305, %v4809
  %v5339 = vsel %vm5309, %v5306, %v4811
  %v5340 = vsel %vm5309, %v5307, %v4813
  %v5341 = vsel %vm5309, %v5308, %v4815
  %v5342 = vpack.c.bf16 %v5311, %v5310
  %v5343 = vpack.c.bf16 %v5313, %v5312
  %v5344 = vpack.c.bf16 %v5315, %v5314
  %v5345 = vpack.c.bf16 %v5317, %v5316
  %v5346 = vpack.c.bf16 %v5319, %v5318
  %v5347 = vpack.c.bf16 %v5321, %v5320
  %v5348 = vpack.c.bf16 %v5323, %v5322
  %v5349 = vpack.c.bf16 %v5325, %v5324
  %v5350 = vpack.c.bf16 %v5327, %v5326
  %v5351 = vpack.c.bf16 %v5329, %v5328
  %v5352 = vpack.c.bf16 %v5331, %v5330
  %v5353 = vpack.c.bf16 %v5333, %v5332
  %v5354 = vpack.c.bf16 %v5335, %v5334
  %v5355 = vpack.c.bf16 %v5337, %v5336
  %v5356 = vpack.c.bf16 %v5339, %v5338
  %v5357 = vpack.c.bf16 %v5341, %v5340
  %v5358 = vld [vmem:[%s3] sm:$0xf]
  %v5359 = vld [vmem:[%s3 + $0x4] sm:$0xf]
  %v5360 = vpack.c.bf16 %v468, %v465
  %v5361 = vpack.c.bf16 %v476, %v473
  %v5362 = vpack.c.bf16 %v484, %v481
  %v5363 = vpack.c.bf16 %v492, %v489
  %v5364 = vpack.c.bf16 %v500, %v497
  %v5365 = vpack.c.bf16 %v508, %v505
  %v5366 = vpack.c.bf16 %v516, %v513
  %v5367 = vpack.c.bf16 %v524, %v521
  %v5368 = vpack.c.bf16 %v532, %v529
  %v5369 = vpack.c.bf16 %v540, %v537
  %v5370 = vpack.c.bf16 %v548, %v545
  %v5371 = vpack.c.bf16 %v556, %v553
  %v5372 = vpack.c.bf16 %v564, %v561
  %v5373 = vpack.c.bf16 %v572, %v569
  %v5374 = vpack.c.bf16 %v580, %v577
  %v5375 = vpack.c.bf16 %v588, %v585
  %v5376 = vld [vmem:[%s4] sm:$0xf]
  %v5377 = vld [vmem:[%s4 + $0x4] sm:$0xf]
  %5394 = vrot.lane.b32.xlu0 %v5360, 127
  %v5395 = vpop.permute.xlu0 %5394
  %5396 = vrot.lane.b32.xlu0 %v5361, 127
  %v5397 = vpop.permute.xlu0 %5396
  %5398 = vrot.lane.b32.xlu0 %v5362, 127
  %v5399 = vpop.permute.xlu0 %5398
  %5400 = vrot.lane.b32.xlu0 %v5363, 127
  %v5401 = vpop.permute.xlu0 %5400
  %5402 = vrot.lane.b32.xlu0 %v5364, 127
  %v5403 = vpop.permute.xlu0 %5402
  %5404 = vrot.lane.b32.xlu0 %v5365, 127
  %v5405 = vpop.permute.xlu0 %5404
  %5406 = vrot.lane.b32.xlu0 %v5366, 127
  %v5407 = vpop.permute.xlu0 %5406
  %5408 = vrot.lane.b32.xlu0 %v5367, 127
  %v5409 = vpop.permute.xlu0 %5408
  %5410 = vrot.lane.b32.xlu0 %v5368, 127
  %v5411 = vpop.permute.xlu0 %5410
  %5412 = vrot.lane.b32.xlu0 %v5369, 127
  %v5413 = vpop.permute.xlu0 %5412
  %5414 = vrot.lane.b32.xlu0 %v5370, 127
  %v5415 = vpop.permute.xlu0 %5414
  %5416 = vrot.lane.b32.xlu0 %v5371, 127
  %v5417 = vpop.permute.xlu0 %5416
  %5418 = vrot.lane.b32.xlu0 %v5372, 127
  %v5419 = vpop.permute.xlu0 %5418
  %5420 = vrot.lane.b32.xlu0 %v5373, 127
  %v5421 = vpop.permute.xlu0 %5420
  %5422 = vrot.lane.b32.xlu0 %v5374, 127
  %v5423 = vpop.permute.xlu0 %5422
  %5424 = vrot.lane.b32.xlu0 %v5375, 127
  %v5425 = vpop.permute.xlu0 %5424
  %v5428 = vunpack.c.l.b16 %v5376
  %v5429 = vunpack.c.l.b16 %v5377
  %v5430 = vpack.c.b16 %v5429, %v5428
  %vm5432 = vcmask 130048
  %v5434 = vsel %vm5432, %v5395, 0
  %v5437 = vsel %vm5432, %v5397, 0
  %v5440 = vsel %vm5432, %v5399, 0
  %v5443 = vsel %vm5432, %v5401, 0
  %v5446 = vsel %vm5432, %v5403, 0
  %v5449 = vsel %vm5432, %v5405, 0
  %v5452 = vsel %vm5432, %v5407, 0
  %v5455 = vsel %vm5432, %v5409, 0
  %v5458 = vsel %vm5432, %v5411, 0
  %v5461 = vsel %vm5432, %v5413, 0
  %v5464 = vsel %vm5432, %v5415, 0
  %v5467 = vsel %vm5432, %v5417, 0
  %v5470 = vsel %vm5432, %v5419, 0
  %v5473 = vsel %vm5432, %v5421, 0
  %v5476 = vsel %vm5432, %v5423, 0
  %v5479 = vsel %vm5432, %v5425, 0
  %5481 = vmatprep.subr.bf16.mxu0 0
  %5482 = vmatpush1.bf16.msra.mxu0 %v5430
  %5483 = vmatprep.subr.bf16.mxu0 0
  %5484 = vmatpush1.bf16.msra.mxu0 0
  %5485 = vmatprep.subr.bf16.mxu0 0
  %5486 = vmatpush1.bf16.msra.mxu0 0
  %5487 = vmatprep.subr.bf16.mxu0 0
  %5488 = vmatpush1.bf16.msra.mxu0 0
  %5489 = vmatprep.subr.bf16.mxu0 0
  %5490 = vmatpush1.bf16.msra.mxu0 0
  %5491 = vmatprep.subr.bf16.mxu0 0
  %5492 = vmatpush1.bf16.msra.mxu0 0
  %5493 = vmatprep.subr.bf16.mxu0 0
  %5494 = vmatpush1.bf16.msra.mxu0 0
  %5495 = vmatprep.subr.bf16.mxu0 0
  %5496 = vmatpush1.bf16.msra.mxu0 0
  %5497 = vmatprep.subr.bf16.mxu0 0
  %5498 = vmatpush1.bf16.msra.mxu0 0
  %5499 = vmatprep.subr.bf16.mxu0 0
  %5500 = vmatpush1.bf16.msra.mxu0 0
  %5501 = vmatprep.subr.bf16.mxu0 0
  %5502 = vmatpush1.bf16.msra.mxu0 0
  %5503 = vmatprep.subr.bf16.mxu0 0
  %5504 = vmatpush1.bf16.msra.mxu0 0
  %5505 = vmatprep.subr.bf16.mxu0 0
  %5506 = vmatpush1.bf16.msra.mxu0 0
  %5507 = vmatprep.subr.bf16.mxu0 0
  %5508 = vmatpush1.bf16.msra.mxu0 0
  %5509 = vmatprep.subr.bf16.mxu0 0
  %5510 = vmatpush1.bf16.msra.mxu0 0
  %5511 = vmatprep.subr.bf16.mxu0 0
  %5512 = vmatpush1.bf16.msra.mxu0 0
  %5513 = vmatprep.mubr.bf16.mxu0 0
  %5514 = vmatmul.mubr.bf16.gmra.mrb[0].mxu0 %v5434
  %v5515 = vpop.f32.mrb[0].mxu0
  %v5516 = vadd.f32 0.0, %v5515
  %v5517 = vpop.f32.mrb[0].mxu0
  %v5518 = vpop.f32.mrb[0].mxu0
  %v5519 = vadd.f32 0.0, %v5518
  %v5520 = vpop.f32.mrb[0].mxu0
  %5521 = vmatprep.mubr.bf16.mxu0 0
  %5522 = vmatmul.mubr.bf16.gmra.mrb[0].mxu0 %v5437
  %v5523 = vpop.f32.mrb[0].mxu0
  %v5524 = vadd.f32 0.0, %v5523
  %v5525 = vpop.f32.mrb[0].mxu0
  %v5526 = vpop.f32.mrb[0].mxu0
  %v5527 = vadd.f32 0.0, %v5526
  %v5528 = vpop.f32.mrb[0].mxu0
  %5529 = vmatprep.mubr.bf16.mxu0 0
  %5530 = vmatmul.mubr.bf16.gmra.mrb[0].mxu0 %v5440
  %v5531 = vpop.f32.mrb[0].mxu0
  %v5532 = vadd.f32 0.0, %v5531
  %v5533 = vpop.f32.mrb[0].mxu0
  %v5534 = vpop.f32.mrb[0].mxu0
  %v5535 = vadd.f32 0.0, %v5534
  %v5536 = vpop.f32.mrb[0].mxu0
  %5537 = vmatprep.mubr.bf16.mxu0 0
  %5538 = vmatmul.mubr.bf16.gmra.mrb[0].mxu0 %v5443
  %v5539 = vpop.f32.mrb[0].mxu0
  %v5540 = vadd.f32 0.0, %v5539
  %v5541 = vpop.f32.mrb[0].mxu0
  %v5542 = vpop.f32.mrb[0].mxu0
  %v5543 = vadd.f32 0.0, %v5542
  %v5544 = vpop.f32.mrb[0].mxu0
  %5545 = vmatprep.mubr.bf16.mxu0 0
  %5546 = vmatmul.mubr.bf16.gmra.mrb[0].mxu0 %v5446
  %v5547 = vpop.f32.mrb[0].mxu0
  %v5548 = vadd.f32 0.0, %v5547
  %v5549 = vpop.f32.mrb[0].mxu0
  %v5550 = vpop.f32.mrb[0].mxu0
  %v5551 = vadd.f32 0.0, %v5550
  %v5552 = vpop.f32.mrb[0].mxu0
  %5553 = vmatprep.mubr.bf16.mxu0 0
  %5554 = vmatmul.mubr.bf16.gmra.mrb[0].mxu0 %v5449
  %v5555 = vpop.f32.mrb[0].mxu0
  %v5556 = vadd.f32 0.0, %v5555
  %v5557 = vpop.f32.mrb[0].mxu0
  %v5558 = vpop.f32.mrb[0].mxu0
  %v5559 = vadd.f32 0.0, %v5558
  %v5560 = vpop.f32.mrb[0].mxu0
  %5561 = vmatprep.mubr.bf16.mxu0 0
  %5562 = vmatmul.mubr.bf16.gmra.mrb[0].mxu0 %v5452
  %v5563 = vpop.f32.mrb[0].mxu0
  %v5564 = vadd.f32 0.0, %v5563
  %v5565 = vpop.f32.mrb[0].mxu0
  %v5566 = vpop.f32.mrb[0].mxu0
  %v5567 = vadd.f32 0.0, %v5566
  %v5568 = vpop.f32.mrb[0].mxu0
  %5569 = vmatprep.mubr.bf16.mxu0 0
  %5570 = vmatmul.mubr.bf16.gmra.mrb[0].mxu0 %v5455
  %v5571 = vpop.f32.mrb[0].mxu0
  %v5572 = vadd.f32 0.0, %v5571
  %v5573 = vpop.f32.mrb[0].mxu0
  %v5574 = vpop.f32.mrb[0].mxu0
  %v5575 = vadd.f32 0.0, %v5574
  %v5576 = vpop.f32.mrb[0].mxu0
  %5577 = vmatprep.mubr.bf16.mxu0 0
  %5578 = vmatmul.mubr.bf16.gmra.mrb[0].mxu0 %v5458
  %v5579 = vpop.f32.mrb[0].mxu0
  %v5580 = vadd.f32 0.0, %v5579
  %v5581 = vpop.f32.mrb[0].mxu0
  %v5582 = vpop.f32.mrb[0].mxu0
  %v5583 = vadd.f32 0.0, %v5582
  %v5584 = vpop.f32.mrb[0].mxu0
  %5585 = vmatprep.mubr.bf16.mxu0 0
  %5586 = vmatmul.mubr.bf16.gmra.mrb[0].mxu0 %v5461
  %v5587 = vpop.f32.mrb[0].mxu0
  %v5588 = vadd.f32 0.0, %v5587
  %v5589 = vpop.f32.mrb[0].mxu0
  %v5590 = vpop.f32.mrb[0].mxu0
  %v5591 = vadd.f32 0.0, %v5590
  %v5592 = vpop.f32.mrb[0].mxu0
  %5593 = vmatprep.mubr.bf16.mxu0 0
  %5594 = vmatmul.mubr.bf16.gmra.mrb[0].mxu0 %v5464
  %v5595 = vpop.f32.mrb[0].mxu0
  %v5596 = vadd.f32 0.0, %v5595
  %v5597 = vpop.f32.mrb[0].mxu0
  %v5598 = vpop.f32.mrb[0].mxu0
  %v5599 = vadd.f32 0.0, %v5598
  %v5600 = vpop.f32.mrb[0].mxu0
  %5601 = vmatprep.mubr.bf16.mxu0 0
  %5602 = vmatmul.mubr.bf16.gmra.mrb[0].mxu0 %v5467
  %v5603 = vpop.f32.mrb[0].mxu0
  %v5604 = vadd.f32 0.0, %v5603
  %v5605 = vpop.f32.mrb[0].mxu0
  %v5606 = vpop.f32.mrb[0].mxu0
  %v5607 = vadd.f32 0.0, %v5606
  %v5608 = vpop.f32.mrb[0].mxu0
  %5609 = vmatprep.mubr.bf16.mxu0 0
  %5610 = vmatmul.mubr.bf16.gmra.mrb[0].mxu0 %v5470
  %v5611 = vpop.f32.mrb[0].mxu0
  %v5612 = vadd.f32 0.0, %v5611
  %v5613 = vpop.f32.mrb[0].mxu0
  %v5614 = vpop.f32.mrb[0].mxu0
  %v5615 = vadd.f32 0.0, %v5614
  %v5616 = vpop.f32.mrb[0].mxu0
  %5617 = vmatprep.mubr.bf16.mxu0 0
  %5618 = vmatmul.mubr.bf16.gmra.mrb[0].mxu0 %v5473
  %v5619 = vpop.f32.mrb[0].mxu0
  %v5620 = vadd.f32 0.0, %v5619
  %v5621 = vpop.f32.mrb[0].mxu0
  %v5622 = vpop.f32.mrb[0].mxu0
  %v5623 = vadd.f32 0.0, %v5622
  %v5624 = vpop.f32.mrb[0].mxu0
  %5625 = vmatprep.mubr.bf16.mxu0 0
  %5626 = vmatmul.mubr.bf16.gmra.mrb[0].mxu0 %v5476
  %v5627 = vpop.f32.mrb[0].mxu0
  %v5628 = vadd.f32 0.0, %v5627
  %v5629 = vpop.f32.mrb[0].mxu0
  %v5630 = vpop.f32.mrb[0].mxu0
  %v5631 = vadd.f32 0.0, %v5630
  %v5632 = vpop.f32.mrb[0].mxu0
  %5633 = vmatprep.mubr.bf16.mxu0 0
  %5634 = vmatmul.mubr.bf16.gmra.mrb[0].mxu0 %v5479
  %v5635 = vpop.f32.mrb[0].mxu0
  %v5636 = vadd.f32 0.0, %v5635
  %v5637 = vpop.f32.mrb[0].mxu0
  %v5638 = vpop.f32.mrb[0].mxu0
  %v5639 = vadd.f32 0.0, %v5638
  %v5640 = vpop.f32.mrb[0].mxu0
  %5641 = vdwg.mxu0
  %v5644 = vunpack.c.l.b16 %v5358
  %v5645 = vunpack.c.l.b16 %v5359
  %v5646 = vpack.c.b16 %v5645, %v5644
  %v5649 = vsel %vm5432, %v5342, 0
  %v5652 = vsel %vm5432, %v5343, 0
  %v5655 = vsel %vm5432, %v5344, 0
  %v5658 = vsel %vm5432, %v5345, 0
  %v5661 = vsel %vm5432, %v5346, 0
  %v5664 = vsel %vm5432, %v5347, 0
  %v5667 = vsel %vm5432, %v5348, 0
  %v5670 = vsel %vm5432, %v5349, 0
  %v5673 = vsel %vm5432, %v5350, 0
  %v5676 = vsel %vm5432, %v5351, 0
  %v5679 = vsel %vm5432, %v5352, 0
  %v5682 = vsel %vm5432, %v5353, 0
  %v5685 = vsel %vm5432, %v5354, 0
  %v5688 = vsel %vm5432, %v5355, 0
  %v5691 = vsel %vm5432, %v5356, 0
  %v5694 = vsel %vm5432, %v5357, 0
  %5696 = vmatprep.subr.bf16.mxu0 0
  %5697 = vmatpush1.bf16.msra.mxu0 %v5646
  %5698 = vmatprep.subr.bf16.mxu0 0
  %5699 = vmatpush1.bf16.msra.mxu0 0
  %5700 = vmatprep.subr.bf16.mxu0 0
  %5701 = vmatpush1.bf16.msra.mxu0 0
  %5702 = vmatprep.subr.bf16.mxu0 0
  %5703 = vmatpush1.bf16.msra.mxu0 0
  %5704 = vmatprep.subr.bf16.mxu0 0
  %5705 = vmatpush1.bf16.msra.mxu0 0
  %5706 = vmatprep.subr.bf16.mxu0 0
  %5707 = vmatpush1.bf16.msra.mxu0 0
  %5708 = vmatprep.subr.bf16.mxu0 0
  %5709 = vmatpush1.bf16.msra.mxu0 0
  %5710 = vmatprep.subr.bf16.mxu0 0
  %5711 = vmatpush1.bf16.msra.mxu0 0
  %5712 = vmatprep.subr.bf16.mxu0 0
  %5713 = vmatpush1.bf16.msra.mxu0 0
  %5714 = vmatprep.subr.bf16.mxu0 0
  %5715 = vmatpush1.bf16.msra.mxu0 0
  %5716 = vmatprep.subr.bf16.mxu0 0
  %5717 = vmatpush1.bf16.msra.mxu0 0
  %5718 = vmatprep.subr.bf16.mxu0 0
  %5719 = vmatpush1.bf16.msra.mxu0 0
  %5720 = vmatprep.subr.bf16.mxu0 0
  %5721 = vmatpush1.bf16.msra.mxu0 0
  %5722 = vmatprep.subr.bf16.mxu0 0
  %5723 = vmatpush1.bf16.msra.mxu0 0
  %5724 = vmatprep.subr.bf16.mxu0 0
  %5725 = vmatpush1.bf16.msra.mxu0 0
  %5726 = vmatprep.subr.bf16.mxu0 0
  %5727 = vmatpush1.bf16.msra.mxu0 0
  %5728 = vmatprep.mubr.bf16.mxu0 0
  %5729 = vmatmul.mubr.bf16.gmra.mrb[0].mxu0 %v5649
  %v5730 = vpop.f32.mrb[0].mxu0
  %v5731 = vadd.f32 %v5516, %v5730
  %v5732 = vpop.f32.mrb[0].mxu0
  %v5733 = vpop.f32.mrb[0].mxu0
  %v5734 = vadd.f32 %v5519, %v5733
  %v5735 = vpop.f32.mrb[0].mxu0
  %5736 = vmatprep.mubr.bf16.mxu0 0
  %5737 = vmatmul.mubr.bf16.gmra.mrb[0].mxu0 %v5652
  %v5738 = vpop.f32.mrb[0].mxu0
  %v5739 = vadd.f32 %v5524, %v5738
  %v5740 = vpop.f32.mrb[0].mxu0
  %v5741 = vpop.f32.mrb[0].mxu0
  %v5742 = vadd.f32 %v5527, %v5741
  %v5743 = vpop.f32.mrb[0].mxu0
  %5744 = vmatprep.mubr.bf16.mxu0 0
  %5745 = vmatmul.mubr.bf16.gmra.mrb[0].mxu0 %v5655
  %v5746 = vpop.f32.mrb[0].mxu0
  %v5747 = vadd.f32 %v5532, %v5746
  %v5748 = vpop.f32.mrb[0].mxu0
  %v5749 = vpop.f32.mrb[0].mxu0
  %v5750 = vadd.f32 %v5535, %v5749
  %v5751 = vpop.f32.mrb[0].mxu0
  %5752 = vmatprep.mubr.bf16.mxu0 0
  %5753 = vmatmul.mubr.bf16.gmra.mrb[0].mxu0 %v5658
  %v5754 = vpop.f32.mrb[0].mxu0
  %v5755 = vadd.f32 %v5540, %v5754
  %v5756 = vpop.f32.mrb[0].mxu0
  %v5757 = vpop.f32.mrb[0].mxu0
  %v5758 = vadd.f32 %v5543, %v5757
  %v5759 = vpop.f32.mrb[0].mxu0
  %5760 = vmatprep.mubr.bf16.mxu0 0
  %5761 = vmatmul.mubr.bf16.gmra.mrb[0].mxu0 %v5661
  %v5762 = vpop.f32.mrb[0].mxu0
  %v5763 = vadd.f32 %v5548, %v5762
  %v5764 = vpop.f32.mrb[0].mxu0
  %v5765 = vpop.f32.mrb[0].mxu0
  %v5766 = vadd.f32 %v5551, %v5765
  %v5767 = vpop.f32.mrb[0].mxu0
  %5768 = vmatprep.mubr.bf16.mxu0 0
  %5769 = vmatmul.mubr.bf16.gmra.mrb[0].mxu0 %v5664
  %v5770 = vpop.f32.mrb[0].mxu0
  %v5771 = vadd.f32 %v5556, %v5770
  %v5772 = vpop.f32.mrb[0].mxu0
  %v5773 = vpop.f32.mrb[0].mxu0
  %v5774 = vadd.f32 %v5559, %v5773
  %v5775 = vpop.f32.mrb[0].mxu0
  %5776 = vmatprep.mubr.bf16.mxu0 0
  %5777 = vmatmul.mubr.bf16.gmra.mrb[0].mxu0 %v5667
  %v5778 = vpop.f32.mrb[0].mxu0
  %v5779 = vadd.f32 %v5564, %v5778
  %v5780 = vpop.f32.mrb[0].mxu0
  %v5781 = vpop.f32.mrb[0].mxu0
  %v5782 = vadd.f32 %v5567, %v5781
  %v5783 = vpop.f32.mrb[0].mxu0
  %5784 = vmatprep.mubr.bf16.mxu0 0
  %5785 = vmatmul.mubr.bf16.gmra.mrb[0].mxu0 %v5670
  %v5786 = vpop.f32.mrb[0].mxu0
  %v5787 = vadd.f32 %v5572, %v5786
  %v5788 = vpop.f32.mrb[0].mxu0
  %v5789 = vpop.f32.mrb[0].mxu0
  %v5790 = vadd.f32 %v5575, %v5789
  %v5791 = vpop.f32.mrb[0].mxu0
  %5792 = vmatprep.mubr.bf16.mxu0 0
  %5793 = vmatmul.mubr.bf16.gmra.mrb[0].mxu0 %v5673
  %v5794 = vpop.f32.mrb[0].mxu0
  %v5795 = vadd.f32 %v5580, %v5794
  %v5796 = vpop.f32.mrb[0].mxu0
  %v5797 = vpop.f32.mrb[0].mxu0
  %v5798 = vadd.f32 %v5583, %v5797
  %v5799 = vpop.f32.mrb[0].mxu0
  %5800 = vmatprep.mubr.bf16.mxu0 0
  %5801 = vmatmul.mubr.bf16.gmra.mrb[0].mxu0 %v5676
  %v5802 = vpop.f32.mrb[0].mxu0
  %v5803 = vadd.f32 %v5588, %v5802
  %v5804 = vpop.f32.mrb[0].mxu0
  %v5805 = vpop.f32.mrb[0].mxu0
  %v5806 = vadd.f32 %v5591, %v5805
  %v5807 = vpop.f32.mrb[0].mxu0
  %5808 = vmatprep.mubr.bf16.mxu0 0
  %5809 = vmatmul.mubr.bf16.gmra.mrb[0].mxu0 %v5679
  %v5810 = vpop.f32.mrb[0].mxu0
  %v5811 = vadd.f32 %v5596, %v5810
  %v5812 = vpop.f32.mrb[0].mxu0
  %v5813 = vpop.f32.mrb[0].mxu0
  %v5814 = vadd.f32 %v5599, %v5813
  %v5815 = vpop.f32.mrb[0].mxu0
  %5816 = vmatprep.mubr.bf16.mxu0 0
  %5817 = vmatmul.mubr.bf16.gmra.mrb[0].mxu0 %v5682
  %v5818 = vpop.f32.mrb[0].mxu0
  %v5819 = vadd.f32 %v5604, %v5818
  %v5820 = vpop.f32.mrb[0].mxu0
  %v5821 = vpop.f32.mrb[0].mxu0
  %v5822 = vadd.f32 %v5607, %v5821
  %v5823 = vpop.f32.mrb[0].mxu0
  %5824 = vmatprep.mubr.bf16.mxu0 0
  %5825 = vmatmul.mubr.bf16.gmra.mrb[0].mxu0 %v5685
  %v5826 = vpop.f32.mrb[0].mxu0
  %v5827 = vadd.f32 %v5612, %v5826
  %v5828 = vpop.f32.mrb[0].mxu0
  %v5829 = vpop.f32.mrb[0].mxu0
  %v5830 = vadd.f32 %v5615, %v5829
  %v5831 = vpop.f32.mrb[0].mxu0
  %5832 = vmatprep.mubr.bf16.mxu0 0
  %5833 = vmatmul.mubr.bf16.gmra.mrb[0].mxu0 %v5688
  %v5834 = vpop.f32.mrb[0].mxu0
  %v5835 = vadd.f32 %v5620, %v5834
  %v5836 = vpop.f32.mrb[0].mxu0
  %v5837 = vpop.f32.mrb[0].mxu0
  %v5838 = vadd.f32 %v5623, %v5837
  %v5839 = vpop.f32.mrb[0].mxu0
  %5840 = vmatprep.mubr.bf16.mxu0 0
  %5841 = vmatmul.mubr.bf16.gmra.mrb[0].mxu0 %v5691
  %v5842 = vpop.f32.mrb[0].mxu0
  %v5843 = vadd.f32 %v5628, %v5842
  %v5844 = vpop.f32.mrb[0].mxu0
  %v5845 = vpop.f32.mrb[0].mxu0
  %v5846 = vadd.f32 %v5631, %v5845
  %v5847 = vpop.f32.mrb[0].mxu0
  %5848 = vmatprep.mubr.bf16.mxu0 0
  %5849 = vmatmul.mubr.bf16.gmra.mrb[0].mxu0 %v5694
  %v5850 = vpop.f32.mrb[0].mxu0
  %v5851 = vadd.f32 %v5636, %v5850
  %v5852 = vpop.f32.mrb[0].mxu0
  %v5853 = vpop.f32.mrb[0].mxu0
  %v5854 = vadd.f32 %v5639, %v5853
  %v5855 = vpop.f32.mrb[0].mxu0
  %5856 = vdwg.mxu0
  %v5857 = vmax.f32 %v5731, 0.0
  %v5858 = vmax.f32 %v5734, 0.0
  %v5859 = vmax.f32 %v5739, 0.0
  %v5860 = vmax.f32 %v5742, 0.0
  %v5861 = vmax.f32 %v5747, 0.0
  %v5862 = vmax.f32 %v5750, 0.0
  %v5863 = vmax.f32 %v5755, 0.0
  %v5864 = vmax.f32 %v5758, 0.0
  %v5865 = vmax.f32 %v5763, 0.0
  %v5866 = vmax.f32 %v5766, 0.0
  %v5867 = vmax.f32 %v5771, 0.0
  %v5868 = vmax.f32 %v5774, 0.0
  %v5869 = vmax.f32 %v5779, 0.0
  %v5870 = vmax.f32 %v5782, 0.0
  %v5871 = vmax.f32 %v5787, 0.0
  %v5872 = vmax.f32 %v5790, 0.0
  %v5873 = vmax.f32 %v5795, 0.0
  %v5874 = vmax.f32 %v5798, 0.0
  %v5875 = vmax.f32 %v5803, 0.0
  %v5876 = vmax.f32 %v5806, 0.0
  %v5877 = vmax.f32 %v5811, 0.0
  %v5878 = vmax.f32 %v5814, 0.0
  %v5879 = vmax.f32 %v5819, 0.0
  %v5880 = vmax.f32 %v5822, 0.0
  %v5881 = vmax.f32 %v5827, 0.0
  %v5882 = vmax.f32 %v5830, 0.0
  %v5883 = vmax.f32 %v5835, 0.0
  %v5884 = vmax.f32 %v5838, 0.0
  %v5885 = vmax.f32 %v5843, 0.0
  %v5886 = vmax.f32 %v5846, 0.0
  %v5887 = vmax.f32 %v5851, 0.0
  %v5888 = vmax.f32 %v5854, 0.0
  %v5889 = vpack.c.bf16 %v5858, %v5857
  %v5890 = vpack.c.bf16 %v5860, %v5859
  %v5891 = vpack.c.bf16 %v5862, %v5861
  %v5892 = vpack.c.bf16 %v5864, %v5863
  %v5893 = vpack.c.bf16 %v5866, %v5865
  %v5894 = vpack.c.bf16 %v5868, %v5867
  %v5895 = vpack.c.bf16 %v5870, %v5869
  %v5896 = vpack.c.bf16 %v5872, %v5871
  %v5897 = vpack.c.bf16 %v5874, %v5873
  %v5898 = vpack.c.bf16 %v5876, %v5875
  %v5899 = vpack.c.bf16 %v5878, %v5877
  %v5900 = vpack.c.bf16 %v5880, %v5879
  %v5901 = vpack.c.bf16 %v5882, %v5881
  %v5902 = vpack.c.bf16 %v5884, %v5883
  %v5903 = vpack.c.bf16 %v5886, %v5885
  %v5904 = vpack.c.bf16 %v5888, %v5887
  %v5905 = vld [vmem:[%s5] sm:$0xf]
  %v5906 = vld [vmem:[%s5 + $0x4] sm:$0xf]
  %v5907 = vld [vmem:[%s5 + $0x8] sm:$0xf]
  %v5908 = vld [vmem:[%s5 + $0xc] sm:$0xf]
  %v5909 = vld [vmem:[%s5 + $0x10] sm:$0xf]
  %v5910 = vld [vmem:[%s5 + $0x14] sm:$0xf]
  %v5911 = vld [vmem:[%s5 + $0x18] sm:$0xf]
  %v5912 = vld [vmem:[%s5 + $0x1c] sm:$0xf]
  %v5921 = vunpack.c.l.b16 %v5905
  %v5922 = vunpack.c.l.b16 %v5906
  %v5923 = vunpack.c.l.b16 %v5907
  %v5924 = vunpack.c.l.b16 %v5908
  %v5925 = vunpack.c.l.b16 %v5909
  %v5926 = vunpack.c.l.b16 %v5910
  %v5927 = vunpack.c.l.b16 %v5911
  %v5928 = vunpack.c.l.b16 %v5912
  %v5929 = vpack.c.b16 %v5922, %v5921
  %v5930 = vpack.c.b16 %v5924, %v5923
  %v5931 = vpack.c.b16 %v5926, %v5925
  %v5932 = vpack.c.b16 %v5928, %v5927
  %v5938 = vsel %vm381, %v5889, 0
  %v5941 = vsel %vm381, %v5890, 0
  %v5944 = vsel %vm381, %v5891, 0
  %v5947 = vsel %vm381, %v5892, 0
  %v5950 = vsel %vm381, %v5893, 0
  %v5953 = vsel %vm381, %v5894, 0
  %v5956 = vsel %vm381, %v5895, 0
  %v5959 = vsel %vm381, %v5896, 0
  %v5962 = vsel %vm381, %v5897, 0
  %v5965 = vsel %vm381, %v5898, 0
  %v5968 = vsel %vm381, %v5899, 0
  %v5971 = vsel %vm381, %v5900, 0
  %v5974 = vsel %vm381, %v5901, 0
  %v5977 = vsel %vm381, %v5902, 0
  %v5980 = vsel %vm381, %v5903, 0
  %v5983 = vsel %vm381, %v5904, 0
  %5985 = vmatprep.subr.bf16.mxu0 0
  %5986 = vmatpush1.bf16.msra.mxu0 %v5929
  %5987 = vmatprep.subr.bf16.mxu0 0
  %5988 = vmatpush1.bf16.msra.mxu0 %v5930
  %5989 = vmatprep.subr.bf16.mxu0 0
  %5990 = vmatpush1.bf16.msra.mxu0 %v5931
  %5991 = vmatprep.subr.bf16.mxu0 0
  %5992 = vmatpush1.bf16.msra.mxu0 %v5932
  %5993 = vmatprep.subr.bf16.mxu0 0
  %5994 = vmatpush1.bf16.msra.mxu0 0
  %5995 = vmatprep.subr.bf16.mxu0 0
  %5996 = vmatpush1.bf16.msra.mxu0 0
  %5997 = vmatprep.subr.bf16.mxu0 0
  %5998 = vmatpush1.bf16.msra.mxu0 0
  %5999 = vmatprep.subr.bf16.mxu0 0
  %6000 = vmatpush1.bf16.msra.mxu0 0
  %6001 = vmatprep.subr.bf16.mxu0 0
  %6002 = vmatpush1.bf16.msra.mxu0 0
  %6003 = vmatprep.subr.bf16.mxu0 0
  %6004 = vmatpush1.bf16.msra.mxu0 0
  %6005 = vmatprep.subr.bf16.mxu0 0
  %6006 = vmatpush1.bf16.msra.mxu0 0
  %6007 = vmatprep.subr.bf16.mxu0 0
  %6008 = vmatpush1.bf16.msra.mxu0 0
  %6009 = vmatprep.subr.bf16.mxu0 0
  %6010 = vmatpush1.bf16.msra.mxu0 0
  %6011 = vmatprep.subr.bf16.mxu0 0
  %6012 = vmatpush1.bf16.msra.mxu0 0
  %6013 = vmatprep.subr.bf16.mxu0 0
  %6014 = vmatpush1.bf16.msra.mxu0 0
  %6015 = vmatprep.subr.bf16.mxu0 0
  %6016 = vmatpush1.bf16.msra.mxu0 0
  %6017 = vmatprep.mubr.bf16.mxu0 0
  %6018 = vmatmul.mubr.bf16.gmra.mrb[0].mxu0 %v5938
  %v6019 = vpop.f32.mrb[0].mxu0
  %v6020 = vadd.f32 0.0, %v6019
  %v6021 = vpop.f32.mrb[0].mxu0
  %v6022 = vpop.f32.mrb[0].mxu0
  %v6023 = vadd.f32 0.0, %v6022
  %v6024 = vpop.f32.mrb[0].mxu0
  %6025 = vmatprep.mubr.bf16.mxu0 0
  %6026 = vmatmul.mubr.bf16.gmra.mrb[0].mxu0 %v5941
  %v6027 = vpop.f32.mrb[0].mxu0
  %v6028 = vadd.f32 0.0, %v6027
  %v6029 = vpop.f32.mrb[0].mxu0
  %v6030 = vpop.f32.mrb[0].mxu0
  %v6031 = vadd.f32 0.0, %v6030
  %v6032 = vpop.f32.mrb[0].mxu0
  %6033 = vmatprep.mubr.bf16.mxu0 0
  %6034 = vmatmul.mubr.bf16.gmra.mrb[0].mxu0 %v5944
  %v6035 = vpop.f32.mrb[0].mxu0
  %v6036 = vadd.f32 0.0, %v6035
  %v6037 = vpop.f32.mrb[0].mxu0
  %v6038 = vpop.f32.mrb[0].mxu0
  %v6039 = vadd.f32 0.0, %v6038
  %v6040 = vpop.f32.mrb[0].mxu0
  %6041 = vmatprep.mubr.bf16.mxu0 0
  %6042 = vmatmul.mubr.bf16.gmra.mrb[0].mxu0 %v5947
  %v6043 = vpop.f32.mrb[0].mxu0
  %v6044 = vadd.f32 0.0, %v6043
  %v6045 = vpop.f32.mrb[0].mxu0
  %v6046 = vpop.f32.mrb[0].mxu0
  %v6047 = vadd.f32 0.0, %v6046
  %v6048 = vpop.f32.mrb[0].mxu0
  %6049 = vmatprep.mubr.bf16.mxu0 0
  %6050 = vmatmul.mubr.bf16.gmra.mrb[0].mxu0 %v5950
  %v6051 = vpop.f32.mrb[0].mxu0
  %v6052 = vadd.f32 0.0, %v6051
  %v6053 = vpop.f32.mrb[0].mxu0
  %v6054 = vpop.f32.mrb[0].mxu0
  %v6055 = vadd.f32 0.0, %v6054
  %v6056 = vpop.f32.mrb[0].mxu0
  %6057 = vmatprep.mubr.bf16.mxu0 0
  %6058 = vmatmul.mubr.bf16.gmra.mrb[0].mxu0 %v5953
  %v6059 = vpop.f32.mrb[0].mxu0
  %v6060 = vadd.f32 0.0, %v6059
  %v6061 = vpop.f32.mrb[0].mxu0
  %v6062 = vpop.f32.mrb[0].mxu0
  %v6063 = vadd.f32 0.0, %v6062
  %v6064 = vpop.f32.mrb[0].mxu0
  %6065 = vmatprep.mubr.bf16.mxu0 0
  %6066 = vmatmul.mubr.bf16.gmra.mrb[0].mxu0 %v5956
  %v6067 = vpop.f32.mrb[0].mxu0
  %v6068 = vadd.f32 0.0, %v6067
  %v6069 = vpop.f32.mrb[0].mxu0
  %v6070 = vpop.f32.mrb[0].mxu0
  %v6071 = vadd.f32 0.0, %v6070
  %v6072 = vpop.f32.mrb[0].mxu0
  %6073 = vmatprep.mubr.bf16.mxu0 0
  %6074 = vmatmul.mubr.bf16.gmra.mrb[0].mxu0 %v5959
  %v6075 = vpop.f32.mrb[0].mxu0
  %v6076 = vadd.f32 0.0, %v6075
  %v6077 = vpop.f32.mrb[0].mxu0
  %v6078 = vpop.f32.mrb[0].mxu0
  %v6079 = vadd.f32 0.0, %v6078
  %v6080 = vpop.f32.mrb[0].mxu0
  %6081 = vmatprep.mubr.bf16.mxu0 0
  %6082 = vmatmul.mubr.bf16.gmra.mrb[0].mxu0 %v5962
  %v6083 = vpop.f32.mrb[0].mxu0
  %v6084 = vadd.f32 0.0, %v6083
  %v6085 = vpop.f32.mrb[0].mxu0
  %v6086 = vpop.f32.mrb[0].mxu0
  %v6087 = vadd.f32 0.0, %v6086
  %v6088 = vpop.f32.mrb[0].mxu0
  %6089 = vmatprep.mubr.bf16.mxu0 0
  %6090 = vmatmul.mubr.bf16.gmra.mrb[0].mxu0 %v5965
  %v6091 = vpop.f32.mrb[0].mxu0
  %v6092 = vadd.f32 0.0, %v6091
  %v6093 = vpop.f32.mrb[0].mxu0
  %v6094 = vpop.f32.mrb[0].mxu0
  %v6095 = vadd.f32 0.0, %v6094
  %v6096 = vpop.f32.mrb[0].mxu0
  %6097 = vmatprep.mubr.bf16.mxu0 0
  %6098 = vmatmul.mubr.bf16.gmra.mrb[0].mxu0 %v5968
  %v6099 = vpop.f32.mrb[0].mxu0
  %v6100 = vadd.f32 0.0, %v6099
  %v6101 = vpop.f32.mrb[0].mxu0
  %v6102 = vpop.f32.mrb[0].mxu0
  %v6103 = vadd.f32 0.0, %v6102
  %v6104 = vpop.f32.mrb[0].mxu0
  %6105 = vmatprep.mubr.bf16.mxu0 0
  %6106 = vmatmul.mubr.bf16.gmra.mrb[0].mxu0 %v5971
  %v6107 = vpop.f32.mrb[0].mxu0
  %v6108 = vadd.f32 0.0, %v6107
  %v6109 = vpop.f32.mrb[0].mxu0
  %v6110 = vpop.f32.mrb[0].mxu0
  %v6111 = vadd.f32 0.0, %v6110
  %v6112 = vpop.f32.mrb[0].mxu0
  %6113 = vmatprep.mubr.bf16.mxu0 0
  %6114 = vmatmul.mubr.bf16.gmra.mrb[0].mxu0 %v5974
  %v6115 = vpop.f32.mrb[0].mxu0
  %v6116 = vadd.f32 0.0, %v6115
  %v6117 = vpop.f32.mrb[0].mxu0
  %v6118 = vpop.f32.mrb[0].mxu0
  %v6119 = vadd.f32 0.0, %v6118
  %v6120 = vpop.f32.mrb[0].mxu0
  %6121 = vmatprep.mubr.bf16.mxu0 0
  %6122 = vmatmul.mubr.bf16.gmra.mrb[0].mxu0 %v5977
  %v6123 = vpop.f32.mrb[0].mxu0
  %v6124 = vadd.f32 0.0, %v6123
  %v6125 = vpop.f32.mrb[0].mxu0
  %v6126 = vpop.f32.mrb[0].mxu0
  %v6127 = vadd.f32 0.0, %v6126
  %v6128 = vpop.f32.mrb[0].mxu0
  %6129 = vmatprep.mubr.bf16.mxu0 0
  %6130 = vmatmul.mubr.bf16.gmra.mrb[0].mxu0 %v5980
  %v6131 = vpop.f32.mrb[0].mxu0
  %v6132 = vadd.f32 0.0, %v6131
  %v6133 = vpop.f32.mrb[0].mxu0
  %v6134 = vpop.f32.mrb[0].mxu0
  %v6135 = vadd.f32 0.0, %v6134
  %v6136 = vpop.f32.mrb[0].mxu0
  %6137 = vmatprep.mubr.bf16.mxu0 0
  %6138 = vmatmul.mubr.bf16.gmra.mrb[0].mxu0 %v5983
  %v6139 = vpop.f32.mrb[0].mxu0
  %v6140 = vadd.f32 0.0, %v6139
  %v6141 = vpop.f32.mrb[0].mxu0
  %v6142 = vpop.f32.mrb[0].mxu0
  %v6143 = vadd.f32 0.0, %v6142
  %v6144 = vpop.f32.mrb[0].mxu0
  %6145 = vdwg.mxu0
  %v6146 = vmax.f32 %v6020, 0.0
  %v6147 = vmax.f32 %v6023, 0.0
  %v6148 = vmax.f32 %v6028, 0.0
  %v6149 = vmax.f32 %v6031, 0.0
  %v6150 = vmax.f32 %v6036, 0.0
  %v6151 = vmax.f32 %v6039, 0.0
  %v6152 = vmax.f32 %v6044, 0.0
  %v6153 = vmax.f32 %v6047, 0.0
  %v6154 = vmax.f32 %v6052, 0.0
  %v6155 = vmax.f32 %v6055, 0.0
  %v6156 = vmax.f32 %v6060, 0.0
  %v6157 = vmax.f32 %v6063, 0.0
  %v6158 = vmax.f32 %v6068, 0.0
  %v6159 = vmax.f32 %v6071, 0.0
  %v6160 = vmax.f32 %v6076, 0.0
  %v6161 = vmax.f32 %v6079, 0.0
  %v6162 = vmax.f32 %v6084, 0.0
  %v6163 = vmax.f32 %v6087, 0.0
  %v6164 = vmax.f32 %v6092, 0.0
  %v6165 = vmax.f32 %v6095, 0.0
  %v6166 = vmax.f32 %v6100, 0.0
  %v6167 = vmax.f32 %v6103, 0.0
  %v6168 = vmax.f32 %v6108, 0.0
  %v6169 = vmax.f32 %v6111, 0.0
  %v6170 = vmax.f32 %v6116, 0.0
  %v6171 = vmax.f32 %v6119, 0.0
  %v6172 = vmax.f32 %v6124, 0.0
  %v6173 = vmax.f32 %v6127, 0.0
  %v6174 = vmax.f32 %v6132, 0.0
  %v6175 = vmax.f32 %v6135, 0.0
  %v6176 = vmax.f32 %v6140, 0.0
  %v6177 = vmax.f32 %v6143, 0.0
  %v6178 = vpack.c.bf16 %v6147, %v6146
  %v6179 = vpack.c.bf16 %v6149, %v6148
  %v6180 = vpack.c.bf16 %v6151, %v6150
  %v6181 = vpack.c.bf16 %v6153, %v6152
  %v6182 = vpack.c.bf16 %v6155, %v6154
  %v6183 = vpack.c.bf16 %v6157, %v6156
  %v6184 = vpack.c.bf16 %v6159, %v6158
  %v6185 = vpack.c.bf16 %v6161, %v6160
  %v6186 = vpack.c.bf16 %v6163, %v6162
  %v6187 = vpack.c.bf16 %v6165, %v6164
  %v6188 = vpack.c.bf16 %v6167, %v6166
  %v6189 = vpack.c.bf16 %v6169, %v6168
  %v6190 = vpack.c.bf16 %v6171, %v6170
  %v6191 = vpack.c.bf16 %v6173, %v6172
  %v6192 = vpack.c.bf16 %v6175, %v6174
  %v6193 = vpack.c.bf16 %v6177, %v6176
  %v6194 = vld [vmem:[%s6] sm:$0xf]
  %v6195 = vld [vmem:[%s6 + $0x4] sm:$0xf]
  %v6196 = vld [vmem:[%s6 + $0x8] sm:$0xf]
  %v6197 = vld [vmem:[%s6 + $0xc] sm:$0xf]
  %v6198 = vld [vmem:[%s6 + $0x10] sm:$0xf]
  %v6199 = vld [vmem:[%s6 + $0x14] sm:$0xf]
  %v6200 = vld [vmem:[%s6 + $0x18] sm:$0xf]
  %v6201 = vld [vmem:[%s6 + $0x1c] sm:$0xf]
  %v6210 = vunpack.c.l.b16 %v6194
  %v6211 = vunpack.c.l.b16 %v6195
  %v6212 = vunpack.c.l.b16 %v6196
  %v6213 = vunpack.c.l.b16 %v6197
  %v6214 = vunpack.c.l.b16 %v6198
  %v6215 = vunpack.c.l.b16 %v6199
  %v6216 = vunpack.c.l.b16 %v6200
  %v6217 = vunpack.c.l.b16 %v6201
  %v6218 = vpack.c.b16 %v6211, %v6210
  %v6219 = vpack.c.b16 %v6213, %v6212
  %v6220 = vpack.c.b16 %v6215, %v6214
  %v6221 = vpack.c.b16 %v6217, %v6216
  %v6227 = vsel %vm381, %v6178, 0
  %v6230 = vsel %vm381, %v6179, 0
  %v6233 = vsel %vm381, %v6180, 0
  %v6236 = vsel %vm381, %v6181, 0
  %v6239 = vsel %vm381, %v6182, 0
  %v6242 = vsel %vm381, %v6183, 0
  %v6245 = vsel %vm381, %v6184, 0
  %v6248 = vsel %vm381, %v6185, 0
  %v6251 = vsel %vm381, %v6186, 0
  %v6254 = vsel %vm381, %v6187, 0
  %v6257 = vsel %vm381, %v6188, 0
  %v6260 = vsel %vm381, %v6189, 0
  %v6263 = vsel %vm381, %v6190, 0
  %v6266 = vsel %vm381, %v6191, 0
  %v6269 = vsel %vm381, %v6192, 0
  %v6272 = vsel %vm381, %v6193, 0
  %6274 = vmatprep.subr.bf16.mxu0 0
  %6275 = vmatpush1.bf16.msra.mxu0 %v6218
  %6276 = vmatprep.subr.bf16.mxu0 0
  %6277 = vmatpush1.bf16.msra.mxu0 %v6219
  %6278 = vmatprep.subr.bf16.mxu0 0
  %6279 = vmatpush1.bf16.msra.mxu0 %v6220
  %6280 = vmatprep.subr.bf16.mxu0 0
  %6281 = vmatpush1.bf16.msra.mxu0 %v6221
  %6282 = vmatprep.subr.bf16.mxu0 0
  %6283 = vmatpush1.bf16.msra.mxu0 0
  %6284 = vmatprep.subr.bf16.mxu0 0
  %6285 = vmatpush1.bf16.msra.mxu0 0
  %6286 = vmatprep.subr.bf16.mxu0 0
  %6287 = vmatpush1.bf16.msra.mxu0 0
  %6288 = vmatprep.subr.bf16.mxu0 0
  %6289 = vmatpush1.bf16.msra.mxu0 0
  %6290 = vmatprep.subr.bf16.mxu0 0
  %6291 = vmatpush1.bf16.msra.mxu0 0
  %6292 = vmatprep.subr.bf16.mxu0 0
  %6293 = vmatpush1.bf16.msra.mxu0 0
  %6294 = vmatprep.subr.bf16.mxu0 0
  %6295 = vmatpush1.bf16.msra.mxu0 0
  %6296 = vmatprep.subr.bf16.mxu0 0
  %6297 = vmatpush1.bf16.msra.mxu0 0
  %6298 = vmatprep.subr.bf16.mxu0 0
  %6299 = vmatpush1.bf16.msra.mxu0 0
  %6300 = vmatprep.subr.bf16.mxu0 0
  %6301 = vmatpush1.bf16.msra.mxu0 0
  %6302 = vmatprep.subr.bf16.mxu0 0
  %6303 = vmatpush1.bf16.msra.mxu0 0
  %6304 = vmatprep.subr.bf16.mxu0 0
  %6305 = vmatpush1.bf16.msra.mxu0 0
  %6306 = vmatprep.mubr.bf16.mxu0 0
  %6307 = vmatmul.mubr.bf16.gmra.mrb[0].mxu0 %v6227
  %v6308 = vpop.f32.mrb[0].mxu0
  %v6309 = vadd.f32 0.0, %v6308
  %v6310 = vpop.f32.mrb[0].mxu0
  %v6311 = vpop.f32.mrb[0].mxu0
  %v6312 = vadd.f32 0.0, %v6311
  %v6313 = vpop.f32.mrb[0].mxu0
  %6314 = vmatprep.mubr.bf16.mxu0 0
  %6315 = vmatmul.mubr.bf16.gmra.mrb[0].mxu0 %v6230
  %v6316 = vpop.f32.mrb[0].mxu0
  %v6317 = vadd.f32 0.0, %v6316
  %v6318 = vpop.f32.mrb[0].mxu0
  %v6319 = vpop.f32.mrb[0].mxu0
  %v6320 = vadd.f32 0.0, %v6319
  %v6321 = vpop.f32.mrb[0].mxu0
  %6322 = vmatprep.mubr.bf16.mxu0 0
  %6323 = vmatmul.mubr.bf16.gmra.mrb[0].mxu0 %v6233
  %v6324 = vpop.f32.mrb[0].mxu0
  %v6325 = vadd.f32 0.0, %v6324
  %v6326 = vpop.f32.mrb[0].mxu0
  %v6327 = vpop.f32.mrb[0].mxu0
  %v6328 = vadd.f32 0.0, %v6327
  %v6329 = vpop.f32.mrb[0].mxu0
  %6330 = vmatprep.mubr.bf16.mxu0 0
  %6331 = vmatmul.mubr.bf16.gmra.mrb[0].mxu0 %v6236
  %v6332 = vpop.f32.mrb[0].mxu0
  %v6333 = vadd.f32 0.0, %v6332
  %v6334 = vpop.f32.mrb[0].mxu0
  %v6335 = vpop.f32.mrb[0].mxu0
  %v6336 = vadd.f32 0.0, %v6335
  %v6337 = vpop.f32.mrb[0].mxu0
  %6338 = vmatprep.mubr.bf16.mxu0 0
  %6339 = vmatmul.mubr.bf16.gmra.mrb[0].mxu0 %v6239
  %v6340 = vpop.f32.mrb[0].mxu0
  %v6341 = vadd.f32 0.0, %v6340
  %v6342 = vpop.f32.mrb[0].mxu0
  %v6343 = vpop.f32.mrb[0].mxu0
  %v6344 = vadd.f32 0.0, %v6343
  %v6345 = vpop.f32.mrb[0].mxu0
  %6346 = vmatprep.mubr.bf16.mxu0 0
  %6347 = vmatmul.mubr.bf16.gmra.mrb[0].mxu0 %v6242
  %v6348 = vpop.f32.mrb[0].mxu0
  %v6349 = vadd.f32 0.0, %v6348
  %v6350 = vpop.f32.mrb[0].mxu0
  %v6351 = vpop.f32.mrb[0].mxu0
  %v6352 = vadd.f32 0.0, %v6351
  %v6353 = vpop.f32.mrb[0].mxu0
  %6354 = vmatprep.mubr.bf16.mxu0 0
  %6355 = vmatmul.mubr.bf16.gmra.mrb[0].mxu0 %v6245
  %v6356 = vpop.f32.mrb[0].mxu0
  %v6357 = vadd.f32 0.0, %v6356
  %v6358 = vpop.f32.mrb[0].mxu0
  %v6359 = vpop.f32.mrb[0].mxu0
  %v6360 = vadd.f32 0.0, %v6359
  %v6361 = vpop.f32.mrb[0].mxu0
  %6362 = vmatprep.mubr.bf16.mxu0 0
  %6363 = vmatmul.mubr.bf16.gmra.mrb[0].mxu0 %v6248
  %v6364 = vpop.f32.mrb[0].mxu0
  %v6365 = vadd.f32 0.0, %v6364
  %v6366 = vpop.f32.mrb[0].mxu0
  %v6367 = vpop.f32.mrb[0].mxu0
  %v6368 = vadd.f32 0.0, %v6367
  %v6369 = vpop.f32.mrb[0].mxu0
  %6370 = vmatprep.mubr.bf16.mxu0 0
  %6371 = vmatmul.mubr.bf16.gmra.mrb[0].mxu0 %v6251
  %v6372 = vpop.f32.mrb[0].mxu0
  %v6373 = vadd.f32 0.0, %v6372
  %v6374 = vpop.f32.mrb[0].mxu0
  %v6375 = vpop.f32.mrb[0].mxu0
  %v6376 = vadd.f32 0.0, %v6375
  %v6377 = vpop.f32.mrb[0].mxu0
  %6378 = vmatprep.mubr.bf16.mxu0 0
  %6379 = vmatmul.mubr.bf16.gmra.mrb[0].mxu0 %v6254
  %v6380 = vpop.f32.mrb[0].mxu0
  %v6381 = vadd.f32 0.0, %v6380
  %v6382 = vpop.f32.mrb[0].mxu0
  %v6383 = vpop.f32.mrb[0].mxu0
  %v6384 = vadd.f32 0.0, %v6383
  %v6385 = vpop.f32.mrb[0].mxu0
  %6386 = vmatprep.mubr.bf16.mxu0 0
  %6387 = vmatmul.mubr.bf16.gmra.mrb[0].mxu0 %v6257
  %v6388 = vpop.f32.mrb[0].mxu0
  %v6389 = vadd.f32 0.0, %v6388
  %v6390 = vpop.f32.mrb[0].mxu0
  %v6391 = vpop.f32.mrb[0].mxu0
  %v6392 = vadd.f32 0.0, %v6391
  %v6393 = vpop.f32.mrb[0].mxu0
  %6394 = vmatprep.mubr.bf16.mxu0 0
  %6395 = vmatmul.mubr.bf16.gmra.mrb[0].mxu0 %v6260
  %v6396 = vpop.f32.mrb[0].mxu0
  %v6397 = vadd.f32 0.0, %v6396
  %v6398 = vpop.f32.mrb[0].mxu0
  %v6399 = vpop.f32.mrb[0].mxu0
  %v6400 = vadd.f32 0.0, %v6399
  %v6401 = vpop.f32.mrb[0].mxu0
  %6402 = vmatprep.mubr.bf16.mxu0 0
  %6403 = vmatmul.mubr.bf16.gmra.mrb[0].mxu0 %v6263
  %v6404 = vpop.f32.mrb[0].mxu0
  %v6405 = vadd.f32 0.0, %v6404
  %v6406 = vpop.f32.mrb[0].mxu0
  %v6407 = vpop.f32.mrb[0].mxu0
  %v6408 = vadd.f32 0.0, %v6407
  %v6409 = vpop.f32.mrb[0].mxu0
  %6410 = vmatprep.mubr.bf16.mxu0 0
  %6411 = vmatmul.mubr.bf16.gmra.mrb[0].mxu0 %v6266
  %v6412 = vpop.f32.mrb[0].mxu0
  %v6413 = vadd.f32 0.0, %v6412
  %v6414 = vpop.f32.mrb[0].mxu0
  %v6415 = vpop.f32.mrb[0].mxu0
  %v6416 = vadd.f32 0.0, %v6415
  %v6417 = vpop.f32.mrb[0].mxu0
  %6418 = vmatprep.mubr.bf16.mxu0 0
  %6419 = vmatmul.mubr.bf16.gmra.mrb[0].mxu0 %v6269
  %v6420 = vpop.f32.mrb[0].mxu0
  %v6421 = vadd.f32 0.0, %v6420
  %v6422 = vpop.f32.mrb[0].mxu0
  %v6423 = vpop.f32.mrb[0].mxu0
  %v6424 = vadd.f32 0.0, %v6423
  %v6425 = vpop.f32.mrb[0].mxu0
  %6426 = vmatprep.mubr.bf16.mxu0 0
  %6427 = vmatmul.mubr.bf16.gmra.mrb[0].mxu0 %v6272
  %v6428 = vpop.f32.mrb[0].mxu0
  %v6429 = vadd.f32 0.0, %v6428
  %v6430 = vpop.f32.mrb[0].mxu0
  %v6431 = vpop.f32.mrb[0].mxu0
  %v6432 = vadd.f32 0.0, %v6431
  %v6433 = vpop.f32.mrb[0].mxu0
  %6434 = vdwg.mxu0
  %v6435 = vxor.u32 %v6309, 2147483648
  %v6436 = vxor.u32 %v6312, 2147483648
  %v6437 = vxor.u32 %v6317, 2147483648
  %v6438 = vxor.u32 %v6320, 2147483648
  %v6439 = vxor.u32 %v6325, 2147483648
  %v6440 = vxor.u32 %v6328, 2147483648
  %v6441 = vxor.u32 %v6333, 2147483648
  %v6442 = vxor.u32 %v6336, 2147483648
  %v6443 = vxor.u32 %v6341, 2147483648
  %v6444 = vxor.u32 %v6344, 2147483648
  %v6445 = vxor.u32 %v6349, 2147483648
  %v6446 = vxor.u32 %v6352, 2147483648
  %v6447 = vxor.u32 %v6357, 2147483648
  %v6448 = vxor.u32 %v6360, 2147483648
  %v6449 = vxor.u32 %v6365, 2147483648
  %v6450 = vxor.u32 %v6368, 2147483648
  %v6451 = vxor.u32 %v6373, 2147483648
  %v6452 = vxor.u32 %v6376, 2147483648
  %v6453 = vxor.u32 %v6381, 2147483648
  %v6454 = vxor.u32 %v6384, 2147483648
  %v6455 = vxor.u32 %v6389, 2147483648
  %v6456 = vxor.u32 %v6392, 2147483648
  %v6457 = vxor.u32 %v6397, 2147483648
  %v6458 = vxor.u32 %v6400, 2147483648
  %v6459 = vxor.u32 %v6405, 2147483648
  %v6460 = vxor.u32 %v6408, 2147483648
  %v6461 = vxor.u32 %v6413, 2147483648
  %v6462 = vxor.u32 %v6416, 2147483648
  %v6463 = vxor.u32 %v6421, 2147483648
  %v6464 = vxor.u32 %v6424, 2147483648
  %v6465 = vxor.u32 %v6429, 2147483648
  %v6466 = vxor.u32 %v6432, 2147483648
  %v6467 = vmul.f32 %v6435, 1.442695
  %v6468 = vpow.pop %v6467
  %v6469 = vmul.f32 %v6436, 1.442695
  %v6470 = vpow.pop %v6469
  %v6471 = vmul.f32 %v6437, 1.442695
  %v6472 = vpow.pop %v6471
  %v6473 = vmul.f32 %v6438, 1.442695
  %v6474 = vpow.pop %v6473
  %v6475 = vmul.f32 %v6439, 1.442695
  %v6476 = vpow.pop %v6475
  %v6477 = vmul.f32 %v6440, 1.442695
  %v6478 = vpow.pop %v6477
  %v6479 = vmul.f32 %v6441, 1.442695
  %v6480 = vpow.pop %v6479
  %v6481 = vmul.f32 %v6442, 1.442695
  %v6482 = vpow.pop %v6481
  %v6483 = vmul.f32 %v6443, 1.442695
  %v6484 = vpow.pop %v6483
  %v6485 = vmul.f32 %v6444, 1.442695
  %v6486 = vpow.pop %v6485
  %v6487 = vmul.f32 %v6445, 1.442695
  %v6488 = vpow.pop %v6487
  %v6489 = vmul.f32 %v6446, 1.442695
  %v6490 = vpow.pop %v6489
  %v6491 = vmul.f32 %v6447, 1.442695
  %v6492 = vpow.pop %v6491
  %v6493 = vmul.f32 %v6448, 1.442695
  %v6494 = vpow.pop %v6493
  %v6495 = vmul.f32 %v6449, 1.442695
  %v6496 = vpow.pop %v6495
  %v6497 = vmul.f32 %v6450, 1.442695
  %v6498 = vpow.pop %v6497
  %v6499 = vmul.f32 %v6451, 1.442695
  %v6500 = vpow.pop %v6499
  %v6501 = vmul.f32 %v6452, 1.442695
  %v6502 = vpow.pop %v6501
  %v6503 = vmul.f32 %v6453, 1.442695
  %v6504 = vpow.pop %v6503
  %v6505 = vmul.f32 %v6454, 1.442695
  %v6506 = vpow.pop %v6505
  %v6507 = vmul.f32 %v6455, 1.442695
  %v6508 = vpow.pop %v6507
  %v6509 = vmul.f32 %v6456, 1.442695
  %v6510 = vpow.pop %v6509
  %v6511 = vmul.f32 %v6457, 1.442695
  %v6512 = vpow.pop %v6511
  %v6513 = vmul.f32 %v6458, 1.442695
  %v6514 = vpow.pop %v6513
  %v6515 = vmul.f32 %v6459, 1.442695
  %v6516 = vpow.pop %v6515
  %v6517 = vmul.f32 %v6460, 1.442695
  %v6518 = vpow.pop %v6517
  %v6519 = vmul.f32 %v6461, 1.442695
  %v6520 = vpow.pop %v6519
  %v6521 = vmul.f32 %v6462, 1.442695
  %v6522 = vpow.pop %v6521
  %v6523 = vmul.f32 %v6463, 1.442695
  %v6524 = vpow.pop %v6523
  %v6525 = vmul.f32 %v6464, 1.442695
  %v6526 = vpow.pop %v6525
  %v6527 = vmul.f32 %v6465, 1.442695
  %v6528 = vpow.pop %v6527
  %v6529 = vmul.f32 %v6466, 1.442695
  %v6530 = vpow.pop %v6529
  %v6531 = vadd.f32 %v6468, 1.0
  %v6532 = vadd.f32 %v6470, 1.0
  %v6533 = vadd.f32 %v6472, 1.0
  %v6534 = vadd.f32 %v6474, 1.0
  %v6535 = vadd.f32 %v6476, 1.0
  %v6536 = vadd.f32 %v6478, 1.0
  %v6537 = vadd.f32 %v6480, 1.0
  %v6538 = vadd.f32 %v6482, 1.0
  %v6539 = vadd.f32 %v6484, 1.0
  %v6540 = vadd.f32 %v6486, 1.0
  %v6541 = vadd.f32 %v6488, 1.0
  %v6542 = vadd.f32 %v6490, 1.0
  %v6543 = vadd.f32 %v6492, 1.0
  %v6544 = vadd.f32 %v6494, 1.0
  %v6545 = vadd.f32 %v6496, 1.0
  %v6546 = vadd.f32 %v6498, 1.0
  %v6547 = vadd.f32 %v6500, 1.0
  %v6548 = vadd.f32 %v6502, 1.0
  %v6549 = vadd.f32 %v6504, 1.0
  %v6550 = vadd.f32 %v6506, 1.0
  %v6551 = vadd.f32 %v6508, 1.0
  %v6552 = vadd.f32 %v6510, 1.0
  %v6553 = vadd.f32 %v6512, 1.0
  %v6554 = vadd.f32 %v6514, 1.0
  %v6555 = vadd.f32 %v6516, 1.0
  %v6556 = vadd.f32 %v6518, 1.0
  %v6557 = vadd.f32 %v6520, 1.0
  %v6558 = vadd.f32 %v6522, 1.0
  %v6559 = vadd.f32 %v6524, 1.0
  %v6560 = vadd.f32 %v6526, 1.0
  %v6561 = vadd.f32 %v6528, 1.0
  %v6562 = vadd.f32 %v6530, 1.0
  %v6563 = vrcp.pop %v6531
  %v6564 = vmul.f32 1.0, %v6563
  %v6565 = vrcp.pop %v6532
  %v6566 = vmul.f32 1.0, %v6565
  %v6567 = vrcp.pop %v6533
  %v6568 = vmul.f32 1.0, %v6567
  %v6569 = vrcp.pop %v6534
  %v6570 = vmul.f32 1.0, %v6569
  %v6571 = vrcp.pop %v6535
  %v6572 = vmul.f32 1.0, %v6571
  %v6573 = vrcp.pop %v6536
  %v6574 = vmul.f32 1.0, %v6573
  %v6575 = vrcp.pop %v6537
  %v6576 = vmul.f32 1.0, %v6575
  %v6577 = vrcp.pop %v6538
  %v6578 = vmul.f32 1.0, %v6577
  %v6579 = vrcp.pop %v6539
  %v6580 = vmul.f32 1.0, %v6579
  %v6581 = vrcp.pop %v6540
  %v6582 = vmul.f32 1.0, %v6581
  %v6583 = vrcp.pop %v6541
  %v6584 = vmul.f32 1.0, %v6583
  %v6585 = vrcp.pop %v6542
  %v6586 = vmul.f32 1.0, %v6585
  %v6587 = vrcp.pop %v6543
  %v6588 = vmul.f32 1.0, %v6587
  %v6589 = vrcp.pop %v6544
  %v6590 = vmul.f32 1.0, %v6589
  %v6591 = vrcp.pop %v6545
  %v6592 = vmul.f32 1.0, %v6591
  %v6593 = vrcp.pop %v6546
  %v6594 = vmul.f32 1.0, %v6593
  %v6595 = vrcp.pop %v6547
  %v6596 = vmul.f32 1.0, %v6595
  %v6597 = vrcp.pop %v6548
  %v6598 = vmul.f32 1.0, %v6597
  %v6599 = vrcp.pop %v6549
  %v6600 = vmul.f32 1.0, %v6599
  %v6601 = vrcp.pop %v6550
  %v6602 = vmul.f32 1.0, %v6601
  %v6603 = vrcp.pop %v6551
  %v6604 = vmul.f32 1.0, %v6603
  %v6605 = vrcp.pop %v6552
  %v6606 = vmul.f32 1.0, %v6605
  %v6607 = vrcp.pop %v6553
  %v6608 = vmul.f32 1.0, %v6607
  %v6609 = vrcp.pop %v6554
  %v6610 = vmul.f32 1.0, %v6609
  %v6611 = vrcp.pop %v6555
  %v6612 = vmul.f32 1.0, %v6611
  %v6613 = vrcp.pop %v6556
  %v6614 = vmul.f32 1.0, %v6613
  %v6615 = vrcp.pop %v6557
  %v6616 = vmul.f32 1.0, %v6615
  %v6617 = vrcp.pop %v6558
  %v6618 = vmul.f32 1.0, %v6617
  %v6619 = vrcp.pop %v6559
  %v6620 = vmul.f32 1.0, %v6619
  %v6621 = vrcp.pop %v6560
  %v6622 = vmul.f32 1.0, %v6621
  %v6623 = vrcp.pop %v6561
  %v6624 = vmul.f32 1.0, %v6623
  %v6625 = vrcp.pop %v6562
  %v6626 = vmul.f32 1.0, %v6625
  %6659 = vrot.lane.b32.xlu0 %v6564, 1
  %v6660 = vpop.permute.xlu0 %6659
  %6661 = vrot.lane.b32.xlu0 %v6566, 1
  %v6662 = vpop.permute.xlu0 %6661
  %6663 = vrot.lane.b32.xlu0 %v6568, 1
  %v6664 = vpop.permute.xlu0 %6663
  %6665 = vrot.lane.b32.xlu0 %v6570, 1
  %v6666 = vpop.permute.xlu0 %6665
  %6667 = vrot.lane.b32.xlu0 %v6572, 1
  %v6668 = vpop.permute.xlu0 %6667
  %6669 = vrot.lane.b32.xlu0 %v6574, 1
  %v6670 = vpop.permute.xlu0 %6669
  %6671 = vrot.lane.b32.xlu0 %v6576, 1
  %v6672 = vpop.permute.xlu0 %6671
  %6673 = vrot.lane.b32.xlu0 %v6578, 1
  %v6674 = vpop.permute.xlu0 %6673
  %6675 = vrot.lane.b32.xlu0 %v6580, 1
  %v6676 = vpop.permute.xlu0 %6675
  %6677 = vrot.lane.b32.xlu0 %v6582, 1
  %v6678 = vpop.permute.xlu0 %6677
  %6679 = vrot.lane.b32.xlu0 %v6584, 1
  %v6680 = vpop.permute.xlu0 %6679
  %6681 = vrot.lane.b32.xlu0 %v6586, 1
  %v6682 = vpop.permute.xlu0 %6681
  %6683 = vrot.lane.b32.xlu0 %v6588, 1
  %v6684 = vpop.permute.xlu0 %6683
  %6685 = vrot.lane.b32.xlu0 %v6590, 1
  %v6686 = vpop.permute.xlu0 %6685
  %6687 = vrot.lane.b32.xlu0 %v6592, 1
  %v6688 = vpop.permute.xlu0 %6687
  %6689 = vrot.lane.b32.xlu0 %v6594, 1
  %v6690 = vpop.permute.xlu0 %6689
  %6691 = vrot.lane.b32.xlu0 %v6596, 1
  %v6692 = vpop.permute.xlu0 %6691
  %6693 = vrot.lane.b32.xlu0 %v6598, 1
  %v6694 = vpop.permute.xlu0 %6693
  %6695 = vrot.lane.b32.xlu0 %v6600, 1
  %v6696 = vpop.permute.xlu0 %6695
  %6697 = vrot.lane.b32.xlu0 %v6602, 1
  %v6698 = vpop.permute.xlu0 %6697
  %6699 = vrot.lane.b32.xlu0 %v6604, 1
  %v6700 = vpop.permute.xlu0 %6699
  %6701 = vrot.lane.b32.xlu0 %v6606, 1
  %v6702 = vpop.permute.xlu0 %6701
  %6703 = vrot.lane.b32.xlu0 %v6608, 1
  %v6704 = vpop.permute.xlu0 %6703
  %6705 = vrot.lane.b32.xlu0 %v6610, 1
  %v6706 = vpop.permute.xlu0 %6705
  %6707 = vrot.lane.b32.xlu0 %v6612, 1
  %v6708 = vpop.permute.xlu0 %6707
  %6709 = vrot.lane.b32.xlu0 %v6614, 1
  %v6710 = vpop.permute.xlu0 %6709
  %6711 = vrot.lane.b32.xlu0 %v6616, 1
  %v6712 = vpop.permute.xlu0 %6711
  %6713 = vrot.lane.b32.xlu0 %v6618, 1
  %v6714 = vpop.permute.xlu0 %6713
  %6715 = vrot.lane.b32.xlu0 %v6620, 1
  %v6716 = vpop.permute.xlu0 %6715
  %6717 = vrot.lane.b32.xlu0 %v6622, 1
  %v6718 = vpop.permute.xlu0 %6717
  %6719 = vrot.lane.b32.xlu0 %v6624, 1
  %v6720 = vpop.permute.xlu0 %6719
  %6721 = vrot.lane.b32.xlu0 %v6626, 1
  %v6722 = vpop.permute.xlu0 %6721
  %v6755 = vsel %vm4848, %v592, %v6660
  %v6756 = vsel %vm4848, %v594, %v6662
  %v6757 = vsel %vm4848, %v596, %v6664
  %v6758 = vsel %vm4848, %v598, %v6666
  %v6759 = vsel %vm4848, %v600, %v6668
  %v6760 = vsel %vm4848, %v602, %v6670
  %v6761 = vsel %vm4848, %v604, %v6672
  %v6762 = vsel %vm4848, %v606, %v6674
  %v6763 = vsel %vm4848, %v608, %v6676
  %v6764 = vsel %vm4848, %v610, %v6678
  %v6765 = vsel %vm4848, %v612, %v6680
  %v6766 = vsel %vm4848, %v614, %v6682
  %v6767 = vsel %vm4848, %v616, %v6684
  %v6768 = vsel %vm4848, %v618, %v6686
  %v6769 = vsel %vm4848, %v620, %v6688
  %v6770 = vsel %vm4848, %v622, %v6690
  %v6771 = vsel %vm4848, %v624, %v6692
  %v6772 = vsel %vm4848, %v626, %v6694
  %v6773 = vsel %vm4848, %v628, %v6696
  %v6774 = vsel %vm4848, %v630, %v6698
  %v6775 = vsel %vm4848, %v632, %v6700
  %v6776 = vsel %vm4848, %v634, %v6702
  %v6777 = vsel %vm4848, %v636, %v6704
  %v6778 = vsel %vm4848, %v638, %v6706
  %v6779 = vsel %vm4848, %v640, %v6708
  %v6780 = vsel %vm4848, %v642, %v6710
  %v6781 = vsel %vm4848, %v644, %v6712
  %v6782 = vsel %vm4848, %v646, %v6714
  %v6783 = vsel %vm4848, %v648, %v6716
  %v6784 = vsel %vm4848, %v650, %v6718
  %v6785 = vsel %vm4848, %v652, %v6720
  %v6786 = vsel %vm4848, %v654, %v6722
  %6787 = vst.msk [vmem:[%s7] sm:$0xff] %vm4946, %v6755
  %6788 = vst.msk [vmem:[%s7 + $0x8] sm:$0xff] %vm4946, %v6756
  %6789 = vst.msk [vmem:[%s7 + $0x10] sm:$0xff] %vm4946, %v6757
  %6790 = vst.msk [vmem:[%s7 + $0x18] sm:$0xff] %vm4946, %v6758
  %6791 = vst.msk [vmem:[%s7 + $0x20] sm:$0xff] %vm4946, %v6759
  %6792 = vst.msk [vmem:[%s7 + $0x28] sm:$0xff] %vm4946, %v6760
  %6793 = vst.msk [vmem:[%s7 + $0x30] sm:$0xff] %vm4946, %v6761
  %6794 = vst.msk [vmem:[%s7 + $0x38] sm:$0xff] %vm4946, %v6762
  %6795 = vst.msk [vmem:[%s7 + $0x40] sm:$0xff] %vm4946, %v6763
  %6796 = vst.msk [vmem:[%s7 + $0x48] sm:$0xff] %vm4946, %v6764
  %6797 = vst.msk [vmem:[%s7 + $0x50] sm:$0xff] %vm4946, %v6765
  %6798 = vst.msk [vmem:[%s7 + $0x58] sm:$0xff] %vm4946, %v6766
  %6799 = vst.msk [vmem:[%s7 + $0x60] sm:$0xff] %vm4946, %v6767
  %6800 = vst.msk [vmem:[%s7 + $0x68] sm:$0xff] %vm4946, %v6768
  %6801 = vst.msk [vmem:[%s7 + $0x70] sm:$0xff] %vm4946, %v6769
  %6802 = vst.msk [vmem:[%s7 + $0x78] sm:$0xff] %vm4946, %v6770
  %6803 = vst.msk [vmem:[%s7 + $0x80] sm:$0xff] %vm4946, %v6771
  %6804 = vst.msk [vmem:[%s7 + $0x88] sm:$0xff] %vm4946, %v6772
  %6805 = vst.msk [vmem:[%s7 + $0x90] sm:$0xff] %vm4946, %v6773
  %6806 = vst.msk [vmem:[%s7 + $0x98] sm:$0xff] %vm4946, %v6774
  %6807 = vst.msk [vmem:[%s7 + $0xa0] sm:$0xff] %vm4946, %v6775
  %6808 = vst.msk [vmem:[%s7 + $0xa8] sm:$0xff] %vm4946, %v6776
  %6809 = vst.msk [vmem:[%s7 + $0xb0] sm:$0xff] %vm4946, %v6777
  %6810 = vst.msk [vmem:[%s7 + $0xb8] sm:$0xff] %vm4946, %v6778
  %6811 = vst.msk [vmem:[%s7 + $0xc0] sm:$0xff] %vm4946, %v6779
  %6812 = vst.msk [vmem:[%s7 + $0xc8] sm:$0xff] %vm4946, %v6780
  %6813 = vst.msk [vmem:[%s7 + $0xd0] sm:$0xff] %vm4946, %v6781
  %6814 = vst.msk [vmem:[%s7 + $0xd8] sm:$0xff] %vm4946, %v6782
  %6815 = vst.msk [vmem:[%s7 + $0xe0] sm:$0xff] %vm4946, %v6783
  %6816 = vst.msk [vmem:[%s7 + $0xe8] sm:$0xff] %vm4946, %v6784
  %6817 = vst.msk [vmem:[%s7 + $0xf0] sm:$0xff] %vm4946, %v6785
  %6818 = vst.msk [vmem:[%s7 + $0xf8] sm:$0xff] %vm4946, %v6786
  // Predicated region
  $region30: #{tpu_custom_call.1} parent=0 // pred_check
    _
  $region31: #{tpu_custom_call.1} parent=0 // pred_check_branch
    %6820 = sbr.rel (0) target = $region33
  $region32: #{tpu_custom_call.1} parent=0 // pred_region
    _
  $region33: #{tpu_custom_call.1} parent=0 // pred_fallthru
    _
  // Predicated region
  $region34: #{tpu_custom_call.1} parent=0 // pred_check
    _
  $region35: #{tpu_custom_call.1} parent=0 // pred_check_branch
    %6822 = sbr.rel (0) target = $region37
  $region36: #{tpu_custom_call.1} parent=0 // pred_region
    _
  $region37: #{tpu_custom_call.1} parent=0 // pred_fallthru
    _

</llo_original>
